<compile_context>
chip_gen: v5e
topology: v5e:2x2
jax: 0.10.0
libtpu: 0.0.40
codegen_flags: <defaults>
</compile_context>

<pallas_src>
import jax
import jax.numpy as jnp
from jax import lax
from jax.experimental import pallas as pl
from jax.experimental.pallas import tpu as pltpu


def _round_up(n, m):
    return ((n + m - 1) // m) * m


def _vmem_budget_bytes():
    """Generation-aware VMEM limit (~3/4 of physical: ~96 MiB on v5e/v6e, ~48 MiB on v7x)."""
    cap = None
    try:
        info = pltpu.get_tpu_info()
        cap = getattr(info, "vmem_capacity_bytes", None)
    except Exception:
        cap = None
    if not cap:
        cap = 64 * 1024 * 1024  # conservative (v7x-sized) default
    return int(min(max(cap * 3 // 4, 32 * 1024 * 1024), 100 * 1024 * 1024))


def _pick_batch_block(B, H, Wp, ci_p, co_p, vmem_budget):
    """Largest divisor of B whose working set fits ~half the VMEM budget; stop once the
    matmul M dimension (bb*Hp*Wp) comfortably fills the MXU."""
    Hp = H // 2
    c_max = max(ci_p, co_p)

    def est_bytes(bb):
        m = bb * Hp * Wp
        a = 2 * (bb * H * Wp * 2 * ci_p) * 2      # bf16 input tile, double-buffered
        a += 2 * (m * co_p) * 4                   # f32 output tile, double-buffered
        a += m * ci_p * 4                         # pooled (f32 interior)
        a += m * (ci_p + 3 * c_max) * 4           # padded image + per-dy f32 slab
        a += m * 3 * c_max * 2                    # bf16 slab copy fed to the MXU
        a += m * co_p * (4 + 4)                   # f32 accumulator + h1
        a += 9 * (ci_p + co_p) * co_p * 2         # bf16 weights (single-buffered)
        return a

    bb = 1
    for cand in range(1, B + 1):
        if B % cand:
            continue
        if est_bytes(cand) <= vmem_budget // 2:
            bb = cand
        if cand * Hp * Wp >= 512:                 # MXU M is full enough; stop growing
            break
    return bb


def down_kernel(x_ref, w1_ref, b1_ref, w2_ref, b2_ref, o_ref):
    # x_ref : (bb, H, Wp, 2*Ci)  bf16 -- W column pairs pre-folded onto the lane axis
    # w*_ref: (3, 3*C, Co)       bf16 -- per-dy weight slabs, BN scale folded in
    # b*_ref: (1, Co)            f32  -- folded conv-bias + BN shift
    # o_ref : (bb, Hp, Wp, Co)   f32
    bb, H, Wp, two_ci = x_ref.shape
    ci = two_ci // 2
    Hp = H // 2

    x = x_ref[...].astype(jnp.float32)                       # upcast once after bf16 DMA

    # ---- 2x2 max pool, stride 2 (vregs only: lane-aligned slices + leading-dim fold) ----
    cmax = jnp.maximum(x[..., :ci], x[..., ci:])              # (bb, H, Wp, Ci)
    rows = cmax.reshape(bb, Hp, 2, Wp, ci)
    pooled = jnp.maximum(rows[:, :, 0], rows[:, :, 1])        # (bb, Hp, Wp, Ci)

    # ---- 3x3 conv as 3 accumulating MXU matmuls (K = 3*C each) + folded shift + ReLU ----
    def conv3x3_bn_relu(h, w_ref, shift):
        _, hh, ww, c = h.shape
        cout = w_ref.shape[-1]
        zrow = jnp.zeros((bb, 1, ww, c), jnp.float32)
        zcol = jnp.zeros((bb, hh + 2, 1, c), jnp.float32)
        p = jnp.concatenate([zrow, h, zrow], axis=1)          # (bb, hh+2, ww,   c)
        p = jnp.concatenate([zcol, p, zcol], axis=2)          # (bb, hh+2, ww+2, c)
        acc = jnp.zeros((bb * hh * ww, cout), jnp.float32)
        for dy in range(3):                                   # static unroll: 3 matmuls
            slab = jnp.concatenate(
                [p[:, dy:dy + hh, dx:dx + ww, :] for dx in range(3)], axis=-1)
            slab = slab.reshape(bb * hh * ww, 3 * c).astype(jnp.bfloat16)
            acc = acc + jnp.dot(slab, w_ref[dy],              # bf16 x bf16 -> f32 acc
                                preferred_element_type=jnp.float32)
        y = jnp.maximum(acc + shift, 0.0)                     # BN(eval)+bias folded shift
        return y.reshape(bb, hh, ww, cout)

    h1 = conv3x3_bn_relu(pooled, w1_ref, b1_ref[...])
    h2 = conv3x3_bn_relu(h1, w2_ref, b2_ref[...])
    o_ref[...] = h2.astype(o_ref.dtype)


def down_pallas(x_nchw, w1_oihw, scale1, shift1, w2_oihw, scale2, shift2, *, lane=128):
    """PyTorch `down` forward (BN eval mode; bias+BN folded into per-channel scale/shift)."""
    B, Cin, H, W = x_nchw.shape
    Cout = w1_oihw.shape[0]

    # PyTorch MaxPool2d(2) floors odd spatial dims -> crop to even.
    H -= H % 2
    W -= W % 2
    x_nchw = x_nchw[:, :, :H, :W]
    Hp, Wp = H // 2, W // 2
    ci_p = _round_up(Cin, lane)
    co_p = _round_up(Cout, lane)

    # NCHW -> NHWC, zero-pad channels to the lane width, fold W column pairs onto lanes,
    # store bf16 (halves the HBM->VMEM DMA for the activations).
    x = jnp.transpose(x_nchw, (0, 2, 3, 1)).astype(jnp.float32)
    x = jnp.pad(x, ((0, 0), (0, 0), (0, 0), (0, ci_p - Cin)))
    x = x.reshape(B, H, Wp, 2 * ci_p).astype(jnp.bfloat16)

    def pack_w(w, scale, cin_pad, cout_pad):
        # OIHW conv weights with the BN scale folded into the output channels, laid out
        # as 3 per-dy slabs (3*Ci, Co), dx-major (im2col) order, bf16.
        co, ci, kh, kw = w.shape
        wf = w.astype(jnp.float32) * scale.astype(jnp.float32)[:, None, None, None]
        wf = jnp.pad(wf, ((0, cout_pad - co), (0, cin_pad - ci), (0, 0), (0, 0)))
        wf = jnp.transpose(wf, (2, 3, 1, 0))                  # (kh, kw, Ci, Co)
        return wf.reshape(kh, kw * cin_pad, cout_pad).astype(jnp.bfloat16)

    def pack_shift(v, c_pad):
        return jnp.pad(v.astype(jnp.float32), (0, c_pad - v.shape[0])).reshape(1, c_pad)

    vmem_budget = _vmem_budget_bytes()
    bb = _pick_batch_block(B, H, Wp, ci_p, co_p, vmem_budget)

    args = (x,
            pack_w(w1_oihw, scale1, ci_p, co_p), pack_shift(shift1, co_p),
            pack_w(w2_oihw, scale2, co_p, co_p), pack_shift(shift2, co_p))

    def build(single_buffer_consts):
        const_kw = dict(pipeline_mode=pl.Buffered(1)) if single_buffer_consts else {}

        def const_spec(shape):
            n = len(shape)
            return pl.BlockSpec(shape, lambda g: (0,) * n, **const_kw)

        return pl.pallas_call(
            down_kernel,
            out_shape=jax.ShapeDtypeStruct((B, Hp, Wp, co_p), jnp.float32),
            grid_spec=pltpu.PrefetchScalarGridSpec(
                num_scalar_prefetch=0,
                grid=(B // bb,),
                in_specs=[
                    pl.BlockSpec((bb, H, Wp, 2 * ci_p), lambda g: (g, 0, 0, 0)),
                    const_spec((3, 3 * ci_p, co_p)),
                    const_spec((1, co_p)),
                    const_spec((3, 3 * co_p, co_p)),
                    const_spec((1, co_p)),
                ],
                out_specs=pl.BlockSpec((bb, Hp, Wp, co_p), lambda g: (g, 0, 0, 0)),
            ),
            compiler_params=pltpu.CompilerParams(
                dimension_semantics=("parallel",),
                vmem_limit_bytes=vmem_budget,
            ),
        )

    try:
        out = build(True)(*args)
    except Exception:
        # Fallback if this JAX build rejects single-buffered (pl.Buffered(1)) block specs.
        out = build(False)(*args)

    # Drop lane padding, NHWC -> NCHW.
    return jnp.transpose(out[..., :Cout], (0, 3, 1, 2))


def ref_down_nchw(x, w1, cb1, g1, be1, m1, v1, w2, cb2, g2, be2, m2, v2, eps=1e-5):
    """Pure-JAX f32 reference matching PyTorch `down` (BN in eval mode)."""
    xp = lax.reduce_window(x, -jnp.inf, lax.max,
                           window_dimensions=(1, 1, 2, 2),
                           window_strides=(1, 1, 2, 2), padding='VALID')

    def block(h, w, cb, g, be, m, v):
        y = lax.conv_general_dilated(h, w, window_strides=(1, 1),
                                     padding=((1, 1), (1, 1)),
                                     dimension_numbers=('NCHW', 'OIHW', 'NCHW'),
                                     precision=lax.Precision.HIGHEST)
        y = y + cb[None, :, None, None]
        y = (y - m[None, :, None, None]) / jnp.sqrt(v[None, :, None, None] + eps)
        y = y * g[None, :, None, None] + be[None, :, None, None]
        return jnp.maximum(y, 0.0)

    h = block(xp, w1, cb1, g1, be1, m1, v1)
    return block(h, w2, cb2, g2, be2, m2, v2)


def ref_down_bf16_emulated(x, w1f, shift1, w2f, shift2):
    """Reference emulating the kernel's numerics: bf16-rounded inputs/folded weights,
    f32-accumulated convs, bf16 hand-off between the two convs."""
    xp = lax.reduce_window(x, -jnp.inf, lax.max,
                           window_dimensions=(1, 1, 2, 2),
                           window_strides=(1, 1, 2, 2), padding='VALID')

    def block(h, w, shift):
        y = lax.conv_general_dilated(h, w, window_strides=(1, 1),
                                     padding=((1, 1), (1, 1)),
                                     dimension_numbers=('NCHW', 'OIHW', 'NCHW'),
                                     precision=lax.Precision.HIGHEST)
        return jnp.maximum(y + shift[None, :, None, None], 0.0)

    h1 = block(xp, w1f, shift1)
    h1 = h1.astype(jnp.bfloat16).astype(jnp.float32)
    return block(h1, w2f, shift2)


if __name__ == "__main__":
    key = jax.random.PRNGKey(0)
    B, Cin, Cout, H, W = 2, 4, 8, 16, 16
    eps = 1e-5

    ks = jax.random.split(key, 12)
    x_nchw = jax.random.normal(ks[0], (B, Cin, H, W), jnp.float32)

    # conv1 params (PyTorch OIHW) + BN1 params
    w1 = jax.random.normal(ks[1], (Cout, Cin, 3, 3), jnp.float32) * 0.2
    cb1 = jax.random.normal(ks[2], (Cout,), jnp.float32) * 0.1
    g1 = 1.0 + 0.3 * jax.random.normal(ks[3], (Cout,), jnp.float32)
    be1 = 0.1 * jax.random.normal(ks[4], (Cout,), jnp.float32)
    m1 = 0.1 * jax.random.normal(ks[5], (Cout,), jnp.float32)
    v1 = 0.5 + jax.random.uniform(ks[6], (Cout,), jnp.float32)

    # conv2 params + BN2 params
    w2 = jax.random.normal(ks[7], (Cout, Cout, 3, 3), jnp.float32) * 0.2
    cb2 = jax.random.normal(ks[8], (Cout,), jnp.float32) * 0.1
    g2 = 1.0 + 0.3 * jax.random.normal(ks[9], (Cout,), jnp.float32)
    be2 = 0.1 * jax.random.normal(ks[10], (Cout,), jnp.float32)
    m2 = 0.1 * jax.random.normal(ks[11], (Cout,), jnp.float32)
    v2 = 0.5 + jax.random.uniform(jax.random.fold_in(key, 99), (Cout,), jnp.float32)

    # Fold conv bias + BN (eval mode) into per-channel scale/shift for the kernel.
    s1 = g1 / jnp.sqrt(v1 + eps)
    shift1 = (cb1 - m1) * s1 + be1
    s2 = g2 / jnp.sqrt(v2 + eps)
    shift2 = (cb2 - m2) * s2 + be2

    out_nchw = down_pallas(x_nchw, w1, s1, shift1, w2, s2, shift2)
    out_nchw = jax.block_until_ready(out_nchw)
    assert out_nchw.shape == (B, Cout, H // 2, W // 2), out_nchw.shape

    # Tight check: reference that emulates the kernel's bf16-operand / f32-accumulate math.
    x_b = x_nchw.astype(jnp.bfloat16).astype(jnp.float32)
    w1f = (w1 * s1[:, None, None, None]).astype(jnp.bfloat16).astype(jnp.float32)
    w2f = (w2 * s2[:, None, None, None]).astype(jnp.bfloat16).astype(jnp.float32)
    ref_emu = ref_down_bf16_emulated(x_b, w1f, shift1, w2f, shift2)
    err_emu = float(jnp.max(jnp.abs(out_nchw - ref_emu)))
    assert jnp.allclose(out_nchw, ref_emu, rtol=1e-2, atol=1e-2), err_emu

    # Sanity vs. exact f32 PyTorch semantics (gap bounded by bf16 operand rounding).
    ref32 = ref_down_nchw(x_nchw, w1, cb1, g1, be1, m1, v1,
                          w2, cb2, g2, be2, m2, v2, eps)
    err32 = float(jnp.max(jnp.abs(out_nchw - ref32)))
    assert err32 <= 5e-2 * float(jnp.max(jnp.abs(ref32))) + 5e-2, err32

    print("KERNEL_OK")
</pallas_src>

<mosaic_0001>
module attributes {stable_mosaic.version = 11 : i64} {
  func.func @down_kernel(%arg0: i32, %arg1: memref<2x16x8x256xbf16, #tpu.memory_space<vmem>>, %arg2: memref<3x384x128xbf16, #tpu.memory_space<vmem>>, %arg3: memref<1x128xf32, #tpu.memory_space<vmem>>, %arg4: memref<3x384x128xbf16, #tpu.memory_space<vmem>>, %arg5: memref<1x128xf32, #tpu.memory_space<vmem>>, %arg6: memref<2x8x8x128xf32, #tpu.memory_space<vmem>>) attributes {dimension_semantics = [#tpu.dimension_semantics<parallel>], iteration_bounds = array<i64: 1>, scalar_prefetch = 0 : i64, scratch_operands = 0 : i64, tpu.core_type = #tpu.core_type<tc>, window_params = [{transform_indices = @transform_0, window_bounds = array<i64: 2, 16, 8, 256>}, {pipeline_mode = #tpu.pipeline_mode<synchronous>, transform_indices = @transform_1, window_bounds = array<i64: 3, 384, 128>}, {pipeline_mode = #tpu.pipeline_mode<synchronous>, transform_indices = @transform_2, window_bounds = array<i64: 1, 128>}, {pipeline_mode = #tpu.pipeline_mode<synchronous>, transform_indices = @transform_3, window_bounds = array<i64: 3, 384, 128>}, {pipeline_mode = #tpu.pipeline_mode<synchronous>, transform_indices = @transform_4, window_bounds = array<i64: 1, 128>}, {transform_indices = @transform_5, window_bounds = array<i64: 2, 8, 8, 128>}]} {
    %c0 = arith.constant 0 : index
    %c0_0 = arith.constant 0 : index
    %c0_1 = arith.constant 0 : index
    %c0_2 = arith.constant 0 : index
    %0 = vector.load %arg1[%c0, %c0_0, %c0_1, %c0_2] : memref<2x16x8x256xbf16, #tpu.memory_space<vmem>>, vector<2x16x8x256xbf16>
    %1 = arith.extf %0 : vector<2x16x8x256xbf16> to vector<2x16x8x256xf32>
    %2 = vector.extract_strided_slice %1 {offsets = [0, 0, 0, 0], sizes = [2, 16, 8, 128], strides = [1, 1, 1, 1]} : vector<2x16x8x256xf32> to vector<2x16x8x128xf32>
    %3 = vector.extract_strided_slice %1 {offsets = [0, 0, 0, 128], sizes = [2, 16, 8, 128], strides = [1, 1, 1, 1]} : vector<2x16x8x256xf32> to vector<2x16x8x128xf32>
    %4 = arith.maximumf %2, %3 : vector<2x16x8x128xf32>
    %5 = vector.shape_cast %4 : vector<2x16x8x128xf32> to vector<2x8x2x8x128xf32>
    %6 = vector.extract_strided_slice %5 {offsets = [0, 0, 0, 0, 0], sizes = [2, 8, 1, 8, 128], strides = [1, 1, 1, 1, 1]} : vector<2x8x2x8x128xf32> to vector<2x8x1x8x128xf32>
    %7 = vector.shape_cast %6 : vector<2x8x1x8x128xf32> to vector<2x8x8x128xf32>
    %8 = vector.extract_strided_slice %5 {offsets = [0, 0, 1, 0, 0], sizes = [2, 8, 1, 8, 128], strides = [1, 1, 1, 1, 1]} : vector<2x8x2x8x128xf32> to vector<2x8x1x8x128xf32>
    %9 = vector.shape_cast %8 : vector<2x8x1x8x128xf32> to vector<2x8x8x128xf32>
    %10 = arith.maximumf %7, %9 : vector<2x8x8x128xf32>
    %c0_3 = arith.constant 0 : index
    %c0_4 = arith.constant 0 : index
    %11 = vector.load %arg3[%c0_3, %c0_4] : memref<1x128xf32, #tpu.memory_space<vmem>>, vector<1x128xf32>
    %cst = arith.constant 0.000000e+00 : f32
    %12 = vector.broadcast %cst : f32 to vector<2x1x8x128xf32>
    %cst_5 = arith.constant 0.000000e+00 : f32
    %13 = vector.broadcast %cst_5 : f32 to vector<2x10x1x128xf32>
    %14 = tpu.concatenate %12, %10, %12 in 1 : vector<2x1x8x128xf32>, vector<2x8x8x128xf32>, vector<2x1x8x128xf32> -> vector<2x10x8x128xf32>
    %15 = tpu.concatenate %13, %14, %13 in 2 : vector<2x10x1x128xf32>, vector<2x10x8x128xf32>, vector<2x10x1x128xf32> -> vector<2x10x10x128xf32>
    %cst_6 = arith.constant 0.000000e+00 : f32
    %16 = vector.broadcast %cst_6 : f32 to vector<128x128xf32>
    %17 = vector.extract_strided_slice %15 {offsets = [0, 0, 0, 0], sizes = [2, 8, 8, 128], strides = [1, 1, 1, 1]} : vector<2x10x10x128xf32> to vector<2x8x8x128xf32>
    %18 = vector.extract_strided_slice %15 {offsets = [0, 0, 1, 0], sizes = [2, 8, 8, 128], strides = [1, 1, 1, 1]} : vector<2x10x10x128xf32> to vector<2x8x8x128xf32>
    %19 = vector.extract_strided_slice %15 {offsets = [0, 0, 2, 0], sizes = [2, 8, 8, 128], strides = [1, 1, 1, 1]} : vector<2x10x10x128xf32> to vector<2x8x8x128xf32>
    %20 = tpu.concatenate %17, %18, %19 in 3 : vector<2x8x8x128xf32>, vector<2x8x8x128xf32>, vector<2x8x8x128xf32> -> vector<2x8x8x384xf32>
    %21 = vector.shape_cast %20 : vector<2x8x8x384xf32> to vector<128x384xf32>
    %22 = arith.truncf %21 : vector<128x384xf32> to vector<128x384xbf16>
    %c0_7 = arith.constant 0 : index
    %c0_8 = arith.constant 0 : index
    %c0_9 = arith.constant 0 : index
    %23 = vector.load %arg2[%c0_7, %c0_8, %c0_9] : memref<3x384x128xbf16, #tpu.memory_space<vmem>>, vector<1x384x128xbf16>
    %24 = vector.shape_cast %23 : vector<1x384x128xbf16> to vector<384x128xbf16>
    %cst_10 = arith.constant dense<0.000000e+00> : vector<128x128xf32>
    %25 = tpu.matmul %22, %24, %cst_10 {dimension_numbers = #tpu.dot_dimension_numbers<[1], [0], [0], [1], [0, 0, 1, 1], [], []>} : vector<128x384xbf16>, vector<384x128xbf16>, vector<128x128xf32> -> vector<128x128xf32>
    %26 = arith.addf %16, %25 : vector<128x128xf32>
    %27 = vector.extract_strided_slice %15 {offsets = [0, 1, 0, 0], sizes = [2, 8, 8, 128], strides = [1, 1, 1, 1]} : vector<2x10x10x128xf32> to vector<2x8x8x128xf32>
    %28 = vector.extract_strided_slice %15 {offsets = [0, 1, 1, 0], sizes = [2, 8, 8, 128], strides = [1, 1, 1, 1]} : vector<2x10x10x128xf32> to vector<2x8x8x128xf32>
    %29 = vector.extract_strided_slice %15 {offsets = [0, 1, 2, 0], sizes = [2, 8, 8, 128], strides = [1, 1, 1, 1]} : vector<2x10x10x128xf32> to vector<2x8x8x128xf32>
    %30 = tpu.concatenate %27, %28, %29 in 3 : vector<2x8x8x128xf32>, vector<2x8x8x128xf32>, vector<2x8x8x128xf32> -> vector<2x8x8x384xf32>
    %31 = vector.shape_cast %30 : vector<2x8x8x384xf32> to vector<128x384xf32>
    %32 = arith.truncf %31 : vector<128x384xf32> to vector<128x384xbf16>
    %c1 = arith.constant 1 : index
    %c0_11 = arith.constant 0 : index
    %c0_12 = arith.constant 0 : index
    %33 = vector.load %arg2[%c1, %c0_11, %c0_12] : memref<3x384x128xbf16, #tpu.memory_space<vmem>>, vector<1x384x128xbf16>
    %34 = vector.shape_cast %33 : vector<1x384x128xbf16> to vector<384x128xbf16>
    %cst_13 = arith.constant dense<0.000000e+00> : vector<128x128xf32>
    %35 = tpu.matmul %32, %34, %cst_13 {dimension_numbers = #tpu.dot_dimension_numbers<[1], [0], [0], [1], [0, 0, 1, 1], [], []>} : vector<128x384xbf16>, vector<384x128xbf16>, vector<128x128xf32> -> vector<128x128xf32>
    %36 = arith.addf %26, %35 : vector<128x128xf32>
    %37 = vector.extract_strided_slice %15 {offsets = [0, 2, 0, 0], sizes = [2, 8, 8, 128], strides = [1, 1, 1, 1]} : vector<2x10x10x128xf32> to vector<2x8x8x128xf32>
    %38 = vector.extract_strided_slice %15 {offsets = [0, 2, 1, 0], sizes = [2, 8, 8, 128], strides = [1, 1, 1, 1]} : vector<2x10x10x128xf32> to vector<2x8x8x128xf32>
    %39 = vector.extract_strided_slice %15 {offsets = [0, 2, 2, 0], sizes = [2, 8, 8, 128], strides = [1, 1, 1, 1]} : vector<2x10x10x128xf32> to vector<2x8x8x128xf32>
    %40 = tpu.concatenate %37, %38, %39 in 3 : vector<2x8x8x128xf32>, vector<2x8x8x128xf32>, vector<2x8x8x128xf32> -> vector<2x8x8x384xf32>
    %41 = vector.shape_cast %40 : vector<2x8x8x384xf32> to vector<128x384xf32>
    %42 = arith.truncf %41 : vector<128x384xf32> to vector<128x384xbf16>
    %c2 = arith.constant 2 : index
    %c0_14 = arith.constant 0 : index
    %c0_15 = arith.constant 0 : index
    %43 = vector.load %arg2[%c2, %c0_14, %c0_15] : memref<3x384x128xbf16, #tpu.memory_space<vmem>>, vector<1x384x128xbf16>
    %44 = vector.shape_cast %43 : vector<1x384x128xbf16> to vector<384x128xbf16>
    %cst_16 = arith.constant dense<0.000000e+00> : vector<128x128xf32>
    %45 = tpu.matmul %42, %44, %cst_16 {dimension_numbers = #tpu.dot_dimension_numbers<[1], [0], [0], [1], [0, 0, 1, 1], [], []>} : vector<128x384xbf16>, vector<384x128xbf16>, vector<128x128xf32> -> vector<128x128xf32>
    %46 = arith.addf %36, %45 : vector<128x128xf32>
    %47 = vector.broadcast %11 : vector<1x128xf32> to vector<128x128xf32>
    %48 = arith.addf %46, %47 : vector<128x128xf32>
    %cst_17 = arith.constant 0.000000e+00 : f32
    %49 = vector.broadcast %cst_17 : f32 to vector<128x128xf32>
    %50 = arith.maximumf %48, %49 : vector<128x128xf32>
    %51 = vector.shape_cast %50 : vector<128x128xf32> to vector<2x8x8x128xf32>
    %c0_18 = arith.constant 0 : index
    %c0_19 = arith.constant 0 : index
    %52 = vector.load %arg5[%c0_18, %c0_19] : memref<1x128xf32, #tpu.memory_space<vmem>>, vector<1x128xf32>
    %cst_20 = arith.constant 0.000000e+00 : f32
    %53 = vector.broadcast %cst_20 : f32 to vector<2x1x8x128xf32>
    %cst_21 = arith.constant 0.000000e+00 : f32
    %54 = vector.broadcast %cst_21 : f32 to vector<2x10x1x128xf32>
    %55 = tpu.concatenate %53, %51, %53 in 1 : vector<2x1x8x128xf32>, vector<2x8x8x128xf32>, vector<2x1x8x128xf32> -> vector<2x10x8x128xf32>
    %56 = tpu.concatenate %54, %55, %54 in 2 : vector<2x10x1x128xf32>, vector<2x10x8x128xf32>, vector<2x10x1x128xf32> -> vector<2x10x10x128xf32>
    %cst_22 = arith.constant 0.000000e+00 : f32
    %57 = vector.broadcast %cst_22 : f32 to vector<128x128xf32>
    %58 = vector.extract_strided_slice %56 {offsets = [0, 0, 0, 0], sizes = [2, 8, 8, 128], strides = [1, 1, 1, 1]} : vector<2x10x10x128xf32> to vector<2x8x8x128xf32>
    %59 = vector.extract_strided_slice %56 {offsets = [0, 0, 1, 0], sizes = [2, 8, 8, 128], strides = [1, 1, 1, 1]} : vector<2x10x10x128xf32> to vector<2x8x8x128xf32>
    %60 = vector.extract_strided_slice %56 {offsets = [0, 0, 2, 0], sizes = [2, 8, 8, 128], strides = [1, 1, 1, 1]} : vector<2x10x10x128xf32> to vector<2x8x8x128xf32>
    %61 = tpu.concatenate %58, %59, %60 in 3 : vector<2x8x8x128xf32>, vector<2x8x8x128xf32>, vector<2x8x8x128xf32> -> vector<2x8x8x384xf32>
    %62 = vector.shape_cast %61 : vector<2x8x8x384xf32> to vector<128x384xf32>
    %63 = arith.truncf %62 : vector<128x384xf32> to vector<128x384xbf16>
    %c0_23 = arith.constant 0 : index
    %c0_24 = arith.constant 0 : index
    %c0_25 = arith.constant 0 : index
    %64 = vector.load %arg4[%c0_23, %c0_24, %c0_25] : memref<3x384x128xbf16, #tpu.memory_space<vmem>>, vector<1x384x128xbf16>
    %65 = vector.shape_cast %64 : vector<1x384x128xbf16> to vector<384x128xbf16>
    %cst_26 = arith.constant dense<0.000000e+00> : vector<128x128xf32>
    %66 = tpu.matmul %63, %65, %cst_26 {dimension_numbers = #tpu.dot_dimension_numbers<[1], [0], [0], [1], [0, 0, 1, 1], [], []>} : vector<128x384xbf16>, vector<384x128xbf16>, vector<128x128xf32> -> vector<128x128xf32>
    %67 = arith.addf %57, %66 : vector<128x128xf32>
    %68 = vector.extract_strided_slice %56 {offsets = [0, 1, 0, 0], sizes = [2, 8, 8, 128], strides = [1, 1, 1, 1]} : vector<2x10x10x128xf32> to vector<2x8x8x128xf32>
    %69 = vector.extract_strided_slice %56 {offsets = [0, 1, 1, 0], sizes = [2, 8, 8, 128], strides = [1, 1, 1, 1]} : vector<2x10x10x128xf32> to vector<2x8x8x128xf32>
    %70 = vector.extract_strided_slice %56 {offsets = [0, 1, 2, 0], sizes = [2, 8, 8, 128], strides = [1, 1, 1, 1]} : vector<2x10x10x128xf32> to vector<2x8x8x128xf32>
    %71 = tpu.concatenate %68, %69, %70 in 3 : vector<2x8x8x128xf32>, vector<2x8x8x128xf32>, vector<2x8x8x128xf32> -> vector<2x8x8x384xf32>
    %72 = vector.shape_cast %71 : vector<2x8x8x384xf32> to vector<128x384xf32>
    %73 = arith.truncf %72 : vector<128x384xf32> to vector<128x384xbf16>
    %c1_27 = arith.constant 1 : index
    %c0_28 = arith.constant 0 : index
    %c0_29 = arith.constant 0 : index
    %74 = vector.load %arg4[%c1_27, %c0_28, %c0_29] : memref<3x384x128xbf16, #tpu.memory_space<vmem>>, vector<1x384x128xbf16>
    %75 = vector.shape_cast %74 : vector<1x384x128xbf16> to vector<384x128xbf16>
    %cst_30 = arith.constant dense<0.000000e+00> : vector<128x128xf32>
    %76 = tpu.matmul %73, %75, %cst_30 {dimension_numbers = #tpu.dot_dimension_numbers<[1], [0], [0], [1], [0, 0, 1, 1], [], []>} : vector<128x384xbf16>, vector<384x128xbf16>, vector<128x128xf32> -> vector<128x128xf32>
    %77 = arith.addf %67, %76 : vector<128x128xf32>
    %78 = vector.extract_strided_slice %56 {offsets = [0, 2, 0, 0], sizes = [2, 8, 8, 128], strides = [1, 1, 1, 1]} : vector<2x10x10x128xf32> to vector<2x8x8x128xf32>
    %79 = vector.extract_strided_slice %56 {offsets = [0, 2, 1, 0], sizes = [2, 8, 8, 128], strides = [1, 1, 1, 1]} : vector<2x10x10x128xf32> to vector<2x8x8x128xf32>
    %80 = vector.extract_strided_slice %56 {offsets = [0, 2, 2, 0], sizes = [2, 8, 8, 128], strides = [1, 1, 1, 1]} : vector<2x10x10x128xf32> to vector<2x8x8x128xf32>
    %81 = tpu.concatenate %78, %79, %80 in 3 : vector<2x8x8x128xf32>, vector<2x8x8x128xf32>, vector<2x8x8x128xf32> -> vector<2x8x8x384xf32>
    %82 = vector.shape_cast %81 : vector<2x8x8x384xf32> to vector<128x384xf32>
    %83 = arith.truncf %82 : vector<128x384xf32> to vector<128x384xbf16>
    %c2_31 = arith.constant 2 : index
    %c0_32 = arith.constant 0 : index
    %c0_33 = arith.constant 0 : index
    %84 = vector.load %arg4[%c2_31, %c0_32, %c0_33] : memref<3x384x128xbf16, #tpu.memory_space<vmem>>, vector<1x384x128xbf16>
    %85 = vector.shape_cast %84 : vector<1x384x128xbf16> to vector<384x128xbf16>
    %cst_34 = arith.constant dense<0.000000e+00> : vector<128x128xf32>
    %86 = tpu.matmul %83, %85, %cst_34 {dimension_numbers = #tpu.dot_dimension_numbers<[1], [0], [0], [1], [0, 0, 1, 1], [], []>} : vector<128x384xbf16>, vector<384x128xbf16>, vector<128x128xf32> -> vector<128x128xf32>
    %87 = arith.addf %77, %86 : vector<128x128xf32>
    %88 = vector.broadcast %52 : vector<1x128xf32> to vector<128x128xf32>
    %89 = arith.addf %87, %88 : vector<128x128xf32>
    %cst_35 = arith.constant 0.000000e+00 : f32
    %90 = vector.broadcast %cst_35 : f32 to vector<128x128xf32>
    %91 = arith.maximumf %89, %90 : vector<128x128xf32>
    %92 = vector.shape_cast %91 : vector<128x128xf32> to vector<2x8x8x128xf32>
    %c0_36 = arith.constant 0 : index
    %c0_37 = arith.constant 0 : index
    %c0_38 = arith.constant 0 : index
    %c0_39 = arith.constant 0 : index
    %93 = vector.load %arg6[%c0_36, %c0_37, %c0_38, %c0_39] : memref<2x8x8x128xf32, #tpu.memory_space<vmem>>, vector<2x8x8x128xf32>
    tpu.vector_store %arg6[%c0_36, %c0_37, %c0_38, %c0_39], %92 {strides = array<i32>} : memref<2x8x8x128xf32, #tpu.memory_space<vmem>>, vector<2x8x8x128xf32>,
    return
  }
  func.func @transform_0(%arg0: i32) -> (i32, i32, i32, i32) {
    %c0_i32 = arith.constant 0 : i32
    %c0_i32_0 = arith.constant 0 : i32
    %c0_i32_1 = arith.constant 0 : i32
    %c0_i32_2 = arith.constant 0 : i32
    return %arg0, %c0_i32, %c0_i32_0, %c0_i32_1 : i32, i32, i32, i32
  }
  func.func @transform_1(%arg0: i32) -> (i32, i32, i32) {
    %c0_i32 = arith.constant 0 : i32
    %c0_i32_0 = arith.constant 0 : i32
    %c0_i32_1 = arith.constant 0 : i32
    %c0_i32_2 = arith.constant 0 : i32
    return %c0_i32, %c0_i32_0, %c0_i32_1 : i32, i32, i32
  }
  func.func @transform_2(%arg0: i32) -> (i32, i32) {
    %c0_i32 = arith.constant 0 : i32
    %c0_i32_0 = arith.constant 0 : i32
    %c0_i32_1 = arith.constant 0 : i32
    return %c0_i32, %c0_i32_0 : i32, i32
  }
  func.func @transform_3(%arg0: i32) -> (i32, i32, i32) {
    %c0_i32 = arith.constant 0 : i32
    %c0_i32_0 = arith.constant 0 : i32
    %c0_i32_1 = arith.constant 0 : i32
    %c0_i32_2 = arith.constant 0 : i32
    return %c0_i32, %c0_i32_0, %c0_i32_1 : i32, i32, i32
  }
  func.func @transform_4(%arg0: i32) -> (i32, i32) {
    %c0_i32 = arith.constant 0 : i32
    %c0_i32_0 = arith.constant 0 : i32
    %c0_i32_1 = arith.constant 0 : i32
    return %c0_i32, %c0_i32_0 : i32, i32
  }
  func.func @transform_5(%arg0: i32) -> (i32, i32, i32, i32) {
    %c0_i32 = arith.constant 0 : i32
    %c0_i32_0 = arith.constant 0 : i32
    %c0_i32_1 = arith.constant 0 : i32
    %c0_i32_2 = arith.constant 0 : i32
    return %arg0, %c0_i32, %c0_i32_0, %c0_i32_1 : i32, i32, i32, i32
  }
}

module attributes {stable_mosaic.version = 11 : i64} {
  func.func @down_kernel(%arg0: i32, %arg1: memref<2x16x8x256xbf16, #tpu.memory_space<vmem>>, %arg2: memref<3x384x128xbf16, #tpu.memory_space<vmem>>, %arg3: memref<1x128xf32, #tpu.memory_space<vmem>>, %arg4: memref<3x384x128xbf16, #tpu.memory_space<vmem>>, %arg5: memref<1x128xf32, #tpu.memory_space<vmem>>, %arg6: memref<2x8x8x128xf32, #tpu.memory_space<vmem>>) attributes {dimension_semantics = [#tpu.dimension_semantics<parallel>], iteration_bounds = array<i64: 1>, scalar_prefetch = 0 : i64, scratch_operands = 0 : i64, tpu.core_type = #tpu.core_type<tc>, window_params = [{transform_indices = @transform_0, window_bounds = array<i64: 2, 16, 8, 256>}, {pipeline_mode = #tpu.pipeline_mode<synchronous>, transform_indices = @transform_1, window_bounds = array<i64: 3, 384, 128>}, {pipeline_mode = #tpu.pipeline_mode<synchronous>, transform_indices = @transform_2, window_bounds = array<i64: 1, 128>}, {pipeline_mode = #tpu.pipeline_mode<synchronous>, transform_indices = @transform_3, window_bounds = array<i64: 3, 384, 128>}, {pipeline_mode = #tpu.pipeline_mode<synchronous>, transform_indices = @transform_4, window_bounds = array<i64: 1, 128>}, {transform_indices = @transform_5, window_bounds = array<i64: 2, 8, 8, 128>}]} {
    %c0 = arith.constant 0 : index
    %c0_0 = arith.constant 0 : index
    %c0_1 = arith.constant 0 : index
    %c0_2 = arith.constant 0 : index
    %0 = vector.load %arg1[%c0, %c0_0, %c0_1, %c0_2] : memref<2x16x8x256xbf16, #tpu.memory_space<vmem>>, vector<2x16x8x256xbf16>
    %1 = arith.extf %0 : vector<2x16x8x256xbf16> to vector<2x16x8x256xf32>
    %2 = vector.extract_strided_slice %1 {offsets = [0, 0, 0, 0], sizes = [2, 16, 8, 128], strides = [1, 1, 1, 1]} : vector<2x16x8x256xf32> to vector<2x16x8x128xf32>
    %3 = vector.extract_strided_slice %1 {offsets = [0, 0, 0, 128], sizes = [2, 16, 8, 128], strides = [1, 1, 1, 1]} : vector<2x16x8x256xf32> to vector<2x16x8x128xf32>
    %4 = arith.maximumf %2, %3 : vector<2x16x8x128xf32>
    %5 = vector.shape_cast %4 : vector<2x16x8x128xf32> to vector<2x8x2x8x128xf32>
    %6 = vector.extract_strided_slice %5 {offsets = [0, 0, 0, 0, 0], sizes = [2, 8, 1, 8, 128], strides = [1, 1, 1, 1, 1]} : vector<2x8x2x8x128xf32> to vector<2x8x1x8x128xf32>
    %7 = vector.shape_cast %6 : vector<2x8x1x8x128xf32> to vector<2x8x8x128xf32>
    %8 = vector.extract_strided_slice %5 {offsets = [0, 0, 1, 0, 0], sizes = [2, 8, 1, 8, 128], strides = [1, 1, 1, 1, 1]} : vector<2x8x2x8x128xf32> to vector<2x8x1x8x128xf32>
    %9 = vector.shape_cast %8 : vector<2x8x1x8x128xf32> to vector<2x8x8x128xf32>
    %10 = arith.maximumf %7, %9 : vector<2x8x8x128xf32>
    %c0_3 = arith.constant 0 : index
    %c0_4 = arith.constant 0 : index
    %11 = vector.load %arg3[%c0_3, %c0_4] : memref<1x128xf32, #tpu.memory_space<vmem>>, vector<1x128xf32>
    %cst = arith.constant 0.000000e+00 : f32
    %12 = vector.broadcast %cst : f32 to vector<2x1x8x128xf32>
    %cst_5 = arith.constant 0.000000e+00 : f32
    %13 = vector.broadcast %cst_5 : f32 to vector<2x10x1x128xf32>
    %14 = tpu.concatenate %12, %10, %12 in 1 : vector<2x1x8x128xf32>, vector<2x8x8x128xf32>, vector<2x1x8x128xf32> -> vector<2x10x8x128xf32>
    %15 = tpu.concatenate %13, %14, %13 in 2 : vector<2x10x1x128xf32>, vector<2x10x8x128xf32>, vector<2x10x1x128xf32> -> vector<2x10x10x128xf32>
    %cst_6 = arith.constant 0.000000e+00 : f32
    %16 = vector.broadcast %cst_6 : f32 to vector<128x128xf32>
    %17 = vector.extract_strided_slice %15 {offsets = [0, 0, 0, 0], sizes = [2, 8, 8, 128], strides = [1, 1, 1, 1]} : vector<2x10x10x128xf32> to vector<2x8x8x128xf32>
    %18 = vector.extract_strided_slice %15 {offsets = [0, 0, 1, 0], sizes = [2, 8, 8, 128], strides = [1, 1, 1, 1]} : vector<2x10x10x128xf32> to vector<2x8x8x128xf32>
    %19 = vector.extract_strided_slice %15 {offsets = [0, 0, 2, 0], sizes = [2, 8, 8, 128], strides = [1, 1, 1, 1]} : vector<2x10x10x128xf32> to vector<2x8x8x128xf32>
    %20 = tpu.concatenate %17, %18, %19 in 3 : vector<2x8x8x128xf32>, vector<2x8x8x128xf32>, vector<2x8x8x128xf32> -> vector<2x8x8x384xf32>
    %21 = vector.shape_cast %20 : vector<2x8x8x384xf32> to vector<128x384xf32>
    %22 = arith.truncf %21 : vector<128x384xf32> to vector<128x384xbf16>
    %c0_7 = arith.constant 0 : index
    %c0_8 = arith.constant 0 : index
    %c0_9 = arith.constant 0 : index
    %23 = vector.load %arg2[%c0_7, %c0_8, %c0_9] : memref<3x384x128xbf16, #tpu.memory_space<vmem>>, vector<1x384x128xbf16>
    %24 = vector.shape_cast %23 : vector<1x384x128xbf16> to vector<384x128xbf16>
    %cst_10 = arith.constant dense<0.000000e+00> : vector<128x128xf32>
    %25 = tpu.matmul %22, %24, %cst_10 {dimension_numbers = #tpu.dot_dimension_numbers<[1], [0], [0], [1], [0, 0, 1, 1], [], []>} : vector<128x384xbf16>, vector<384x128xbf16>, vector<128x128xf32> -> vector<128x128xf32>
    %26 = arith.addf %16, %25 : vector<128x128xf32>
    %27 = vector.extract_strided_slice %15 {offsets = [0, 1, 0, 0], sizes = [2, 8, 8, 128], strides = [1, 1, 1, 1]} : vector<2x10x10x128xf32> to vector<2x8x8x128xf32>
    %28 = vector.extract_strided_slice %15 {offsets = [0, 1, 1, 0], sizes = [2, 8, 8, 128], strides = [1, 1, 1, 1]} : vector<2x10x10x128xf32> to vector<2x8x8x128xf32>
    %29 = vector.extract_strided_slice %15 {offsets = [0, 1, 2, 0], sizes = [2, 8, 8, 128], strides = [1, 1, 1, 1]} : vector<2x10x10x128xf32> to vector<2x8x8x128xf32>
    %30 = tpu.concatenate %27, %28, %29 in 3 : vector<2x8x8x128xf32>, vector<2x8x8x128xf32>, vector<2x8x8x128xf32> -> vector<2x8x8x384xf32>
    %31 = vector.shape_cast %30 : vector<2x8x8x384xf32> to vector<128x384xf32>
    %32 = arith.truncf %31 : vector<128x384xf32> to vector<128x384xbf16>
    %c1 = arith.constant 1 : index
    %c0_11 = arith.constant 0 : index
    %c0_12 = arith.constant 0 : index
    %33 = vector.load %arg2[%c1, %c0_11, %c0_12] : memref<3x384x128xbf16, #tpu.memory_space<vmem>>, vector<1x384x128xbf16>
    %34 = vector.shape_cast %33 : vector<1x384x128xbf16> to vector<384x128xbf16>
    %cst_13 = arith.constant dense<0.000000e+00> : vector<128x128xf32>
    %35 = tpu.matmul %32, %34, %cst_13 {dimension_numbers = #tpu.dot_dimension_numbers<[1], [0], [0], [1], [0, 0, 1, 1], [], []>} : vector<128x384xbf16>, vector<384x128xbf16>, vector<128x128xf32> -> vector<128x128xf32>
    %36 = arith.addf %26, %35 : vector<128x128xf32>
    %37 = vector.extract_strided_slice %15 {offsets = [0, 2, 0, 0], sizes = [2, 8, 8, 128], strides = [1, 1, 1, 1]} : vector<2x10x10x128xf32> to vector<2x8x8x128xf32>
    %38 = vector.extract_strided_slice %15 {offsets = [0, 2, 1, 0], sizes = [2, 8, 8, 128], strides = [1, 1, 1, 1]} : vector<2x10x10x128xf32> to vector<2x8x8x128xf32>
    %39 = vector.extract_strided_slice %15 {offsets = [0, 2, 2, 0], sizes = [2, 8, 8, 128], strides = [1, 1, 1, 1]} : vector<2x10x10x128xf32> to vector<2x8x8x128xf32>
    %40 = tpu.concatenate %37, %38, %39 in 3 : vector<2x8x8x128xf32>, vector<2x8x8x128xf32>, vector<2x8x8x128xf32> -> vector<2x8x8x384xf32>
    %41 = vector.shape_cast %40 : vector<2x8x8x384xf32> to vector<128x384xf32>
    %42 = arith.truncf %41 : vector<128x384xf32> to vector<128x384xbf16>
    %c2 = arith.constant 2 : index
    %c0_14 = arith.constant 0 : index
    %c0_15 = arith.constant 0 : index
    %43 = vector.load %arg2[%c2, %c0_14, %c0_15] : memref<3x384x128xbf16, #tpu.memory_space<vmem>>, vector<1x384x128xbf16>
    %44 = vector.shape_cast %43 : vector<1x384x128xbf16> to vector<384x128xbf16>
    %cst_16 = arith.constant dense<0.000000e+00> : vector<128x128xf32>
    %45 = tpu.matmul %42, %44, %cst_16 {dimension_numbers = #tpu.dot_dimension_numbers<[1], [0], [0], [1], [0, 0, 1, 1], [], []>} : vector<128x384xbf16>, vector<384x128xbf16>, vector<128x128xf32> -> vector<128x128xf32>
    %46 = arith.addf %36, %45 : vector<128x128xf32>
    %47 = vector.broadcast %11 : vector<1x128xf32> to vector<128x128xf32>
    %48 = arith.addf %46, %47 : vector<128x128xf32>
    %cst_17 = arith.constant 0.000000e+00 : f32
    %49 = vector.broadcast %cst_17 : f32 to vector<128x128xf32>
    %50 = arith.maximumf %48, %49 : vector<128x128xf32>
    %51 = vector.shape_cast %50 : vector<128x128xf32> to vector<2x8x8x128xf32>
    %c0_18 = arith.constant 0 : index
    %c0_19 = arith.constant 0 : index
    %52 = vector.load %arg5[%c0_18, %c0_19] : memref<1x128xf32, #tpu.memory_space<vmem>>, vector<1x128xf32>
    %cst_20 = arith.constant 0.000000e+00 : f32
    %53 = vector.broadcast %cst_20 : f32 to vector<2x1x8x128xf32>
    %cst_21 = arith.constant 0.000000e+00 : f32
    %54 = vector.broadcast %cst_21 : f32 to vector<2x10x1x128xf32>
    %55 = tpu.concatenate %53, %51, %53 in 1 : vector<2x1x8x128xf32>, vector<2x8x8x128xf32>, vector<2x1x8x128xf32> -> vector<2x10x8x128xf32>
    %56 = tpu.concatenate %54, %55, %54 in 2 : vector<2x10x1x128xf32>, vector<2x10x8x128xf32>, vector<2x10x1x128xf32> -> vector<2x10x10x128xf32>
    %cst_22 = arith.constant 0.000000e+00 : f32
    %57 = vector.broadcast %cst_22 : f32 to vector<128x128xf32>
    %58 = vector.extract_strided_slice %56 {offsets = [0, 0, 0, 0], sizes = [2, 8, 8, 128], strides = [1, 1, 1, 1]} : vector<2x10x10x128xf32> to vector<2x8x8x128xf32>
    %59 = vector.extract_strided_slice %56 {offsets = [0, 0, 1, 0], sizes = [2, 8, 8, 128], strides = [1, 1, 1, 1]} : vector<2x10x10x128xf32> to vector<2x8x8x128xf32>
    %60 = vector.extract_strided_slice %56 {offsets = [0, 0, 2, 0], sizes = [2, 8, 8, 128], strides = [1, 1, 1, 1]} : vector<2x10x10x128xf32> to vector<2x8x8x128xf32>
    %61 = tpu.concatenate %58, %59, %60 in 3 : vector<2x8x8x128xf32>, vector<2x8x8x128xf32>, vector<2x8x8x128xf32> -> vector<2x8x8x384xf32>
    %62 = vector.shape_cast %61 : vector<2x8x8x384xf32> to vector<128x384xf32>
    %63 = arith.truncf %62 : vector<128x384xf32> to vector<128x384xbf16>
    %c0_23 = arith.constant 0 : index
    %c0_24 = arith.constant 0 : index
    %c0_25 = arith.constant 0 : index
    %64 = vector.load %arg4[%c0_23, %c0_24, %c0_25] : memref<3x384x128xbf16, #tpu.memory_space<vmem>>, vector<1x384x128xbf16>
    %65 = vector.shape_cast %64 : vector<1x384x128xbf16> to vector<384x128xbf16>
    %cst_26 = arith.constant dense<0.000000e+00> : vector<128x128xf32>
    %66 = tpu.matmul %63, %65, %cst_26 {dimension_numbers = #tpu.dot_dimension_numbers<[1], [0], [0], [1], [0, 0, 1, 1], [], []>} : vector<128x384xbf16>, vector<384x128xbf16>, vector<128x128xf32> -> vector<128x128xf32>
    %67 = arith.addf %57, %66 : vector<128x128xf32>
    %68 = vector.extract_strided_slice %56 {offsets = [0, 1, 0, 0], sizes = [2, 8, 8, 128], strides = [1, 1, 1, 1]} : vector<2x10x10x128xf32> to vector<2x8x8x128xf32>
    %69 = vector.extract_strided_slice %56 {offsets = [0, 1, 1, 0], sizes = [2, 8, 8, 128], strides = [1, 1, 1, 1]} : vector<2x10x10x128xf32> to vector<2x8x8x128xf32>
    %70 = vector.extract_strided_slice %56 {offsets = [0, 1, 2, 0], sizes = [2, 8, 8, 128], strides = [1, 1, 1, 1]} : vector<2x10x10x128xf32> to vector<2x8x8x128xf32>
    %71 = tpu.concatenate %68, %69, %70 in 3 : vector<2x8x8x128xf32>, vector<2x8x8x128xf32>, vector<2x8x8x128xf32> -> vector<2x8x8x384xf32>
    %72 = vector.shape_cast %71 : vector<2x8x8x384xf32> to vector<128x384xf32>
    %73 = arith.truncf %72 : vector<128x384xf32> to vector<128x384xbf16>
    %c1_27 = arith.constant 1 : index
    %c0_28 = arith.constant 0 : index
    %c0_29 = arith.constant 0 : index
    %74 = vector.load %arg4[%c1_27, %c0_28, %c0_29] : memref<3x384x128xbf16, #tpu.memory_space<vmem>>, vector<1x384x128xbf16>
    %75 = vector.shape_cast %74 : vector<1x384x128xbf16> to vector<384x128xbf16>
    %cst_30 = arith.constant dense<0.000000e+00> : vector<128x128xf32>
    %76 = tpu.matmul %73, %75, %cst_30 {dimension_numbers = #tpu.dot_dimension_numbers<[1], [0], [0], [1], [0, 0, 1, 1], [], []>} : vector<128x384xbf16>, vector<384x128xbf16>, vector<128x128xf32> -> vector<128x128xf32>
    %77 = arith.addf %67, %76 : vector<128x128xf32>
    %78 = vector.extract_strided_slice %56 {offsets = [0, 2, 0, 0], sizes = [2, 8, 8, 128], strides = [1, 1, 1, 1]} : vector<2x10x10x128xf32> to vector<2x8x8x128xf32>
    %79 = vector.extract_strided_slice %56 {offsets = [0, 2, 1, 0], sizes = [2, 8, 8, 128], strides = [1, 1, 1, 1]} : vector<2x10x10x128xf32> to vector<2x8x8x128xf32>
    %80 = vector.extract_strided_slice %56 {offsets = [0, 2, 2, 0], sizes = [2, 8, 8, 128], strides = [1, 1, 1, 1]} : vector<2x10x10x128xf32> to vector<2x8x8x128xf32>
    %81 = tpu.concatenate %78, %79, %80 in 3 : vector<2x8x8x128xf32>, vector<2x8x8x128xf32>, vector<2x8x8x128xf32> -> vector<2x8x8x384xf32>
    %82 = vector.shape_cast %81 : vector<2x8x8x384xf32> to vector<128x384xf32>
    %83 = arith.truncf %82 : vector<128x384xf32> to vector<128x384xbf16>
    %c2_31 = arith.constant 2 : index
    %c0_32 = arith.constant 0 : index
    %c0_33 = arith.constant 0 : index
    %84 = vector.load %arg4[%c2_31, %c0_32, %c0_33] : memref<3x384x128xbf16, #tpu.memory_space<vmem>>, vector<1x384x128xbf16>
    %85 = vector.shape_cast %84 : vector<1x384x128xbf16> to vector<384x128xbf16>
    %cst_34 = arith.constant dense<0.000000e+00> : vector<128x128xf32>
    %86 = tpu.matmul %83, %85, %cst_34 {dimension_numbers = #tpu.dot_dimension_numbers<[1], [0], [0], [1], [0, 0, 1, 1], [], []>} : vector<128x384xbf16>, vector<384x128xbf16>, vector<128x128xf32> -> vector<128x128xf32>
    %87 = arith.addf %77, %86 : vector<128x128xf32>
    %88 = vector.broadcast %52 : vector<1x128xf32> to vector<128x128xf32>
    %89 = arith.addf %87, %88 : vector<128x128xf32>
    %cst_35 = arith.constant 0.000000e+00 : f32
    %90 = vector.broadcast %cst_35 : f32 to vector<128x128xf32>
    %91 = arith.maximumf %89, %90 : vector<128x128xf32>
    %92 = vector.shape_cast %91 : vector<128x128xf32> to vector<2x8x8x128xf32>
    %c0_36 = arith.constant 0 : index
    %c0_37 = arith.constant 0 : index
    %c0_38 = arith.constant 0 : index
    %c0_39 = arith.constant 0 : index
    %93 = vector.load %arg6[%c0_36, %c0_37, %c0_38, %c0_39] : memref<2x8x8x128xf32, #tpu.memory_space<vmem>>, vector<2x8x8x128xf32>
    tpu.vector_store %arg6[%c0_36, %c0_37, %c0_38, %c0_39], %92 {strides = array<i32>} : memref<2x8x8x128xf32, #tpu.memory_space<vmem>>, vector<2x8x8x128xf32>,
    return
  }
  func.func @transform_0(%arg0: i32) -> (i32, i32, i32, i32) {
    %c0_i32 = arith.constant 0 : i32
    %c0_i32_0 = arith.constant 0 : i32
    %c0_i32_1 = arith.constant 0 : i32
    %c0_i32_2 = arith.constant 0 : i32
    return %arg0, %c0_i32, %c0_i32_0, %c0_i32_1 : i32, i32, i32, i32
  }
  func.func @transform_1(%arg0: i32) -> (i32, i32, i32) {
    %c0_i32 = arith.constant 0 : i32
    %c0_i32_0 = arith.constant 0 : i32
    %c0_i32_1 = arith.constant 0 : i32
    %c0_i32_2 = arith.constant 0 : i32
    return %c0_i32, %c0_i32_0, %c0_i32_1 : i32, i32, i32
  }
  func.func @transform_2(%arg0: i32) -> (i32, i32) {
    %c0_i32 = arith.constant 0 : i32
    %c0_i32_0 = arith.constant 0 : i32
    %c0_i32_1 = arith.constant 0 : i32
    return %c0_i32, %c0_i32_0 : i32, i32
  }
  func.func @transform_3(%arg0: i32) -> (i32, i32, i32) {
    %c0_i32 = arith.constant 0 : i32
    %c0_i32_0 = arith.constant 0 : i32
    %c0_i32_1 = arith.constant 0 : i32
    %c0_i32_2 = arith.constant 0 : i32
    return %c0_i32, %c0_i32_0, %c0_i32_1 : i32, i32, i32
  }
  func.func @transform_4(%arg0: i32) -> (i32, i32) {
    %c0_i32 = arith.constant 0 : i32
    %c0_i32_0 = arith.constant 0 : i32
    %c0_i32_1 = arith.constant 0 : i32
    return %c0_i32, %c0_i32_0 : i32, i32
  }
  func.func @transform_5(%arg0: i32) -> (i32, i32, i32, i32) {
    %c0_i32 = arith.constant 0 : i32
    %c0_i32_0 = arith.constant 0 : i32
    %c0_i32_1 = arith.constant 0 : i32
    %c0_i32_2 = arith.constant 0 : i32
    return %arg0, %c0_i32, %c0_i32_0, %c0_i32_1 : i32, i32, i32, i32
  }
}

</mosaic_0001>

<llo_original>
// kernel: tpu_custom_call.1
$region0: #{tpu_custom_call.1}
  #allocation0 [shape = 'u32[]', space=smem, size = 0x4, offset = 0x4, fixed_abs, tag = 'smem constant byte address 0x4 - core index']
  #allocation1 [shape = 'u32[72,128]{1,0:T(1,128)}', space=vmem, size = 0x9000, scoped, tag = 'internal scratch']
  %s0 = inlined_call_operand.hbm [shape: bf16[2,16,8,256], index: 0, kind: input, shape index: {}]
  %s1 = inlined_call_operand.hbm [shape: bf16[3,384,128], index: 1, kind: input, shape index: {}]
  %s2 = inlined_call_operand.vmem [shape: f32[1,128], index: 2, kind: input, shape index: {}]
  %s3 = inlined_call_operand.hbm [shape: bf16[3,384,128], index: 3, kind: input, shape index: {}]
  %s4 = inlined_call_operand.vmem [shape: f32[1,128], index: 4, kind: input, shape index: {}]
  %s5 = inlined_call_operand.hbm [shape: f32[2,8,8,128], index: 5, kind: output, shape index: {}]
  %s6 = sld [smem:[#allocation0]]
  $region42: #{tpu_custom_call.1} parent=0
    _
  %s8 = ssub.s32 1, %s6
  %s9 = scalar_select 0, %s8, %s6
  $region1: #{tpu_custom_call.1} parent=0
    #allocation2 [shape = 'u8[131072]{0}', space=vmem, size = 0x20000, scoped, tag = 'input window, operand 0, single buffered']
    #allocation3 [shape = 's32[1]{0}', space=sflag, size = 0x4, scoped, tag = 'scoped memory for tpu_custom_call.1']
    #allocation4 [shape = 's32[1]{0}', space=sflag, size = 0x4, scoped, tag = 'scoped memory for tpu_custom_call.1']
    #allocation5 [shape = 'u8[294912]{0}', space=vmem, size = 0x48000, scoped, tag = 'input window, operand 1, single buffered']
    #allocation6 [shape = 's32[1]{0}', space=sflag, size = 0x4, scoped, tag = 'scoped memory for tpu_custom_call.1']
    #allocation7 [shape = 'u8[294912]{0}', space=vmem, size = 0x48000, scoped, tag = 'input window, operand 3, single buffered']
    #allocation8 [shape = 'u8[65536]{0}', space=vmem, size = 0x10000, scoped, tag = 'output window, operand 0, single buffered']
    %10 = vsyncpa [#allocation3], 0
    %11 = vsyncpa [#allocation6], 0
    %12 = vsyncpa [#allocation4], 0
    // Predicated region
    $region2: #{tpu_custom_call.1} parent=1 // pred_check
      _
    $region3: #{tpu_custom_call.1} parent=1 // pred_check_branch
      %14 = sbr.rel (0) target = $region5
    $region4: #{tpu_custom_call.1} parent=1 // pred_region
      %16 = vsyncadd [#allocation3], 0
      %s17 = sshll.u32 %s0, 4
      %s18 = int_to_ptr.hbm [resolvable:$true] %s17
      %s19 = sshll.u32 [#allocation2], 4
      %s20 = int_to_ptr.vmem [resolvable:$true] %s19
      %25 = dma.hbm_to_vmem [thread:$0]  %s18, 4096, %s20, [#allocation3], 128, 128, 8
    $region5: #{tpu_custom_call.1} parent=1 // pred_fallthru
      _
    // Predicated region
    $region6: #{tpu_custom_call.1} parent=1 // pred_check
      _
    $region7: #{tpu_custom_call.1} parent=1 // pred_check_branch
      %27 = sbr.rel (0) target = $region9
    $region8: #{tpu_custom_call.1} parent=1 // pred_region
      %29 = vsyncadd [#allocation6], 0
      %s30 = sshll.u32 %s1, 4
      %s31 = int_to_ptr.hbm [resolvable:$true] %s30
      %s32 = sshll.u32 [#allocation5], 4
      %s33 = int_to_ptr.vmem [resolvable:$true] %s32
      %38 = dma.hbm_to_vmem [thread:$0]  %s31, 9216, %s33, [#allocation6], 64, 64, 4
    $region9: #{tpu_custom_call.1} parent=1 // pred_fallthru
      _
    // Predicated region
    $region10: #{tpu_custom_call.1} parent=1 // pred_check
      _
    $region11: #{tpu_custom_call.1} parent=1 // pred_check_branch
      %40 = sbr.rel (0) target = $region13
    $region12: #{tpu_custom_call.1} parent=1 // pred_region
      _
    $region13: #{tpu_custom_call.1} parent=1 // pred_fallthru
      _
    // Predicated region
    $region14: #{tpu_custom_call.1} parent=1 // pred_check
      _
    $region15: #{tpu_custom_call.1} parent=1 // pred_check_branch
      %42 = sbr.rel (0) target = $region17
    $region16: #{tpu_custom_call.1} parent=1 // pred_region
      %44 = vsyncadd [#allocation6], 0
      %s45 = sshll.u32 %s3, 4
      %s46 = int_to_ptr.hbm [resolvable:$true] %s45
      %s47 = sshll.u32 [#allocation7], 4
      %s48 = int_to_ptr.vmem [resolvable:$true] %s47
      %53 = dma.hbm_to_vmem [thread:$0]  %s46, 9216, %s48, [#allocation6], 64, 64, 4
    $region17: #{tpu_custom_call.1} parent=1 // pred_fallthru
      _
    // Predicated region
    $region18: #{tpu_custom_call.1} parent=1 // pred_check
      _
    $region19: #{tpu_custom_call.1} parent=1 // pred_check_branch
      %55 = sbr.rel (0) target = $region21
    $region20: #{tpu_custom_call.1} parent=1 // pred_region
      _
    $region21: #{tpu_custom_call.1} parent=1 // pred_fallthru
      _
    // Predicated region
    $region22: #{tpu_custom_call.1} parent=1 // pred_check
      _
    $region23: #{tpu_custom_call.1} parent=1 // pred_check_branch
      %57 = sbr.rel (0) target = $region25
    $region24: #{tpu_custom_call.1} parent=1 // pred_region
      %59 = dma.done [#allocation3], 4096
    $region25: #{tpu_custom_call.1} parent=1 // pred_fallthru
      _
    // Predicated region
    $region26: #{tpu_custom_call.1} parent=1 // pred_check
      _
    $region27: #{tpu_custom_call.1} parent=1 // pred_check_branch
      %61 = sbr.rel (0) target = $region29
    $region28: #{tpu_custom_call.1} parent=1 // pred_region
      %63 = dma.done [#allocation6], 9216
    $region29: #{tpu_custom_call.1} parent=1 // pred_fallthru
      _
    // Predicated region
    $region30: #{tpu_custom_call.1} parent=1 // pred_check
      _
    $region31: #{tpu_custom_call.1} parent=1 // pred_check_branch
      %65 = sbr.rel (0) target = $region33
    $region32: #{tpu_custom_call.1} parent=1 // pred_region
      %67 = dma.done [#allocation6], 9216
    $region33: #{tpu_custom_call.1} parent=1 // pred_fallthru
      _
    %v68 = vld [vmem:[#allocation2] sm:$0xff]
    %v69 = vld [vmem:[#allocation2 + $0x8] sm:$0xff]
    %v70 = vld [vmem:[#allocation2 + $0x10] sm:$0xff]
    %v71 = vld [vmem:[#allocation2 + $0x18] sm:$0xff]
    %v72 = vld [vmem:[#allocation2 + $0x20] sm:$0xff]
    %v73 = vld [vmem:[#allocation2 + $0x28] sm:$0xff]
    %v74 = vld [vmem:[#allocation2 + $0x30] sm:$0xff]
    %v75 = vld [vmem:[#allocation2 + $0x38] sm:$0xff]
    %v76 = vld [vmem:[#allocation2 + $0x40] sm:$0xff]
    %v77 = vld [vmem:[#allocation2 + $0x48] sm:$0xff]
    %v78 = vld [vmem:[#allocation2 + $0x50] sm:$0xff]
    %v79 = vld [vmem:[#allocation2 + $0x58] sm:$0xff]
    %v80 = vld [vmem:[#allocation2 + $0x60] sm:$0xff]
    %v81 = vld [vmem:[#allocation2 + $0x68] sm:$0xff]
    %v82 = vld [vmem:[#allocation2 + $0x70] sm:$0xff]
    %v83 = vld [vmem:[#allocation2 + $0x78] sm:$0xff]
    %v84 = vld [vmem:[#allocation2 + $0x80] sm:$0xff]
    %v85 = vld [vmem:[#allocation2 + $0x88] sm:$0xff]
    %v86 = vld [vmem:[#allocation2 + $0x90] sm:$0xff]
    %v87 = vld [vmem:[#allocation2 + $0x98] sm:$0xff]
    %v88 = vld [vmem:[#allocation2 + $0xa0] sm:$0xff]
    %v89 = vld [vmem:[#allocation2 + $0xa8] sm:$0xff]
    %v90 = vld [vmem:[#allocation2 + $0xb0] sm:$0xff]
    %v91 = vld [vmem:[#allocation2 + $0xb8] sm:$0xff]
    %v92 = vld [vmem:[#allocation2 + $0xc0] sm:$0xff]
    %v93 = vld [vmem:[#allocation2 + $0xc8] sm:$0xff]
    %v94 = vld [vmem:[#allocation2 + $0xd0] sm:$0xff]
    %v95 = vld [vmem:[#allocation2 + $0xd8] sm:$0xff]
    %v96 = vld [vmem:[#allocation2 + $0xe0] sm:$0xff]
    %v97 = vld [vmem:[#allocation2 + $0xe8] sm:$0xff]
    %v98 = vld [vmem:[#allocation2 + $0xf0] sm:$0xff]
    %v99 = vld [vmem:[#allocation2 + $0xf8] sm:$0xff]
    %v100 = vunpack.c.l.bf16 %v68
    %v101 = vunpack.c.h.bf16 %v68
    %v102 = vunpack.c.l.bf16 %v69
    %v103 = vunpack.c.h.bf16 %v69
    %v104 = vunpack.c.l.bf16 %v70
    %v105 = vunpack.c.h.bf16 %v70
    %v106 = vunpack.c.l.bf16 %v71
    %v107 = vunpack.c.h.bf16 %v71
    %v108 = vunpack.c.l.bf16 %v72
    %v109 = vunpack.c.h.bf16 %v72
    %v110 = vunpack.c.l.bf16 %v73
    %v111 = vunpack.c.h.bf16 %v73
    %v112 = vunpack.c.l.bf16 %v74
    %v113 = vunpack.c.h.bf16 %v74
    %v114 = vunpack.c.l.bf16 %v75
    %v115 = vunpack.c.h.bf16 %v75
    %v116 = vunpack.c.l.bf16 %v76
    %v117 = vunpack.c.h.bf16 %v76
    %v118 = vunpack.c.l.bf16 %v77
    %v119 = vunpack.c.h.bf16 %v77
    %v120 = vunpack.c.l.bf16 %v78
    %v121 = vunpack.c.h.bf16 %v78
    %v122 = vunpack.c.l.bf16 %v79
    %v123 = vunpack.c.h.bf16 %v79
    %v124 = vunpack.c.l.bf16 %v80
    %v125 = vunpack.c.h.bf16 %v80
    %v126 = vunpack.c.l.bf16 %v81
    %v127 = vunpack.c.h.bf16 %v81
    %v128 = vunpack.c.l.bf16 %v82
    %v129 = vunpack.c.h.bf16 %v82
    %v130 = vunpack.c.l.bf16 %v83
    %v131 = vunpack.c.h.bf16 %v83
    %v132 = vunpack.c.l.bf16 %v84
    %v133 = vunpack.c.h.bf16 %v84
    %v134 = vunpack.c.l.bf16 %v85
    %v135 = vunpack.c.h.bf16 %v85
    %v136 = vunpack.c.l.bf16 %v86
    %v137 = vunpack.c.h.bf16 %v86
    %v138 = vunpack.c.l.bf16 %v87
    %v139 = vunpack.c.h.bf16 %v87
    %v140 = vunpack.c.l.bf16 %v88
    %v141 = vunpack.c.h.bf16 %v88
    %v142 = vunpack.c.l.bf16 %v89
    %v143 = vunpack.c.h.bf16 %v89
    %v144 = vunpack.c.l.bf16 %v90
    %v145 = vunpack.c.h.bf16 %v90
    %v146 = vunpack.c.l.bf16 %v91
    %v147 = vunpack.c.h.bf16 %v91
    %v148 = vunpack.c.l.bf16 %v92
    %v149 = vunpack.c.h.bf16 %v92
    %v150 = vunpack.c.l.bf16 %v93
    %v151 = vunpack.c.h.bf16 %v93
    %v152 = vunpack.c.l.bf16 %v94
    %v153 = vunpack.c.h.bf16 %v94
    %v154 = vunpack.c.l.bf16 %v95
    %v155 = vunpack.c.h.bf16 %v95
    %v156 = vunpack.c.l.bf16 %v96
    %v157 = vunpack.c.h.bf16 %v96
    %v158 = vunpack.c.l.bf16 %v97
    %v159 = vunpack.c.h.bf16 %v97
    %v160 = vunpack.c.l.bf16 %v98
    %v161 = vunpack.c.h.bf16 %v98
    %v162 = vunpack.c.l.bf16 %v99
    %v163 = vunpack.c.h.bf16 %v99
    %v164 = vmax.f32 %v100, %v101
    %v165 = vmax.f32 %v102, %v103
    %v166 = vmax.f32 %v104, %v105
    %v167 = vmax.f32 %v106, %v107
    %v168 = vmax.f32 %v108, %v109
    %v169 = vmax.f32 %v110, %v111
    %v170 = vmax.f32 %v112, %v113
    %v171 = vmax.f32 %v114, %v115
    %v172 = vmax.f32 %v116, %v117
    %v173 = vmax.f32 %v118, %v119
    %v174 = vmax.f32 %v120, %v121
    %v175 = vmax.f32 %v122, %v123
    %v176 = vmax.f32 %v124, %v125
    %v177 = vmax.f32 %v126, %v127
    %v178 = vmax.f32 %v128, %v129
    %v179 = vmax.f32 %v130, %v131
    %v180 = vmax.f32 %v132, %v133
    %v181 = vmax.f32 %v134, %v135
    %v182 = vmax.f32 %v136, %v137
    %v183 = vmax.f32 %v138, %v139
    %v184 = vmax.f32 %v140, %v141
    %v185 = vmax.f32 %v142, %v143
    %v186 = vmax.f32 %v144, %v145
    %v187 = vmax.f32 %v146, %v147
    %v188 = vmax.f32 %v148, %v149
    %v189 = vmax.f32 %v150, %v151
    %v190 = vmax.f32 %v152, %v153
    %v191 = vmax.f32 %v154, %v155
    %v192 = vmax.f32 %v156, %v157
    %v193 = vmax.f32 %v158, %v159
    %v194 = vmax.f32 %v160, %v161
    %v195 = vmax.f32 %v162, %v163
    %v196 = vmax.f32 %v164, %v165
    %v197 = vmax.f32 %v166, %v167
    %v198 = vmax.f32 %v168, %v169
    %v199 = vmax.f32 %v170, %v171
    %v200 = vmax.f32 %v172, %v173
    %v201 = vmax.f32 %v174, %v175
    %v202 = vmax.f32 %v176, %v177
    %v203 = vmax.f32 %v178, %v179
    %v204 = vmax.f32 %v180, %v181
    %v205 = vmax.f32 %v182, %v183
    %v206 = vmax.f32 %v184, %v185
    %v207 = vmax.f32 %v186, %v187
    %v208 = vmax.f32 %v188, %v189
    %v209 = vmax.f32 %v190, %v191
    %v210 = vmax.f32 %v192, %v193
    %v211 = vmax.f32 %v194, %v195
    %v212 = vld [vmem:[%s2] sm:$0x1]
    %v230 = vrot.slane 0.0, 7
    %v231 = vrot.slane %v196, 7
    %v232 = vrot.slane %v197, 7
    %v233 = vrot.slane %v198, 7
    %v234 = vrot.slane %v199, 7
    %v235 = vrot.slane %v200, 7
    %v236 = vrot.slane %v201, 7
    %v237 = vrot.slane %v202, 7
    %v238 = vrot.slane %v203, 7
    %v239 = vrot.slane %v204, 7
    %v240 = vrot.slane %v205, 7
    %v241 = vrot.slane %v206, 7
    %v242 = vrot.slane %v207, 7
    %v243 = vrot.slane %v208, 7
    %v244 = vrot.slane %v209, 7
    %v245 = vrot.slane %v210, 7
    %v246 = vrot.slane %v211, 7
    %vm264 = vcmask 1040384
    %v265 = vsel %vm264, 0.0, %v230
    %v266 = vsel %vm264, 0.0, %v231
    %v267 = vsel %vm264, 0.0, %v232
    %v268 = vsel %vm264, 0.0, %v233
    %v269 = vsel %vm264, 0.0, %v234
    %v270 = vsel %vm264, 0.0, %v235
    %v271 = vsel %vm264, 0.0, %v236
    %v272 = vsel %vm264, 0.0, %v237
    %v273 = vsel %vm264, 0.0, %v238
    %v274 = vsel %vm264, 0.0, %v239
    %v275 = vsel %vm264, 0.0, %v240
    %v276 = vsel %vm264, 0.0, %v241
    %v277 = vsel %vm264, 0.0, %v242
    %v278 = vsel %vm264, 0.0, %v243
    %v279 = vsel %vm264, 0.0, %v244
    %v280 = vsel %vm264, 0.0, %v245
    %v281 = vsel %vm264, 0.0, %v246
    %v282 = vsel %vm264, %v230, 0.0
    %v283 = vsel %vm264, %v231, 0.0
    %v284 = vsel %vm264, %v232, 0.0
    %v285 = vsel %vm264, %v233, 0.0
    %v286 = vsel %vm264, %v234, 0.0
    %v287 = vsel %vm264, %v235, 0.0
    %v288 = vsel %vm264, %v236, 0.0
    %v289 = vsel %vm264, %v237, 0.0
    %v290 = vsel %vm264, %v238, 0.0
    %v291 = vsel %vm264, %v239, 0.0
    %v292 = vsel %vm264, %v240, 0.0
    %v293 = vsel %vm264, %v241, 0.0
    %v294 = vsel %vm264, %v242, 0.0
    %v295 = vsel %vm264, %v243, 0.0
    %v296 = vsel %vm264, %v244, 0.0
    %v297 = vsel %vm264, %v245, 0.0
    %v298 = vsel %vm264, %v246, 0.0
    %vm329 = vcmask 1046528
    %v330 = vrot.slane %v265, 1
    %v331 = vrot.slane %v282, 1
    %v332 = vsel %vm329, %v330, %v331
    %v333 = vrot.slane %v266, 1
    %v334 = vrot.slane %v283, 1
    %v335 = vsel %vm329, %v333, %v334
    %v336 = vrot.slane %v267, 1
    %v337 = vrot.slane %v284, 1
    %v338 = vsel %vm329, %v336, %v337
    %v339 = vrot.slane %v268, 1
    %v340 = vrot.slane %v285, 1
    %v341 = vsel %vm329, %v339, %v340
    %v342 = vrot.slane %v269, 1
    %v343 = vrot.slane %v286, 1
    %v344 = vsel %vm329, %v342, %v343
    %v345 = vrot.slane %v270, 1
    %v346 = vrot.slane %v287, 1
    %v347 = vsel %vm329, %v345, %v346
    %v348 = vrot.slane %v271, 1
    %v349 = vrot.slane %v288, 1
    %v350 = vsel %vm329, %v348, %v349
    %v351 = vrot.slane %v272, 1
    %v352 = vrot.slane %v289, 1
    %v353 = vsel %vm329, %v351, %v352
    %v354 = vrot.slane %v274, 1
    %v355 = vrot.slane %v291, 1
    %v356 = vsel %vm329, %v354, %v355
    %v357 = vrot.slane %v275, 1
    %v358 = vrot.slane %v292, 1
    %v359 = vsel %vm329, %v357, %v358
    %v360 = vrot.slane %v276, 1
    %v361 = vrot.slane %v293, 1
    %v362 = vsel %vm329, %v360, %v361
    %v363 = vrot.slane %v277, 1
    %v364 = vrot.slane %v294, 1
    %v365 = vsel %vm329, %v363, %v364
    %v366 = vrot.slane %v278, 1
    %v367 = vrot.slane %v295, 1
    %v368 = vsel %vm329, %v366, %v367
    %v369 = vrot.slane %v279, 1
    %v370 = vrot.slane %v296, 1
    %v371 = vsel %vm329, %v369, %v370
    %v372 = vrot.slane %v280, 1
    %v373 = vrot.slane %v297, 1
    %v374 = vsel %vm329, %v372, %v373
    %vm390 = vcmask 1045504
    %v391 = vrot.slane %v265, 2
    %v392 = vrot.slane %v282, 2
    %v393 = vsel %vm390, %v391, %v392
    %v394 = vrot.slane %v266, 2
    %v395 = vrot.slane %v283, 2
    %v396 = vsel %vm390, %v394, %v395
    %v397 = vrot.slane %v267, 2
    %v398 = vrot.slane %v284, 2
    %v399 = vsel %vm390, %v397, %v398
    %v400 = vrot.slane %v268, 2
    %v401 = vrot.slane %v285, 2
    %v402 = vsel %vm390, %v400, %v401
    %v403 = vrot.slane %v269, 2
    %v404 = vrot.slane %v286, 2
    %v405 = vsel %vm390, %v403, %v404
    %v406 = vrot.slane %v270, 2
    %v407 = vrot.slane %v287, 2
    %v408 = vsel %vm390, %v406, %v407
    %v409 = vrot.slane %v271, 2
    %v410 = vrot.slane %v288, 2
    %v411 = vsel %vm390, %v409, %v410
    %v412 = vrot.slane %v272, 2
    %v413 = vrot.slane %v289, 2
    %v414 = vsel %vm390, %v412, %v413
    %v415 = vrot.slane %v274, 2
    %v416 = vrot.slane %v291, 2
    %v417 = vsel %vm390, %v415, %v416
    %v418 = vrot.slane %v275, 2
    %v419 = vrot.slane %v292, 2
    %v420 = vsel %vm390, %v418, %v419
    %v421 = vrot.slane %v276, 2
    %v422 = vrot.slane %v293, 2
    %v423 = vsel %vm390, %v421, %v422
    %v424 = vrot.slane %v277, 2
    %v425 = vrot.slane %v294, 2
    %v426 = vsel %vm390, %v424, %v425
    %v427 = vrot.slane %v278, 2
    %v428 = vrot.slane %v295, 2
    %v429 = vsel %vm390, %v427, %v428
    %v430 = vrot.slane %v279, 2
    %v431 = vrot.slane %v296, 2
    %v432 = vsel %vm390, %v430, %v431
    %v433 = vrot.slane %v280, 2
    %v434 = vrot.slane %v297, 2
    %v435 = vsel %vm390, %v433, %v434
    %v451 = vpack.c.bf16 %v266, %v265
    %v452 = vpack.c.bf16 %v335, %v332
    %v453 = vpack.c.bf16 %v396, %v393
    %v454 = vpack.c.bf16 %v268, %v267
    %v455 = vpack.c.bf16 %v341, %v338
    %v456 = vpack.c.bf16 %v402, %v399
    %v457 = vpack.c.bf16 %v270, %v269
    %v458 = vpack.c.bf16 %v347, %v344
    %v459 = vpack.c.bf16 %v408, %v405
    %v460 = vpack.c.bf16 %v272, %v271
    %v461 = vpack.c.bf16 %v353, %v350
    %v462 = vpack.c.bf16 %v414, %v411
    %v463 = vpack.c.bf16 %v274, %v265
    %v464 = vpack.c.bf16 %v356, %v332
    %v465 = vpack.c.bf16 %v417, %v393
    %v466 = vpack.c.bf16 %v276, %v275
    %v467 = vpack.c.bf16 %v362, %v359
    %v468 = vpack.c.bf16 %v423, %v420
    %v469 = vpack.c.bf16 %v278, %v277
    %v470 = vpack.c.bf16 %v368, %v365
    %v471 = vpack.c.bf16 %v429, %v426
    %v472 = vpack.c.bf16 %v280, %v279
    %v473 = vpack.c.bf16 %v374, %v371
    %v474 = vpack.c.bf16 %v435, %v432
    %v475 = vld [vmem:[#allocation5] sm:$0xf]
    %v476 = vld [vmem:[#allocation5 + $0x4] sm:$0xf]
    %v477 = vld [vmem:[#allocation5 + $0x8] sm:$0xf]
    %v478 = vld [vmem:[#allocation5 + $0xc] sm:$0xf]
    %v479 = vld [vmem:[#allocation5 + $0x10] sm:$0xf]
    %v480 = vld [vmem:[#allocation5 + $0x14] sm:$0xf]
    %v481 = vld [vmem:[#allocation5 + $0x18] sm:$0xf]
    %v482 = vld [vmem:[#allocation5 + $0x1c] sm:$0xf]
    %v483 = vld [vmem:[#allocation5 + $0x20] sm:$0xf]
    %v484 = vld [vmem:[#allocation5 + $0x24] sm:$0xf]
    %v485 = vld [vmem:[#allocation5 + $0x28] sm:$0xf]
    %v486 = vld [vmem:[#allocation5 + $0x2c] sm:$0xf]
    %v487 = vld [vmem:[#allocation5 + $0x30] sm:$0xf]
    %v488 = vld [vmem:[#allocation5 + $0x34] sm:$0xf]
    %v489 = vld [vmem:[#allocation5 + $0x38] sm:$0xf]
    %v490 = vld [vmem:[#allocation5 + $0x3c] sm:$0xf]
    %v491 = vld [vmem:[#allocation5 + $0x40] sm:$0xf]
    %v492 = vld [vmem:[#allocation5 + $0x44] sm:$0xf]
    %v493 = vld [vmem:[#allocation5 + $0x48] sm:$0xf]
    %v494 = vld [vmem:[#allocation5 + $0x4c] sm:$0xf]
    %v495 = vld [vmem:[#allocation5 + $0x50] sm:$0xf]
    %v496 = vld [vmem:[#allocation5 + $0x54] sm:$0xf]
    %v497 = vld [vmem:[#allocation5 + $0x58] sm:$0xf]
    %v498 = vld [vmem:[#allocation5 + $0x5c] sm:$0xf]
    %v499 = vld [vmem:[#allocation5 + $0x60] sm:$0xf]
    %v500 = vld [vmem:[#allocation5 + $0x64] sm:$0xf]
    %v501 = vld [vmem:[#allocation5 + $0x68] sm:$0xf]
    %v502 = vld [vmem:[#allocation5 + $0x6c] sm:$0xf]
    %v503 = vld [vmem:[#allocation5 + $0x70] sm:$0xf]
    %v504 = vld [vmem:[#allocation5 + $0x74] sm:$0xf]
    %v505 = vld [vmem:[#allocation5 + $0x78] sm:$0xf]
    %v506 = vld [vmem:[#allocation5 + $0x7c] sm:$0xf]
    %v507 = vld [vmem:[#allocation5 + $0x80] sm:$0xf]
    %v508 = vld [vmem:[#allocation5 + $0x84] sm:$0xf]
    %v509 = vld [vmem:[#allocation5 + $0x88] sm:$0xf]
    %v510 = vld [vmem:[#allocation5 + $0x8c] sm:$0xf]
    %v511 = vld [vmem:[#allocation5 + $0x90] sm:$0xf]
    %v512 = vld [vmem:[#allocation5 + $0x94] sm:$0xf]
    %v513 = vld [vmem:[#allocation5 + $0x98] sm:$0xf]
    %v514 = vld [vmem:[#allocation5 + $0x9c] sm:$0xf]
    %v515 = vld [vmem:[#allocation5 + $0xa0] sm:$0xf]
    %v516 = vld [vmem:[#allocation5 + $0xa4] sm:$0xf]
    %v517 = vld [vmem:[#allocation5 + $0xa8] sm:$0xf]
    %v518 = vld [vmem:[#allocation5 + $0xac] sm:$0xf]
    %v519 = vld [vmem:[#allocation5 + $0xb0] sm:$0xf]
    %v520 = vld [vmem:[#allocation5 + $0xb4] sm:$0xf]
    %v521 = vld [vmem:[#allocation5 + $0xb8] sm:$0xf]
    %v522 = vld [vmem:[#allocation5 + $0xbc] sm:$0xf]
    %v527 = vrot.slane %v273, 1
    %v528 = vrot.slane %v290, 1
    %v529 = vsel %vm329, %v527, %v528
    %v530 = vrot.slane %v281, 1
    %v531 = vrot.slane %v298, 1
    %v532 = vsel %vm329, %v530, %v531
    %v535 = vrot.slane %v273, 2
    %v536 = vrot.slane %v290, 2
    %v537 = vsel %vm390, %v535, %v536
    %v538 = vrot.slane %v281, 2
    %v539 = vrot.slane %v298, 2
    %v540 = vsel %vm390, %v538, %v539
    %v543 = vpack.c.bf16 %v267, %v266
    %v544 = vpack.c.bf16 %v338, %v335
    %v545 = vpack.c.bf16 %v399, %v396
    %v546 = vpack.c.bf16 %v269, %v268
    %v547 = vpack.c.bf16 %v344, %v341
    %v548 = vpack.c.bf16 %v405, %v402
    %v549 = vpack.c.bf16 %v271, %v270
    %v550 = vpack.c.bf16 %v350, %v347
    %v551 = vpack.c.bf16 %v411, %v408
    %v552 = vpack.c.bf16 %v273, %v272
    %v553 = vpack.c.bf16 %v529, %v353
    %v554 = vpack.c.bf16 %v537, %v414
    %v555 = vpack.c.bf16 %v275, %v274
    %v556 = vpack.c.bf16 %v359, %v356
    %v557 = vpack.c.bf16 %v420, %v417
    %v558 = vpack.c.bf16 %v277, %v276
    %v559 = vpack.c.bf16 %v365, %v362
    %v560 = vpack.c.bf16 %v426, %v423
    %v561 = vpack.c.bf16 %v279, %v278
    %v562 = vpack.c.bf16 %v371, %v368
    %v563 = vpack.c.bf16 %v432, %v429
    %v564 = vpack.c.bf16 %v281, %v280
    %v565 = vpack.c.bf16 %v532, %v374
    %v566 = vpack.c.bf16 %v540, %v435
    %s567 = scalar_lea.vmem [#allocation5], 192
    %v568 = vld [vmem:[%s567] sm:$0xf]
    %v569 = vld [vmem:[%s567 + $0x4] sm:$0xf]
    %v570 = vld [vmem:[%s567 + $0x8] sm:$0xf]
    %v571 = vld [vmem:[%s567 + $0xc] sm:$0xf]
    %v572 = vld [vmem:[%s567 + $0x10] sm:$0xf]
    %v573 = vld [vmem:[%s567 + $0x14] sm:$0xf]
    %v574 = vld [vmem:[%s567 + $0x18] sm:$0xf]
    %v575 = vld [vmem:[%s567 + $0x1c] sm:$0xf]
    %v576 = vld [vmem:[%s567 + $0x20] sm:$0xf]
    %v577 = vld [vmem:[%s567 + $0x24] sm:$0xf]
    %v578 = vld [vmem:[%s567 + $0x28] sm:$0xf]
    %v579 = vld [vmem:[%s567 + $0x2c] sm:$0xf]
    %v580 = vld [vmem:[%s567 + $0x30] sm:$0xf]
    %v581 = vld [vmem:[%s567 + $0x34] sm:$0xf]
    %v582 = vld [vmem:[%s567 + $0x38] sm:$0xf]
    %v583 = vld [vmem:[%s567 + $0x3c] sm:$0xf]
    %v584 = vld [vmem:[%s567 + $0x40] sm:$0xf]
    %v585 = vld [vmem:[%s567 + $0x44] sm:$0xf]
    %v586 = vld [vmem:[%s567 + $0x48] sm:$0xf]
    %v587 = vld [vmem:[%s567 + $0x4c] sm:$0xf]
    %v588 = vld [vmem:[%s567 + $0x50] sm:$0xf]
    %v589 = vld [vmem:[%s567 + $0x54] sm:$0xf]
    %v590 = vld [vmem:[%s567 + $0x58] sm:$0xf]
    %v591 = vld [vmem:[%s567 + $0x5c] sm:$0xf]
    %v592 = vld [vmem:[%s567 + $0x60] sm:$0xf]
    %v593 = vld [vmem:[%s567 + $0x64] sm:$0xf]
    %v594 = vld [vmem:[%s567 + $0x68] sm:$0xf]
    %v595 = vld [vmem:[%s567 + $0x6c] sm:$0xf]
    %v596 = vld [vmem:[%s567 + $0x70] sm:$0xf]
    %v597 = vld [vmem:[%s567 + $0x74] sm:$0xf]
    %v598 = vld [vmem:[%s567 + $0x78] sm:$0xf]
    %v599 = vld [vmem:[%s567 + $0x7c] sm:$0xf]
    %v600 = vld [vmem:[%s567 + $0x80] sm:$0xf]
    %v601 = vld [vmem:[%s567 + $0x84] sm:$0xf]
    %v602 = vld [vmem:[%s567 + $0x88] sm:$0xf]
    %v603 = vld [vmem:[%s567 + $0x8c] sm:$0xf]
    %v604 = vld [vmem:[%s567 + $0x90] sm:$0xf]
    %v605 = vld [vmem:[%s567 + $0x94] sm:$0xf]
    %v606 = vld [vmem:[%s567 + $0x98] sm:$0xf]
    %v607 = vld [vmem:[%s567 + $0x9c] sm:$0xf]
    %v608 = vld [vmem:[%s567 + $0xa0] sm:$0xf]
    %v609 = vld [vmem:[%s567 + $0xa4] sm:$0xf]
    %v610 = vld [vmem:[%s567 + $0xa8] sm:$0xf]
    %v611 = vld [vmem:[%s567 + $0xac] sm:$0xf]
    %v612 = vld [vmem:[%s567 + $0xb0] sm:$0xf]
    %v613 = vld [vmem:[%s567 + $0xb4] sm:$0xf]
    %v614 = vld [vmem:[%s567 + $0xb8] sm:$0xf]
    %v615 = vld [vmem:[%s567 + $0xbc] sm:$0xf]
    %v664 = vunpack.c.l.b16 %v568
    %v665 = vunpack.c.l.b16 %v569
    %v666 = vunpack.c.l.b16 %v570
    %v667 = vunpack.c.l.b16 %v571
    %v668 = vunpack.c.l.b16 %v572
    %v669 = vunpack.c.l.b16 %v573
    %v670 = vunpack.c.l.b16 %v574
    %v671 = vunpack.c.l.b16 %v575
    %v672 = vunpack.c.l.b16 %v576
    %v673 = vunpack.c.l.b16 %v577
    %v674 = vunpack.c.l.b16 %v578
    %v675 = vunpack.c.l.b16 %v579
    %v676 = vunpack.c.l.b16 %v580
    %v677 = vunpack.c.l.b16 %v581
    %v678 = vunpack.c.l.b16 %v582
    %v679 = vunpack.c.l.b16 %v583
    %v680 = vunpack.c.l.b16 %v584
    %v681 = vunpack.c.l.b16 %v585
    %v682 = vunpack.c.l.b16 %v586
    %v683 = vunpack.c.l.b16 %v587
    %v684 = vunpack.c.l.b16 %v588
    %v685 = vunpack.c.l.b16 %v589
    %v686 = vunpack.c.l.b16 %v590
    %v687 = vunpack.c.l.b16 %v591
    %v688 = vunpack.c.l.b16 %v592
    %v689 = vunpack.c.l.b16 %v593
    %v690 = vunpack.c.l.b16 %v594
    %v691 = vunpack.c.l.b16 %v595
    %v692 = vunpack.c.l.b16 %v596
    %v693 = vunpack.c.l.b16 %v597
    %v694 = vunpack.c.l.b16 %v598
    %v695 = vunpack.c.l.b16 %v599
    %v696 = vunpack.c.l.b16 %v600
    %v697 = vunpack.c.l.b16 %v601
    %v698 = vunpack.c.l.b16 %v602
    %v699 = vunpack.c.l.b16 %v603
    %v700 = vunpack.c.l.b16 %v604
    %v701 = vunpack.c.l.b16 %v605
    %v702 = vunpack.c.l.b16 %v606
    %v703 = vunpack.c.l.b16 %v607
    %v704 = vunpack.c.l.b16 %v608
    %v705 = vunpack.c.l.b16 %v609
    %v706 = vunpack.c.l.b16 %v610
    %v707 = vunpack.c.l.b16 %v611
    %v708 = vunpack.c.l.b16 %v612
    %v709 = vunpack.c.l.b16 %v613
    %v710 = vunpack.c.l.b16 %v614
    %v711 = vunpack.c.l.b16 %v615
    %v712 = vpack.c.b16 %v665, %v664
    %v713 = vpack.c.b16 %v667, %v666
    %v714 = vpack.c.b16 %v669, %v668
    %v715 = vpack.c.b16 %v671, %v670
    %v716 = vpack.c.b16 %v673, %v672
    %v717 = vpack.c.b16 %v675, %v674
    %v718 = vpack.c.b16 %v677, %v676
    %v719 = vpack.c.b16 %v679, %v678
    %v720 = vpack.c.b16 %v681, %v680
    %v721 = vpack.c.b16 %v683, %v682
    %v722 = vpack.c.b16 %v685, %v684
    %v723 = vpack.c.b16 %v687, %v686
    %v724 = vpack.c.b16 %v689, %v688
    %v725 = vpack.c.b16 %v691, %v690
    %v726 = vpack.c.b16 %v693, %v692
    %v727 = vpack.c.b16 %v695, %v694
    %v728 = vpack.c.b16 %v697, %v696
    %v729 = vpack.c.b16 %v699, %v698
    %v730 = vpack.c.b16 %v701, %v700
    %v731 = vpack.c.b16 %v703, %v702
    %v732 = vpack.c.b16 %v705, %v704
    %v733 = vpack.c.b16 %v707, %v706
    %v734 = vpack.c.b16 %v709, %v708
    %v735 = vpack.c.b16 %v711, %v710
    %760 = vmatpush.bf16.msra.mxu0 %v719
    %761 = vmatpush.bf16.msra.mxu0 %v718
    %762 = vmatpush.bf16.msra.mxu0 %v717
    %763 = vmatpush.bf16.msra.mxu0 %v716
    %764 = vmatpush.bf16.msra.mxu0 %v715
    %765 = vmatpush.bf16.msra.mxu0 %v714
    %766 = vmatpush.bf16.msra.mxu0 %v713
    %767 = vmatpush.bf16.msra.mxu0 %v712
    %768 = vmatmul.bf16.gmra.mxu0 %v543
    %v769 = vpop.f32.mrf.mxu0
    %v770 = vadd.f32 0.0, %v769
    %v771 = vpop.f32.mrf.mxu0
    %v772 = vadd.f32 0.0, %v771
    %773 = vmatmul.bf16.gmra.mxu0 %v546
    %v774 = vpop.f32.mrf.mxu0
    %v775 = vadd.f32 0.0, %v774
    %v776 = vpop.f32.mrf.mxu0
    %v777 = vadd.f32 0.0, %v776
    %778 = vmatmul.bf16.gmra.mxu0 %v549
    %v779 = vpop.f32.mrf.mxu0
    %v780 = vadd.f32 0.0, %v779
    %v781 = vpop.f32.mrf.mxu0
    %v782 = vadd.f32 0.0, %v781
    %783 = vmatmul.bf16.gmra.mxu0 %v552
    %v784 = vpop.f32.mrf.mxu0
    %v785 = vadd.f32 0.0, %v784
    %v786 = vpop.f32.mrf.mxu0
    %v787 = vadd.f32 0.0, %v786
    %788 = vmatmul.bf16.gmra.mxu0 %v555
    %v789 = vpop.f32.mrf.mxu0
    %v790 = vadd.f32 0.0, %v789
    %v791 = vpop.f32.mrf.mxu0
    %v792 = vadd.f32 0.0, %v791
    %793 = vmatmul.bf16.gmra.mxu0 %v558
    %v794 = vpop.f32.mrf.mxu0
    %v795 = vadd.f32 0.0, %v794
    %v796 = vpop.f32.mrf.mxu0
    %v797 = vadd.f32 0.0, %v796
    %798 = vmatmul.bf16.gmra.mxu0 %v561
    %v799 = vpop.f32.mrf.mxu0
    %v800 = vadd.f32 0.0, %v799
    %v801 = vpop.f32.mrf.mxu0
    %v802 = vadd.f32 0.0, %v801
    %803 = vmatmul.bf16.gmra.mxu0 %v564
    %v804 = vpop.f32.mrf.mxu0
    %v805 = vadd.f32 0.0, %v804
    %v806 = vpop.f32.mrf.mxu0
    %v807 = vadd.f32 0.0, %v806
    %808 = vdwg.mxu0
    %809 = vmatpush.bf16.msra.mxu0 %v727
    %810 = vmatpush.bf16.msra.mxu0 %v726
    %811 = vmatpush.bf16.msra.mxu0 %v725
    %812 = vmatpush.bf16.msra.mxu0 %v724
    %813 = vmatpush.bf16.msra.mxu0 %v723
    %814 = vmatpush.bf16.msra.mxu0 %v722
    %815 = vmatpush.bf16.msra.mxu0 %v721
    %816 = vmatpush.bf16.msra.mxu0 %v720
    %817 = vmatmul.bf16.gmra.mxu0 %v544
    %v818 = vpop.f32.mrf.mxu0
    %v819 = vadd.f32 %v770, %v818
    %v820 = vpop.f32.mrf.mxu0
    %v821 = vadd.f32 %v772, %v820
    %822 = vmatmul.bf16.gmra.mxu0 %v547
    %v823 = vpop.f32.mrf.mxu0
    %v824 = vadd.f32 %v775, %v823
    %v825 = vpop.f32.mrf.mxu0
    %v826 = vadd.f32 %v777, %v825
    %827 = vmatmul.bf16.gmra.mxu0 %v550
    %v828 = vpop.f32.mrf.mxu0
    %v829 = vadd.f32 %v780, %v828
    %v830 = vpop.f32.mrf.mxu0
    %v831 = vadd.f32 %v782, %v830
    %832 = vmatmul.bf16.gmra.mxu0 %v553
    %v833 = vpop.f32.mrf.mxu0
    %v834 = vadd.f32 %v785, %v833
    %v835 = vpop.f32.mrf.mxu0
    %v836 = vadd.f32 %v787, %v835
    %837 = vmatmul.bf16.gmra.mxu0 %v556
    %v838 = vpop.f32.mrf.mxu0
    %v839 = vadd.f32 %v790, %v838
    %v840 = vpop.f32.mrf.mxu0
    %v841 = vadd.f32 %v792, %v840
    %842 = vmatmul.bf16.gmra.mxu0 %v559
    %v843 = vpop.f32.mrf.mxu0
    %v844 = vadd.f32 %v795, %v843
    %v845 = vpop.f32.mrf.mxu0
    %v846 = vadd.f32 %v797, %v845
    %847 = vmatmul.bf16.gmra.mxu0 %v562
    %v848 = vpop.f32.mrf.mxu0
    %v849 = vadd.f32 %v800, %v848
    %v850 = vpop.f32.mrf.mxu0
    %v851 = vadd.f32 %v802, %v850
    %852 = vmatmul.bf16.gmra.mxu0 %v565
    %v853 = vpop.f32.mrf.mxu0
    %v854 = vadd.f32 %v805, %v853
    %v855 = vpop.f32.mrf.mxu0
    %v856 = vadd.f32 %v807, %v855
    %857 = vdwg.mxu0
    %858 = vmatpush.bf16.msra.mxu0 %v735
    %859 = vmatpush.bf16.msra.mxu0 %v734
    %860 = vmatpush.bf16.msra.mxu0 %v733
    %861 = vmatpush.bf16.msra.mxu0 %v732
    %862 = vmatpush.bf16.msra.mxu0 %v731
    %863 = vmatpush.bf16.msra.mxu0 %v730
    %864 = vmatpush.bf16.msra.mxu0 %v729
    %865 = vmatpush.bf16.msra.mxu0 %v728
    %866 = vmatmul.bf16.gmra.mxu0 %v545
    %v867 = vpop.f32.mrf.mxu0
    %v868 = vadd.f32 %v819, %v867
    %v869 = vpop.f32.mrf.mxu0
    %v870 = vadd.f32 %v821, %v869
    %871 = vmatmul.bf16.gmra.mxu0 %v548
    %v872 = vpop.f32.mrf.mxu0
    %v873 = vadd.f32 %v824, %v872
    %v874 = vpop.f32.mrf.mxu0
    %v875 = vadd.f32 %v826, %v874
    %876 = vmatmul.bf16.gmra.mxu0 %v551
    %v877 = vpop.f32.mrf.mxu0
    %v878 = vadd.f32 %v829, %v877
    %v879 = vpop.f32.mrf.mxu0
    %v880 = vadd.f32 %v831, %v879
    %881 = vmatmul.bf16.gmra.mxu0 %v554
    %v882 = vpop.f32.mrf.mxu0
    %v883 = vadd.f32 %v834, %v882
    %v884 = vpop.f32.mrf.mxu0
    %v885 = vadd.f32 %v836, %v884
    %886 = vmatmul.bf16.gmra.mxu0 %v557
    %v887 = vpop.f32.mrf.mxu0
    %v888 = vadd.f32 %v839, %v887
    %v889 = vpop.f32.mrf.mxu0
    %v890 = vadd.f32 %v841, %v889
    %891 = vmatmul.bf16.gmra.mxu0 %v560
    %v892 = vpop.f32.mrf.mxu0
    %v893 = vadd.f32 %v844, %v892
    %v894 = vpop.f32.mrf.mxu0
    %v895 = vadd.f32 %v846, %v894
    %896 = vmatmul.bf16.gmra.mxu0 %v563
    %v897 = vpop.f32.mrf.mxu0
    %v898 = vadd.f32 %v849, %v897
    %v899 = vpop.f32.mrf.mxu0
    %v900 = vadd.f32 %v851, %v899
    %901 = vmatmul.bf16.gmra.mxu0 %v566
    %v902 = vpop.f32.mrf.mxu0
    %v903 = vadd.f32 %v854, %v902
    %v904 = vpop.f32.mrf.mxu0
    %v905 = vadd.f32 %v856, %v904
    %906 = vdwg.mxu0
    %v955 = vunpack.c.l.b16 %v475
    %v956 = vunpack.c.l.b16 %v476
    %v957 = vunpack.c.l.b16 %v477
    %v958 = vunpack.c.l.b16 %v478
    %v959 = vunpack.c.l.b16 %v479
    %v960 = vunpack.c.l.b16 %v480
    %v961 = vunpack.c.l.b16 %v481
    %v962 = vunpack.c.l.b16 %v482
    %v963 = vunpack.c.l.b16 %v483
    %v964 = vunpack.c.l.b16 %v484
    %v965 = vunpack.c.l.b16 %v485
    %v966 = vunpack.c.l.b16 %v486
    %v967 = vunpack.c.l.b16 %v487
    %v968 = vunpack.c.l.b16 %v488
    %v969 = vunpack.c.l.b16 %v489
    %v970 = vunpack.c.l.b16 %v490
    %v971 = vunpack.c.l.b16 %v491
    %v972 = vunpack.c.l.b16 %v492
    %v973 = vunpack.c.l.b16 %v493
    %v974 = vunpack.c.l.b16 %v494
    %v975 = vunpack.c.l.b16 %v495
    %v976 = vunpack.c.l.b16 %v496
    %v977 = vunpack.c.l.b16 %v497
    %v978 = vunpack.c.l.b16 %v498
    %v979 = vunpack.c.l.b16 %v499
    %v980 = vunpack.c.l.b16 %v500
    %v981 = vunpack.c.l.b16 %v501
    %v982 = vunpack.c.l.b16 %v502
    %v983 = vunpack.c.l.b16 %v503
    %v984 = vunpack.c.l.b16 %v504
    %v985 = vunpack.c.l.b16 %v505
    %v986 = vunpack.c.l.b16 %v506
    %v987 = vunpack.c.l.b16 %v507
    %v988 = vunpack.c.l.b16 %v508
    %v989 = vunpack.c.l.b16 %v509
    %v990 = vunpack.c.l.b16 %v510
    %v991 = vunpack.c.l.b16 %v511
    %v992 = vunpack.c.l.b16 %v512
    %v993 = vunpack.c.l.b16 %v513
    %v994 = vunpack.c.l.b16 %v514
    %v995 = vunpack.c.l.b16 %v515
    %v996 = vunpack.c.l.b16 %v516
    %v997 = vunpack.c.l.b16 %v517
    %v998 = vunpack.c.l.b16 %v518
    %v999 = vunpack.c.l.b16 %v519
    %v1000 = vunpack.c.l.b16 %v520
    %v1001 = vunpack.c.l.b16 %v521
    %v1002 = vunpack.c.l.b16 %v522
    %v1003 = vpack.c.b16 %v956, %v955
    %v1004 = vpack.c.b16 %v958, %v957
    %v1005 = vpack.c.b16 %v960, %v959
    %v1006 = vpack.c.b16 %v962, %v961
    %v1007 = vpack.c.b16 %v964, %v963
    %v1008 = vpack.c.b16 %v966, %v965
    %v1009 = vpack.c.b16 %v968, %v967
    %v1010 = vpack.c.b16 %v970, %v969
    %v1011 = vpack.c.b16 %v972, %v971
    %v1012 = vpack.c.b16 %v974, %v973
    %v1013 = vpack.c.b16 %v976, %v975
    %v1014 = vpack.c.b16 %v978, %v977
    %v1015 = vpack.c.b16 %v980, %v979
    %v1016 = vpack.c.b16 %v982, %v981
    %v1017 = vpack.c.b16 %v984, %v983
    %v1018 = vpack.c.b16 %v986, %v985
    %v1019 = vpack.c.b16 %v988, %v987
    %v1020 = vpack.c.b16 %v990, %v989
    %v1021 = vpack.c.b16 %v992, %v991
    %v1022 = vpack.c.b16 %v994, %v993
    %v1023 = vpack.c.b16 %v996, %v995
    %v1024 = vpack.c.b16 %v998, %v997
    %v1025 = vpack.c.b16 %v1000, %v999
    %v1026 = vpack.c.b16 %v1002, %v1001
    %1051 = vmatpush.bf16.msra.mxu0 %v1010
    %1052 = vmatpush.bf16.msra.mxu0 %v1009
    %1053 = vmatpush.bf16.msra.mxu0 %v1008
    %1054 = vmatpush.bf16.msra.mxu0 %v1007
    %1055 = vmatpush.bf16.msra.mxu0 %v1006
    %1056 = vmatpush.bf16.msra.mxu0 %v1005
    %1057 = vmatpush.bf16.msra.mxu0 %v1004
    %1058 = vmatpush.bf16.msra.mxu0 %v1003
    %1059 = vmatmul.bf16.gmra.mxu0 %v451
    %v1060 = vpop.f32.mrf.mxu0
    %v1061 = vadd.f32 %v868, %v1060
    %v1062 = vpop.f32.mrf.mxu0
    %v1063 = vadd.f32 %v870, %v1062
    %1064 = vmatmul.bf16.gmra.mxu0 %v454
    %v1065 = vpop.f32.mrf.mxu0
    %v1066 = vadd.f32 %v873, %v1065
    %v1067 = vpop.f32.mrf.mxu0
    %v1068 = vadd.f32 %v875, %v1067
    %1069 = vmatmul.bf16.gmra.mxu0 %v457
    %v1070 = vpop.f32.mrf.mxu0
    %v1071 = vadd.f32 %v878, %v1070
    %v1072 = vpop.f32.mrf.mxu0
    %v1073 = vadd.f32 %v880, %v1072
    %1074 = vmatmul.bf16.gmra.mxu0 %v460
    %v1075 = vpop.f32.mrf.mxu0
    %v1076 = vadd.f32 %v883, %v1075
    %v1077 = vpop.f32.mrf.mxu0
    %v1078 = vadd.f32 %v885, %v1077
    %1079 = vmatmul.bf16.gmra.mxu0 %v463
    %v1080 = vpop.f32.mrf.mxu0
    %v1081 = vadd.f32 %v888, %v1080
    %v1082 = vpop.f32.mrf.mxu0
    %v1083 = vadd.f32 %v890, %v1082
    %1084 = vmatmul.bf16.gmra.mxu0 %v466
    %v1085 = vpop.f32.mrf.mxu0
    %v1086 = vadd.f32 %v893, %v1085
    %v1087 = vpop.f32.mrf.mxu0
    %v1088 = vadd.f32 %v895, %v1087
    %1089 = vmatmul.bf16.gmra.mxu0 %v469
    %v1090 = vpop.f32.mrf.mxu0
    %v1091 = vadd.f32 %v898, %v1090
    %v1092 = vpop.f32.mrf.mxu0
    %v1093 = vadd.f32 %v900, %v1092
    %1094 = vmatmul.bf16.gmra.mxu0 %v472
    %v1095 = vpop.f32.mrf.mxu0
    %v1096 = vadd.f32 %v903, %v1095
    %v1097 = vpop.f32.mrf.mxu0
    %v1098 = vadd.f32 %v905, %v1097
    %1099 = vdwg.mxu0
    %1100 = vmatpush.bf16.msra.mxu0 %v1018
    %1101 = vmatpush.bf16.msra.mxu0 %v1017
    %1102 = vmatpush.bf16.msra.mxu0 %v1016
    %1103 = vmatpush.bf16.msra.mxu0 %v1015
    %1104 = vmatpush.bf16.msra.mxu0 %v1014
    %1105 = vmatpush.bf16.msra.mxu0 %v1013
    %1106 = vmatpush.bf16.msra.mxu0 %v1012
    %1107 = vmatpush.bf16.msra.mxu0 %v1011
    %1108 = vmatmul.bf16.gmra.mxu0 %v452
    %v1109 = vpop.f32.mrf.mxu0
    %v1110 = vadd.f32 %v1061, %v1109
    %v1111 = vpop.f32.mrf.mxu0
    %v1112 = vadd.f32 %v1063, %v1111
    %1113 = vmatmul.bf16.gmra.mxu0 %v455
    %v1114 = vpop.f32.mrf.mxu0
    %v1115 = vadd.f32 %v1066, %v1114
    %v1116 = vpop.f32.mrf.mxu0
    %v1117 = vadd.f32 %v1068, %v1116
    %1118 = vmatmul.bf16.gmra.mxu0 %v458
    %v1119 = vpop.f32.mrf.mxu0
    %v1120 = vadd.f32 %v1071, %v1119
    %v1121 = vpop.f32.mrf.mxu0
    %v1122 = vadd.f32 %v1073, %v1121
    %1123 = vmatmul.bf16.gmra.mxu0 %v461
    %v1124 = vpop.f32.mrf.mxu0
    %v1125 = vadd.f32 %v1076, %v1124
    %v1126 = vpop.f32.mrf.mxu0
    %v1127 = vadd.f32 %v1078, %v1126
    %1128 = vmatmul.bf16.gmra.mxu0 %v464
    %v1129 = vpop.f32.mrf.mxu0
    %v1130 = vadd.f32 %v1081, %v1129
    %v1131 = vpop.f32.mrf.mxu0
    %v1132 = vadd.f32 %v1083, %v1131
    %1133 = vmatmul.bf16.gmra.mxu0 %v467
    %v1134 = vpop.f32.mrf.mxu0
    %v1135 = vadd.f32 %v1086, %v1134
    %v1136 = vpop.f32.mrf.mxu0
    %v1137 = vadd.f32 %v1088, %v1136
    %1138 = vmatmul.bf16.gmra.mxu0 %v470
    %v1139 = vpop.f32.mrf.mxu0
    %v1140 = vadd.f32 %v1091, %v1139
    %v1141 = vpop.f32.mrf.mxu0
    %v1142 = vadd.f32 %v1093, %v1141
    %1143 = vmatmul.bf16.gmra.mxu0 %v473
    %v1144 = vpop.f32.mrf.mxu0
    %v1145 = vadd.f32 %v1096, %v1144
    %v1146 = vpop.f32.mrf.mxu0
    %v1147 = vadd.f32 %v1098, %v1146
    %1148 = vdwg.mxu0
    %1149 = vmatpush.bf16.msra.mxu0 %v1026
    %1150 = vmatpush.bf16.msra.mxu0 %v1025
    %1151 = vmatpush.bf16.msra.mxu0 %v1024
    %1152 = vmatpush.bf16.msra.mxu0 %v1023
    %1153 = vmatpush.bf16.msra.mxu0 %v1022
    %1154 = vmatpush.bf16.msra.mxu0 %v1021
    %1155 = vmatpush.bf16.msra.mxu0 %v1020
    %1156 = vmatpush.bf16.msra.mxu0 %v1019
    %1157 = vmatmul.bf16.gmra.mxu0 %v453
    %v1158 = vpop.f32.mrf.mxu0
    %v1159 = vadd.f32 %v1110, %v1158
    %v1160 = vpop.f32.mrf.mxu0
    %v1161 = vadd.f32 %v1112, %v1160
    %1162 = vmatmul.bf16.gmra.mxu0 %v456
    %v1163 = vpop.f32.mrf.mxu0
    %v1164 = vadd.f32 %v1115, %v1163
    %v1165 = vpop.f32.mrf.mxu0
    %v1166 = vadd.f32 %v1117, %v1165
    %1167 = vmatmul.bf16.gmra.mxu0 %v459
    %v1168 = vpop.f32.mrf.mxu0
    %v1169 = vadd.f32 %v1120, %v1168
    %v1170 = vpop.f32.mrf.mxu0
    %v1171 = vadd.f32 %v1122, %v1170
    %1172 = vmatmul.bf16.gmra.mxu0 %v462
    %v1173 = vpop.f32.mrf.mxu0
    %v1174 = vadd.f32 %v1125, %v1173
    %v1175 = vpop.f32.mrf.mxu0
    %v1176 = vadd.f32 %v1127, %v1175
    %1177 = vmatmul.bf16.gmra.mxu0 %v465
    %v1178 = vpop.f32.mrf.mxu0
    %v1179 = vadd.f32 %v1130, %v1178
    %v1180 = vpop.f32.mrf.mxu0
    %v1181 = vadd.f32 %v1132, %v1180
    %1182 = vmatmul.bf16.gmra.mxu0 %v468
    %v1183 = vpop.f32.mrf.mxu0
    %v1184 = vadd.f32 %v1135, %v1183
    %v1185 = vpop.f32.mrf.mxu0
    %v1186 = vadd.f32 %v1137, %v1185
    %1187 = vmatmul.bf16.gmra.mxu0 %v471
    %v1188 = vpop.f32.mrf.mxu0
    %v1189 = vadd.f32 %v1140, %v1188
    %v1190 = vpop.f32.mrf.mxu0
    %v1191 = vadd.f32 %v1142, %v1190
    %1192 = vmatmul.bf16.gmra.mxu0 %v474
    %v1193 = vpop.f32.mrf.mxu0
    %v1194 = vadd.f32 %v1145, %v1193
    %v1195 = vpop.f32.mrf.mxu0
    %v1196 = vadd.f32 %v1147, %v1195
    %1197 = vdwg.mxu0
    %v1198 = vpack.c.bf16 %v265, %v273
    %v1199 = vpack.c.bf16 %v332, %v529
    %v1200 = vpack.c.bf16 %v393, %v537
    %v1201 = vpack.c.bf16 %v265, %v281
    %v1202 = vpack.c.bf16 %v332, %v532
    %v1203 = vpack.c.bf16 %v393, %v540
    %s1204 = scalar_lea.vmem [#allocation5], 384
    %v1205 = vld [vmem:[%s1204] sm:$0xf]
    %v1206 = vld [vmem:[%s1204 + $0x4] sm:$0xf]
    %v1207 = vld [vmem:[%s1204 + $0x8] sm:$0xf]
    %v1208 = vld [vmem:[%s1204 + $0xc] sm:$0xf]
    %v1209 = vld [vmem:[%s1204 + $0x10] sm:$0xf]
    %v1210 = vld [vmem:[%s1204 + $0x14] sm:$0xf]
    %v1211 = vld [vmem:[%s1204 + $0x18] sm:$0xf]
    %v1212 = vld [vmem:[%s1204 + $0x1c] sm:$0xf]
    %v1213 = vld [vmem:[%s1204 + $0x20] sm:$0xf]
    %v1214 = vld [vmem:[%s1204 + $0x24] sm:$0xf]
    %v1215 = vld [vmem:[%s1204 + $0x28] sm:$0xf]
    %v1216 = vld [vmem:[%s1204 + $0x2c] sm:$0xf]
    %v1217 = vld [vmem:[%s1204 + $0x30] sm:$0xf]
    %v1218 = vld [vmem:[%s1204 + $0x34] sm:$0xf]
    %v1219 = vld [vmem:[%s1204 + $0x38] sm:$0xf]
    %v1220 = vld [vmem:[%s1204 + $0x3c] sm:$0xf]
    %v1221 = vld [vmem:[%s1204 + $0x40] sm:$0xf]
    %v1222 = vld [vmem:[%s1204 + $0x44] sm:$0xf]
    %v1223 = vld [vmem:[%s1204 + $0x48] sm:$0xf]
    %v1224 = vld [vmem:[%s1204 + $0x4c] sm:$0xf]
    %v1225 = vld [vmem:[%s1204 + $0x50] sm:$0xf]
    %v1226 = vld [vmem:[%s1204 + $0x54] sm:$0xf]
    %v1227 = vld [vmem:[%s1204 + $0x58] sm:$0xf]
    %v1228 = vld [vmem:[%s1204 + $0x5c] sm:$0xf]
    %v1229 = vld [vmem:[%s1204 + $0x60] sm:$0xf]
    %v1230 = vld [vmem:[%s1204 + $0x64] sm:$0xf]
    %v1231 = vld [vmem:[%s1204 + $0x68] sm:$0xf]
    %v1232 = vld [vmem:[%s1204 + $0x6c] sm:$0xf]
    %v1233 = vld [vmem:[%s1204 + $0x70] sm:$0xf]
    %v1234 = vld [vmem:[%s1204 + $0x74] sm:$0xf]
    %v1235 = vld [vmem:[%s1204 + $0x78] sm:$0xf]
    %v1236 = vld [vmem:[%s1204 + $0x7c] sm:$0xf]
    %v1237 = vld [vmem:[%s1204 + $0x80] sm:$0xf]
    %v1238 = vld [vmem:[%s1204 + $0x84] sm:$0xf]
    %v1239 = vld [vmem:[%s1204 + $0x88] sm:$0xf]
    %v1240 = vld [vmem:[%s1204 + $0x8c] sm:$0xf]
    %v1241 = vld [vmem:[%s1204 + $0x90] sm:$0xf]
    %v1242 = vld [vmem:[%s1204 + $0x94] sm:$0xf]
    %v1243 = vld [vmem:[%s1204 + $0x98] sm:$0xf]
    %v1244 = vld [vmem:[%s1204 + $0x9c] sm:$0xf]
    %v1245 = vld [vmem:[%s1204 + $0xa0] sm:$0xf]
    %v1246 = vld [vmem:[%s1204 + $0xa4] sm:$0xf]
    %v1247 = vld [vmem:[%s1204 + $0xa8] sm:$0xf]
    %v1248 = vld [vmem:[%s1204 + $0xac] sm:$0xf]
    %v1249 = vld [vmem:[%s1204 + $0xb0] sm:$0xf]
    %v1250 = vld [vmem:[%s1204 + $0xb4] sm:$0xf]
    %v1251 = vld [vmem:[%s1204 + $0xb8] sm:$0xf]
    %v1252 = vld [vmem:[%s1204 + $0xbc] sm:$0xf]
    %v1301 = vunpack.c.l.b16 %v1205
    %v1302 = vunpack.c.l.b16 %v1206
    %v1303 = vunpack.c.l.b16 %v1207
    %v1304 = vunpack.c.l.b16 %v1208
    %v1305 = vunpack.c.l.b16 %v1209
    %v1306 = vunpack.c.l.b16 %v1210
    %v1307 = vunpack.c.l.b16 %v1211
    %v1308 = vunpack.c.l.b16 %v1212
    %v1309 = vunpack.c.l.b16 %v1213
    %v1310 = vunpack.c.l.b16 %v1214
    %v1311 = vunpack.c.l.b16 %v1215
    %v1312 = vunpack.c.l.b16 %v1216
    %v1313 = vunpack.c.l.b16 %v1217
    %v1314 = vunpack.c.l.b16 %v1218
    %v1315 = vunpack.c.l.b16 %v1219
    %v1316 = vunpack.c.l.b16 %v1220
    %v1317 = vunpack.c.l.b16 %v1221
    %v1318 = vunpack.c.l.b16 %v1222
    %v1319 = vunpack.c.l.b16 %v1223
    %v1320 = vunpack.c.l.b16 %v1224
    %v1321 = vunpack.c.l.b16 %v1225
    %v1322 = vunpack.c.l.b16 %v1226
    %v1323 = vunpack.c.l.b16 %v1227
    %v1324 = vunpack.c.l.b16 %v1228
    %v1325 = vunpack.c.l.b16 %v1229
    %v1326 = vunpack.c.l.b16 %v1230
    %v1327 = vunpack.c.l.b16 %v1231
    %v1328 = vunpack.c.l.b16 %v1232
    %v1329 = vunpack.c.l.b16 %v1233
    %v1330 = vunpack.c.l.b16 %v1234
    %v1331 = vunpack.c.l.b16 %v1235
    %v1332 = vunpack.c.l.b16 %v1236
    %v1333 = vunpack.c.l.b16 %v1237
    %v1334 = vunpack.c.l.b16 %v1238
    %v1335 = vunpack.c.l.b16 %v1239
    %v1336 = vunpack.c.l.b16 %v1240
    %v1337 = vunpack.c.l.b16 %v1241
    %v1338 = vunpack.c.l.b16 %v1242
    %v1339 = vunpack.c.l.b16 %v1243
    %v1340 = vunpack.c.l.b16 %v1244
    %v1341 = vunpack.c.l.b16 %v1245
    %v1342 = vunpack.c.l.b16 %v1246
    %v1343 = vunpack.c.l.b16 %v1247
    %v1344 = vunpack.c.l.b16 %v1248
    %v1345 = vunpack.c.l.b16 %v1249
    %v1346 = vunpack.c.l.b16 %v1250
    %v1347 = vunpack.c.l.b16 %v1251
    %v1348 = vunpack.c.l.b16 %v1252
    %v1349 = vpack.c.b16 %v1302, %v1301
    %v1350 = vpack.c.b16 %v1304, %v1303
    %v1351 = vpack.c.b16 %v1306, %v1305
    %v1352 = vpack.c.b16 %v1308, %v1307
    %v1353 = vpack.c.b16 %v1310, %v1309
    %v1354 = vpack.c.b16 %v1312, %v1311
    %v1355 = vpack.c.b16 %v1314, %v1313
    %v1356 = vpack.c.b16 %v1316, %v1315
    %v1357 = vpack.c.b16 %v1318, %v1317
    %v1358 = vpack.c.b16 %v1320, %v1319
    %v1359 = vpack.c.b16 %v1322, %v1321
    %v1360 = vpack.c.b16 %v1324, %v1323
    %v1361 = vpack.c.b16 %v1326, %v1325
    %v1362 = vpack.c.b16 %v1328, %v1327
    %v1363 = vpack.c.b16 %v1330, %v1329
    %v1364 = vpack.c.b16 %v1332, %v1331
    %v1365 = vpack.c.b16 %v1334, %v1333
    %v1366 = vpack.c.b16 %v1336, %v1335
    %v1367 = vpack.c.b16 %v1338, %v1337
    %v1368 = vpack.c.b16 %v1340, %v1339
    %v1369 = vpack.c.b16 %v1342, %v1341
    %v1370 = vpack.c.b16 %v1344, %v1343
    %v1371 = vpack.c.b16 %v1346, %v1345
    %v1372 = vpack.c.b16 %v1348, %v1347
    %1397 = vmatpush.bf16.msra.mxu0 %v1356
    %1398 = vmatpush.bf16.msra.mxu0 %v1355
    %1399 = vmatpush.bf16.msra.mxu0 %v1354
    %1400 = vmatpush.bf16.msra.mxu0 %v1353
    %1401 = vmatpush.bf16.msra.mxu0 %v1352
    %1402 = vmatpush.bf16.msra.mxu0 %v1351
    %1403 = vmatpush.bf16.msra.mxu0 %v1350
    %1404 = vmatpush.bf16.msra.mxu0 %v1349
    %1405 = vmatmul.bf16.gmra.mxu0 %v454
    %v1406 = vpop.f32.mrf.mxu0
    %v1407 = vadd.f32 0.0, %v1406
    %v1408 = vpop.f32.mrf.mxu0
    %v1409 = vadd.f32 0.0, %v1408
    %1410 = vmatmul.bf16.gmra.mxu0 %v457
    %v1411 = vpop.f32.mrf.mxu0
    %v1412 = vadd.f32 0.0, %v1411
    %v1413 = vpop.f32.mrf.mxu0
    %v1414 = vadd.f32 0.0, %v1413
    %1415 = vmatmul.bf16.gmra.mxu0 %v460
    %v1416 = vpop.f32.mrf.mxu0
    %v1417 = vadd.f32 0.0, %v1416
    %v1418 = vpop.f32.mrf.mxu0
    %v1419 = vadd.f32 0.0, %v1418
    %1420 = vmatmul.bf16.gmra.mxu0 %v1198
    %v1421 = vpop.f32.mrf.mxu0
    %v1422 = vadd.f32 0.0, %v1421
    %v1423 = vpop.f32.mrf.mxu0
    %v1424 = vadd.f32 0.0, %v1423
    %1425 = vmatmul.bf16.gmra.mxu0 %v466
    %v1426 = vpop.f32.mrf.mxu0
    %v1427 = vadd.f32 0.0, %v1426
    %v1428 = vpop.f32.mrf.mxu0
    %v1429 = vadd.f32 0.0, %v1428
    %1430 = vmatmul.bf16.gmra.mxu0 %v469
    %v1431 = vpop.f32.mrf.mxu0
    %v1432 = vadd.f32 0.0, %v1431
    %v1433 = vpop.f32.mrf.mxu0
    %v1434 = vadd.f32 0.0, %v1433
    %1435 = vmatmul.bf16.gmra.mxu0 %v472
    %v1436 = vpop.f32.mrf.mxu0
    %v1437 = vadd.f32 0.0, %v1436
    %v1438 = vpop.f32.mrf.mxu0
    %v1439 = vadd.f32 0.0, %v1438
    %1440 = vmatmul.bf16.gmra.mxu0 %v1201
    %v1441 = vpop.f32.mrf.mxu0
    %v1442 = vadd.f32 0.0, %v1441
    %v1443 = vpop.f32.mrf.mxu0
    %v1444 = vadd.f32 0.0, %v1443
    %1445 = vdwg.mxu0
    %1446 = vmatpush.bf16.msra.mxu0 %v1364
    %1447 = vmatpush.bf16.msra.mxu0 %v1363
    %1448 = vmatpush.bf16.msra.mxu0 %v1362
    %1449 = vmatpush.bf16.msra.mxu0 %v1361
    %1450 = vmatpush.bf16.msra.mxu0 %v1360
    %1451 = vmatpush.bf16.msra.mxu0 %v1359
    %1452 = vmatpush.bf16.msra.mxu0 %v1358
    %1453 = vmatpush.bf16.msra.mxu0 %v1357
    %1454 = vmatmul.bf16.gmra.mxu0 %v455
    %v1455 = vpop.f32.mrf.mxu0
    %v1456 = vadd.f32 %v1407, %v1455
    %v1457 = vpop.f32.mrf.mxu0
    %v1458 = vadd.f32 %v1409, %v1457
    %1459 = vmatmul.bf16.gmra.mxu0 %v458
    %v1460 = vpop.f32.mrf.mxu0
    %v1461 = vadd.f32 %v1412, %v1460
    %v1462 = vpop.f32.mrf.mxu0
    %v1463 = vadd.f32 %v1414, %v1462
    %1464 = vmatmul.bf16.gmra.mxu0 %v461
    %v1465 = vpop.f32.mrf.mxu0
    %v1466 = vadd.f32 %v1417, %v1465
    %v1467 = vpop.f32.mrf.mxu0
    %v1468 = vadd.f32 %v1419, %v1467
    %1469 = vmatmul.bf16.gmra.mxu0 %v1199
    %v1470 = vpop.f32.mrf.mxu0
    %v1471 = vadd.f32 %v1422, %v1470
    %v1472 = vpop.f32.mrf.mxu0
    %v1473 = vadd.f32 %v1424, %v1472
    %1474 = vmatmul.bf16.gmra.mxu0 %v467
    %v1475 = vpop.f32.mrf.mxu0
    %v1476 = vadd.f32 %v1427, %v1475
    %v1477 = vpop.f32.mrf.mxu0
    %v1478 = vadd.f32 %v1429, %v1477
    %1479 = vmatmul.bf16.gmra.mxu0 %v470
    %v1480 = vpop.f32.mrf.mxu0
    %v1481 = vadd.f32 %v1432, %v1480
    %v1482 = vpop.f32.mrf.mxu0
    %v1483 = vadd.f32 %v1434, %v1482
    %1484 = vmatmul.bf16.gmra.mxu0 %v473
    %v1485 = vpop.f32.mrf.mxu0
    %v1486 = vadd.f32 %v1437, %v1485
    %v1487 = vpop.f32.mrf.mxu0
    %v1488 = vadd.f32 %v1439, %v1487
    %1489 = vmatmul.bf16.gmra.mxu0 %v1202
    %v1490 = vpop.f32.mrf.mxu0
    %v1491 = vadd.f32 %v1442, %v1490
    %v1492 = vpop.f32.mrf.mxu0
    %v1493 = vadd.f32 %v1444, %v1492
    %1494 = vdwg.mxu0
    %1495 = vmatpush.bf16.msra.mxu0 %v1372
    %1496 = vmatpush.bf16.msra.mxu0 %v1371
    %1497 = vmatpush.bf16.msra.mxu0 %v1370
    %1498 = vmatpush.bf16.msra.mxu0 %v1369
    %1499 = vmatpush.bf16.msra.mxu0 %v1368
    %1500 = vmatpush.bf16.msra.mxu0 %v1367
    %1501 = vmatpush.bf16.msra.mxu0 %v1366
    %1502 = vmatpush.bf16.msra.mxu0 %v1365
    %1503 = vmatmul.bf16.gmra.mxu0 %v456
    %v1504 = vpop.f32.mrf.mxu0
    %v1505 = vadd.f32 %v1456, %v1504
    %v1506 = vpop.f32.mrf.mxu0
    %v1507 = vadd.f32 %v1458, %v1506
    %1508 = vmatmul.bf16.gmra.mxu0 %v459
    %v1509 = vpop.f32.mrf.mxu0
    %v1510 = vadd.f32 %v1461, %v1509
    %v1511 = vpop.f32.mrf.mxu0
    %v1512 = vadd.f32 %v1463, %v1511
    %1513 = vmatmul.bf16.gmra.mxu0 %v462
    %v1514 = vpop.f32.mrf.mxu0
    %v1515 = vadd.f32 %v1466, %v1514
    %v1516 = vpop.f32.mrf.mxu0
    %v1517 = vadd.f32 %v1468, %v1516
    %1518 = vmatmul.bf16.gmra.mxu0 %v1200
    %v1519 = vpop.f32.mrf.mxu0
    %v1520 = vadd.f32 %v1471, %v1519
    %v1521 = vpop.f32.mrf.mxu0
    %v1522 = vadd.f32 %v1473, %v1521
    %1523 = vmatmul.bf16.gmra.mxu0 %v468
    %v1524 = vpop.f32.mrf.mxu0
    %v1525 = vadd.f32 %v1476, %v1524
    %v1526 = vpop.f32.mrf.mxu0
    %v1527 = vadd.f32 %v1478, %v1526
    %1528 = vmatmul.bf16.gmra.mxu0 %v471
    %v1529 = vpop.f32.mrf.mxu0
    %v1530 = vadd.f32 %v1481, %v1529
    %v1531 = vpop.f32.mrf.mxu0
    %v1532 = vadd.f32 %v1483, %v1531
    %1533 = vmatmul.bf16.gmra.mxu0 %v474
    %v1534 = vpop.f32.mrf.mxu0
    %v1535 = vadd.f32 %v1486, %v1534
    %v1536 = vpop.f32.mrf.mxu0
    %v1537 = vadd.f32 %v1488, %v1536
    %1538 = vmatmul.bf16.gmra.mxu0 %v1203
    %v1539 = vpop.f32.mrf.mxu0
    %v1540 = vadd.f32 %v1491, %v1539
    %v1541 = vpop.f32.mrf.mxu0
    %v1542 = vadd.f32 %v1493, %v1541
    %1543 = vdwg.mxu0
    %v1544 = vadd.f32 %v1159, %v1505
    %v1545 = vadd.f32 %v1161, %v1507
    %v1546 = vadd.f32 %v1164, %v1510
    %v1547 = vadd.f32 %v1166, %v1512
    %v1548 = vadd.f32 %v1169, %v1515
    %v1549 = vadd.f32 %v1171, %v1517
    %v1550 = vadd.f32 %v1174, %v1520
    %v1551 = vadd.f32 %v1176, %v1522
    %v1552 = vadd.f32 %v1179, %v1525
    %v1553 = vadd.f32 %v1181, %v1527
    %v1554 = vadd.f32 %v1184, %v1530
    %v1555 = vadd.f32 %v1186, %v1532
    %v1556 = vadd.f32 %v1189, %v1535
    %v1557 = vadd.f32 %v1191, %v1537
    %v1558 = vadd.f32 %v1194, %v1540
    %v1559 = vadd.f32 %v1196, %v1542
    %v1561 = vperm.slane %v212, 0
    %v1563 = vadd.f32 %v1544, %v1561
    %v1564 = vadd.f32 %v1545, %v1561
    %v1565 = vadd.f32 %v1546, %v1561
    %v1566 = vadd.f32 %v1547, %v1561
    %v1567 = vadd.f32 %v1548, %v1561
    %v1568 = vadd.f32 %v1549, %v1561
    %v1569 = vadd.f32 %v1550, %v1561
    %v1570 = vadd.f32 %v1551, %v1561
    %v1571 = vadd.f32 %v1552, %v1561
    %v1572 = vadd.f32 %v1553, %v1561
    %v1573 = vadd.f32 %v1554, %v1561
    %v1574 = vadd.f32 %v1555, %v1561
    %v1575 = vadd.f32 %v1556, %v1561
    %v1576 = vadd.f32 %v1557, %v1561
    %v1577 = vadd.f32 %v1558, %v1561
    %v1578 = vadd.f32 %v1559, %v1561
    %v1579 = vmax.f32 %v1563, 0.0
    %v1580 = vmax.f32 %v1564, 0.0
    %v1581 = vmax.f32 %v1565, 0.0
    %v1582 = vmax.f32 %v1566, 0.0
    %v1583 = vmax.f32 %v1567, 0.0
    %v1584 = vmax.f32 %v1568, 0.0
    %v1585 = vmax.f32 %v1569, 0.0
    %v1586 = vmax.f32 %v1570, 0.0
    %v1587 = vmax.f32 %v1571, 0.0
    %v1588 = vmax.f32 %v1572, 0.0
    %v1589 = vmax.f32 %v1573, 0.0
    %v1590 = vmax.f32 %v1574, 0.0
    %v1591 = vmax.f32 %v1575, 0.0
    %v1592 = vmax.f32 %v1576, 0.0
    %v1593 = vmax.f32 %v1577, 0.0
    %v1594 = vmax.f32 %v1578, 0.0
    %v1595 = vld [vmem:[%s4] sm:$0x1]
    %v1612 = vrot.slane %v1579, 7
    %v1613 = vrot.slane %v1580, 7
    %v1614 = vrot.slane %v1581, 7
    %v1615 = vrot.slane %v1582, 7
    %v1616 = vrot.slane %v1583, 7
    %v1617 = vrot.slane %v1584, 7
    %v1618 = vrot.slane %v1585, 7
    %v1619 = vrot.slane %v1586, 7
    %v1620 = vrot.slane %v1587, 7
    %v1621 = vrot.slane %v1588, 7
    %v1622 = vrot.slane %v1589, 7
    %v1623 = vrot.slane %v1590, 7
    %v1624 = vrot.slane %v1591, 7
    %v1625 = vrot.slane %v1592, 7
    %v1626 = vrot.slane %v1593, 7
    %v1627 = vrot.slane %v1594, 7
    %v1644 = vsel %vm264, 0.0, %v1612
    %v1645 = vsel %vm264, 0.0, %v1613
    %v1646 = vsel %vm264, 0.0, %v1614
    %v1647 = vsel %vm264, 0.0, %v1615
    %v1648 = vsel %vm264, 0.0, %v1616
    %v1649 = vsel %vm264, 0.0, %v1617
    %v1650 = vsel %vm264, 0.0, %v1618
    %v1651 = vsel %vm264, 0.0, %v1619
    %v1652 = vsel %vm264, 0.0, %v1620
    %v1653 = vsel %vm264, 0.0, %v1621
    %v1654 = vsel %vm264, 0.0, %v1622
    %v1655 = vsel %vm264, 0.0, %v1623
    %v1656 = vsel %vm264, 0.0, %v1624
    %v1657 = vsel %vm264, 0.0, %v1625
    %v1658 = vsel %vm264, 0.0, %v1626
    %v1659 = vsel %vm264, 0.0, %v1627
    %v1660 = vsel %vm264, %v1612, 0.0
    %v1661 = vsel %vm264, %v1613, 0.0
    %v1662 = vsel %vm264, %v1614, 0.0
    %v1663 = vsel %vm264, %v1615, 0.0
    %v1664 = vsel %vm264, %v1616, 0.0
    %v1665 = vsel %vm264, %v1617, 0.0
    %v1666 = vsel %vm264, %v1618, 0.0
    %v1667 = vsel %vm264, %v1619, 0.0
    %v1668 = vsel %vm264, %v1620, 0.0
    %v1669 = vsel %vm264, %v1621, 0.0
    %v1670 = vsel %vm264, %v1622, 0.0
    %v1671 = vsel %vm264, %v1623, 0.0
    %v1672 = vsel %vm264, %v1624, 0.0
    %v1673 = vsel %vm264, %v1625, 0.0
    %v1674 = vsel %vm264, %v1626, 0.0
    %v1675 = vsel %vm264, %v1627, 0.0
    %v1704 = vrot.slane %v1644, 1
    %v1705 = vrot.slane %v1660, 1
    %v1706 = vsel %vm329, %v1704, %v1705
    %v1707 = vrot.slane %v1645, 1
    %v1708 = vrot.slane %v1661, 1
    %v1709 = vsel %vm329, %v1707, %v1708
    %v1710 = vrot.slane %v1646, 1
    %v1711 = vrot.slane %v1662, 1
    %v1712 = vsel %vm329, %v1710, %v1711
    %v1713 = vrot.slane %v1647, 1
    %v1714 = vrot.slane %v1663, 1
    %v1715 = vsel %vm329, %v1713, %v1714
    %v1716 = vrot.slane %v1648, 1
    %v1717 = vrot.slane %v1664, 1
    %v1718 = vsel %vm329, %v1716, %v1717
    %v1719 = vrot.slane %v1649, 1
    %v1720 = vrot.slane %v1665, 1
    %v1721 = vsel %vm329, %v1719, %v1720
    %v1722 = vrot.slane %v1650, 1
    %v1723 = vrot.slane %v1666, 1
    %v1724 = vsel %vm329, %v1722, %v1723
    %v1725 = vrot.slane %v1652, 1
    %v1726 = vrot.slane %v1668, 1
    %v1727 = vsel %vm329, %v1725, %v1726
    %v1728 = vrot.slane %v1653, 1
    %v1729 = vrot.slane %v1669, 1
    %v1730 = vsel %vm329, %v1728, %v1729
    %v1731 = vrot.slane %v1654, 1
    %v1732 = vrot.slane %v1670, 1
    %v1733 = vsel %vm329, %v1731, %v1732
    %v1734 = vrot.slane %v1655, 1
    %v1735 = vrot.slane %v1671, 1
    %v1736 = vsel %vm329, %v1734, %v1735
    %v1737 = vrot.slane %v1656, 1
    %v1738 = vrot.slane %v1672, 1
    %v1739 = vsel %vm329, %v1737, %v1738
    %v1740 = vrot.slane %v1657, 1
    %v1741 = vrot.slane %v1673, 1
    %v1742 = vsel %vm329, %v1740, %v1741
    %v1743 = vrot.slane %v1658, 1
    %v1744 = vrot.slane %v1674, 1
    %v1745 = vsel %vm329, %v1743, %v1744
    %v1760 = vrot.slane %v1644, 2
    %v1761 = vrot.slane %v1660, 2
    %v1762 = vsel %vm390, %v1760, %v1761
    %v1763 = vrot.slane %v1645, 2
    %v1764 = vrot.slane %v1661, 2
    %v1765 = vsel %vm390, %v1763, %v1764
    %v1766 = vrot.slane %v1646, 2
    %v1767 = vrot.slane %v1662, 2
    %v1768 = vsel %vm390, %v1766, %v1767
    %v1769 = vrot.slane %v1647, 2
    %v1770 = vrot.slane %v1663, 2
    %v1771 = vsel %vm390, %v1769, %v1770
    %v1772 = vrot.slane %v1648, 2
    %v1773 = vrot.slane %v1664, 2
    %v1774 = vsel %vm390, %v1772, %v1773
    %v1775 = vrot.slane %v1649, 2
    %v1776 = vrot.slane %v1665, 2
    %v1777 = vsel %vm390, %v1775, %v1776
    %v1778 = vrot.slane %v1650, 2
    %v1779 = vrot.slane %v1666, 2
    %v1780 = vsel %vm390, %v1778, %v1779
    %v1781 = vrot.slane %v1652, 2
    %v1782 = vrot.slane %v1668, 2
    %v1783 = vsel %vm390, %v1781, %v1782
    %v1784 = vrot.slane %v1653, 2
    %v1785 = vrot.slane %v1669, 2
    %v1786 = vsel %vm390, %v1784, %v1785
    %v1787 = vrot.slane %v1654, 2
    %v1788 = vrot.slane %v1670, 2
    %v1789 = vsel %vm390, %v1787, %v1788
    %v1790 = vrot.slane %v1655, 2
    %v1791 = vrot.slane %v1671, 2
    %v1792 = vsel %vm390, %v1790, %v1791
    %v1793 = vrot.slane %v1656, 2
    %v1794 = vrot.slane %v1672, 2
    %v1795 = vsel %vm390, %v1793, %v1794
    %v1796 = vrot.slane %v1657, 2
    %v1797 = vrot.slane %v1673, 2
    %v1798 = vsel %vm390, %v1796, %v1797
    %v1799 = vrot.slane %v1658, 2
    %v1800 = vrot.slane %v1674, 2
    %v1801 = vsel %vm390, %v1799, %v1800
    %v1816 = vpack.c.bf16 %v1644, %v265
    %v1817 = vpack.c.bf16 %v1706, %v332
    %v1818 = vpack.c.bf16 %v1762, %v393
    %v1819 = vpack.c.bf16 %v1646, %v1645
    %v1820 = vpack.c.bf16 %v1712, %v1709
    %v1821 = vpack.c.bf16 %v1768, %v1765
    %v1822 = vpack.c.bf16 %v1648, %v1647
    %v1823 = vpack.c.bf16 %v1718, %v1715
    %v1824 = vpack.c.bf16 %v1774, %v1771
    %v1825 = vpack.c.bf16 %v1650, %v1649
    %v1826 = vpack.c.bf16 %v1724, %v1721
    %v1827 = vpack.c.bf16 %v1780, %v1777
    %v1828 = vpack.c.bf16 %v1652, %v265
    %v1829 = vpack.c.bf16 %v1727, %v332
    %v1830 = vpack.c.bf16 %v1783, %v393
    %v1831 = vpack.c.bf16 %v1654, %v1653
    %v1832 = vpack.c.bf16 %v1733, %v1730
    %v1833 = vpack.c.bf16 %v1789, %v1786
    %v1834 = vpack.c.bf16 %v1656, %v1655
    %v1835 = vpack.c.bf16 %v1739, %v1736
    %v1836 = vpack.c.bf16 %v1795, %v1792
    %v1837 = vpack.c.bf16 %v1658, %v1657
    %v1838 = vpack.c.bf16 %v1745, %v1742
    %v1839 = vpack.c.bf16 %v1801, %v1798
    %v1840 = vld [vmem:[#allocation7] sm:$0xf]
    %v1841 = vld [vmem:[#allocation7 + $0x4] sm:$0xf]
    %v1842 = vld [vmem:[#allocation7 + $0x8] sm:$0xf]
    %v1843 = vld [vmem:[#allocation7 + $0xc] sm:$0xf]
    %v1844 = vld [vmem:[#allocation7 + $0x10] sm:$0xf]
    %v1845 = vld [vmem:[#allocation7 + $0x14] sm:$0xf]
    %v1846 = vld [vmem:[#allocation7 + $0x18] sm:$0xf]
    %v1847 = vld [vmem:[#allocation7 + $0x1c] sm:$0xf]
    %v1848 = vld [vmem:[#allocation7 + $0x20] sm:$0xf]
    %v1849 = vld [vmem:[#allocation7 + $0x24] sm:$0xf]
    %v1850 = vld [vmem:[#allocation7 + $0x28] sm:$0xf]
    %v1851 = vld [vmem:[#allocation7 + $0x2c] sm:$0xf]
    %v1852 = vld [vmem:[#allocation7 + $0x30] sm:$0xf]
    %v1853 = vld [vmem:[#allocation7 + $0x34] sm:$0xf]
    %v1854 = vld [vmem:[#allocation7 + $0x38] sm:$0xf]
    %v1855 = vld [vmem:[#allocation7 + $0x3c] sm:$0xf]
    %v1856 = vld [vmem:[#allocation7 + $0x40] sm:$0xf]
    %v1857 = vld [vmem:[#allocation7 + $0x44] sm:$0xf]
    %v1858 = vld [vmem:[#allocation7 + $0x48] sm:$0xf]
    %v1859 = vld [vmem:[#allocation7 + $0x4c] sm:$0xf]
    %v1860 = vld [vmem:[#allocation7 + $0x50] sm:$0xf]
    %v1861 = vld [vmem:[#allocation7 + $0x54] sm:$0xf]
    %v1862 = vld [vmem:[#allocation7 + $0x58] sm:$0xf]
    %v1863 = vld [vmem:[#allocation7 + $0x5c] sm:$0xf]
    %v1864 = vld [vmem:[#allocation7 + $0x60] sm:$0xf]
    %v1865 = vld [vmem:[#allocation7 + $0x64] sm:$0xf]
    %v1866 = vld [vmem:[#allocation7 + $0x68] sm:$0xf]
    %v1867 = vld [vmem:[#allocation7 + $0x6c] sm:$0xf]
    %v1868 = vld [vmem:[#allocation7 + $0x70] sm:$0xf]
    %v1869 = vld [vmem:[#allocation7 + $0x74] sm:$0xf]
    %v1870 = vld [vmem:[#allocation7 + $0x78] sm:$0xf]
    %v1871 = vld [vmem:[#allocation7 + $0x7c] sm:$0xf]
    %v1872 = vld [vmem:[#allocation7 + $0x80] sm:$0xf]
    %v1873 = vld [vmem:[#allocation7 + $0x84] sm:$0xf]
    %v1874 = vld [vmem:[#allocation7 + $0x88] sm:$0xf]
    %v1875 = vld [vmem:[#allocation7 + $0x8c] sm:$0xf]
    %v1876 = vld [vmem:[#allocation7 + $0x90] sm:$0xf]
    %v1877 = vld [vmem:[#allocation7 + $0x94] sm:$0xf]
    %v1878 = vld [vmem:[#allocation7 + $0x98] sm:$0xf]
    %v1879 = vld [vmem:[#allocation7 + $0x9c] sm:$0xf]
    %v1880 = vld [vmem:[#allocation7 + $0xa0] sm:$0xf]
    %v1881 = vld [vmem:[#allocation7 + $0xa4] sm:$0xf]
    %v1882 = vld [vmem:[#allocation7 + $0xa8] sm:$0xf]
    %v1883 = vld [vmem:[#allocation7 + $0xac] sm:$0xf]
    %v1884 = vld [vmem:[#allocation7 + $0xb0] sm:$0xf]
    %v1885 = vld [vmem:[#allocation7 + $0xb4] sm:$0xf]
    %v1886 = vld [vmem:[#allocation7 + $0xb8] sm:$0xf]
    %v1887 = vld [vmem:[#allocation7 + $0xbc] sm:$0xf]
    %v1892 = vrot.slane %v1651, 1
    %v1893 = vrot.slane %v1667, 1
    %v1894 = vsel %vm329, %v1892, %v1893
    %v1895 = vrot.slane %v1659, 1
    %v1896 = vrot.slane %v1675, 1
    %v1897 = vsel %vm329, %v1895, %v1896
    %v1900 = vrot.slane %v1651, 2
    %v1901 = vrot.slane %v1667, 2
    %v1902 = vsel %vm390, %v1900, %v1901
    %v1903 = vrot.slane %v1659, 2
    %v1904 = vrot.slane %v1675, 2
    %v1905 = vsel %vm390, %v1903, %v1904
    %v1908 = vpack.c.bf16 %v1645, %v1644
    %v1909 = vpack.c.bf16 %v1709, %v1706
    %v1910 = vpack.c.bf16 %v1765, %v1762
    %v1911 = vpack.c.bf16 %v1647, %v1646
    %v1912 = vpack.c.bf16 %v1715, %v1712
    %v1913 = vpack.c.bf16 %v1771, %v1768
    %v1914 = vpack.c.bf16 %v1649, %v1648
    %v1915 = vpack.c.bf16 %v1721, %v1718
    %v1916 = vpack.c.bf16 %v1777, %v1774
    %v1917 = vpack.c.bf16 %v1651, %v1650
    %v1918 = vpack.c.bf16 %v1894, %v1724
    %v1919 = vpack.c.bf16 %v1902, %v1780
    %v1920 = vpack.c.bf16 %v1653, %v1652
    %v1921 = vpack.c.bf16 %v1730, %v1727
    %v1922 = vpack.c.bf16 %v1786, %v1783
    %v1923 = vpack.c.bf16 %v1655, %v1654
    %v1924 = vpack.c.bf16 %v1736, %v1733
    %v1925 = vpack.c.bf16 %v1792, %v1789
    %v1926 = vpack.c.bf16 %v1657, %v1656
    %v1927 = vpack.c.bf16 %v1742, %v1739
    %v1928 = vpack.c.bf16 %v1798, %v1795
    %v1929 = vpack.c.bf16 %v1659, %v1658
    %v1930 = vpack.c.bf16 %v1897, %v1745
    %v1931 = vpack.c.bf16 %v1905, %v1801
    %s1932 = scalar_lea.vmem [#allocation7], 192
    %v1933 = vld [vmem:[%s1932] sm:$0xf]
    %v1934 = vld [vmem:[%s1932 + $0x4] sm:$0xf]
    %v1935 = vld [vmem:[%s1932 + $0x8] sm:$0xf]
    %v1936 = vld [vmem:[%s1932 + $0xc] sm:$0xf]
    %v1937 = vld [vmem:[%s1932 + $0x10] sm:$0xf]
    %v1938 = vld [vmem:[%s1932 + $0x14] sm:$0xf]
    %v1939 = vld [vmem:[%s1932 + $0x18] sm:$0xf]
    %v1940 = vld [vmem:[%s1932 + $0x1c] sm:$0xf]
    %v1941 = vld [vmem:[%s1932 + $0x20] sm:$0xf]
    %v1942 = vld [vmem:[%s1932 + $0x24] sm:$0xf]
    %v1943 = vld [vmem:[%s1932 + $0x28] sm:$0xf]
    %v1944 = vld [vmem:[%s1932 + $0x2c] sm:$0xf]
    %v1945 = vld [vmem:[%s1932 + $0x30] sm:$0xf]
    %v1946 = vld [vmem:[%s1932 + $0x34] sm:$0xf]
    %v1947 = vld [vmem:[%s1932 + $0x38] sm:$0xf]
    %v1948 = vld [vmem:[%s1932 + $0x3c] sm:$0xf]
    %v1949 = vld [vmem:[%s1932 + $0x40] sm:$0xf]
    %v1950 = vld [vmem:[%s1932 + $0x44] sm:$0xf]
    %v1951 = vld [vmem:[%s1932 + $0x48] sm:$0xf]
    %v1952 = vld [vmem:[%s1932 + $0x4c] sm:$0xf]
    %v1953 = vld [vmem:[%s1932 + $0x50] sm:$0xf]
    %v1954 = vld [vmem:[%s1932 + $0x54] sm:$0xf]
    %v1955 = vld [vmem:[%s1932 + $0x58] sm:$0xf]
    %v1956 = vld [vmem:[%s1932 + $0x5c] sm:$0xf]
    %v1957 = vld [vmem:[%s1932 + $0x60] sm:$0xf]
    %v1958 = vld [vmem:[%s1932 + $0x64] sm:$0xf]
    %v1959 = vld [vmem:[%s1932 + $0x68] sm:$0xf]
    %v1960 = vld [vmem:[%s1932 + $0x6c] sm:$0xf]
    %v1961 = vld [vmem:[%s1932 + $0x70] sm:$0xf]
    %v1962 = vld [vmem:[%s1932 + $0x74] sm:$0xf]
    %v1963 = vld [vmem:[%s1932 + $0x78] sm:$0xf]
    %v1964 = vld [vmem:[%s1932 + $0x7c] sm:$0xf]
    %v1965 = vld [vmem:[%s1932 + $0x80] sm:$0xf]
    %v1966 = vld [vmem:[%s1932 + $0x84] sm:$0xf]
    %v1967 = vld [vmem:[%s1932 + $0x88] sm:$0xf]
    %v1968 = vld [vmem:[%s1932 + $0x8c] sm:$0xf]
    %v1969 = vld [vmem:[%s1932 + $0x90] sm:$0xf]
    %v1970 = vld [vmem:[%s1932 + $0x94] sm:$0xf]
    %v1971 = vld [vmem:[%s1932 + $0x98] sm:$0xf]
    %v1972 = vld [vmem:[%s1932 + $0x9c] sm:$0xf]
    %v1973 = vld [vmem:[%s1932 + $0xa0] sm:$0xf]
    %v1974 = vld [vmem:[%s1932 + $0xa4] sm:$0xf]
    %v1975 = vld [vmem:[%s1932 + $0xa8] sm:$0xf]
    %v1976 = vld [vmem:[%s1932 + $0xac] sm:$0xf]
    %v1977 = vld [vmem:[%s1932 + $0xb0] sm:$0xf]
    %v1978 = vld [vmem:[%s1932 + $0xb4] sm:$0xf]
    %v1979 = vld [vmem:[%s1932 + $0xb8] sm:$0xf]
    %v1980 = vld [vmem:[%s1932 + $0xbc] sm:$0xf]
    %v2029 = vunpack.c.l.b16 %v1933
    %v2030 = vunpack.c.l.b16 %v1934
    %v2031 = vunpack.c.l.b16 %v1935
    %v2032 = vunpack.c.l.b16 %v1936
    %v2033 = vunpack.c.l.b16 %v1937
    %v2034 = vunpack.c.l.b16 %v1938
    %v2035 = vunpack.c.l.b16 %v1939
    %v2036 = vunpack.c.l.b16 %v1940
    %v2037 = vunpack.c.l.b16 %v1941
    %v2038 = vunpack.c.l.b16 %v1942
    %v2039 = vunpack.c.l.b16 %v1943
    %v2040 = vunpack.c.l.b16 %v1944
    %v2041 = vunpack.c.l.b16 %v1945
    %v2042 = vunpack.c.l.b16 %v1946
    %v2043 = vunpack.c.l.b16 %v1947
    %v2044 = vunpack.c.l.b16 %v1948
    %v2045 = vunpack.c.l.b16 %v1949
    %v2046 = vunpack.c.l.b16 %v1950
    %v2047 = vunpack.c.l.b16 %v1951
    %v2048 = vunpack.c.l.b16 %v1952
    %v2049 = vunpack.c.l.b16 %v1953
    %v2050 = vunpack.c.l.b16 %v1954
    %v2051 = vunpack.c.l.b16 %v1955
    %v2052 = vunpack.c.l.b16 %v1956
    %v2053 = vunpack.c.l.b16 %v1957
    %v2054 = vunpack.c.l.b16 %v1958
    %v2055 = vunpack.c.l.b16 %v1959
    %v2056 = vunpack.c.l.b16 %v1960
    %v2057 = vunpack.c.l.b16 %v1961
    %v2058 = vunpack.c.l.b16 %v1962
    %v2059 = vunpack.c.l.b16 %v1963
    %v2060 = vunpack.c.l.b16 %v1964
    %v2061 = vunpack.c.l.b16 %v1965
    %v2062 = vunpack.c.l.b16 %v1966
    %v2063 = vunpack.c.l.b16 %v1967
    %v2064 = vunpack.c.l.b16 %v1968
    %v2065 = vunpack.c.l.b16 %v1969
    %v2066 = vunpack.c.l.b16 %v1970
    %v2067 = vunpack.c.l.b16 %v1971
    %v2068 = vunpack.c.l.b16 %v1972
    %v2069 = vunpack.c.l.b16 %v1973
    %v2070 = vunpack.c.l.b16 %v1974
    %v2071 = vunpack.c.l.b16 %v1975
    %v2072 = vunpack.c.l.b16 %v1976
    %v2073 = vunpack.c.l.b16 %v1977
    %v2074 = vunpack.c.l.b16 %v1978
    %v2075 = vunpack.c.l.b16 %v1979
    %v2076 = vunpack.c.l.b16 %v1980
    %v2077 = vpack.c.b16 %v2030, %v2029
    %v2078 = vpack.c.b16 %v2032, %v2031
    %v2079 = vpack.c.b16 %v2034, %v2033
    %v2080 = vpack.c.b16 %v2036, %v2035
    %v2081 = vpack.c.b16 %v2038, %v2037
    %v2082 = vpack.c.b16 %v2040, %v2039
    %v2083 = vpack.c.b16 %v2042, %v2041
    %v2084 = vpack.c.b16 %v2044, %v2043
    %v2085 = vpack.c.b16 %v2046, %v2045
    %v2086 = vpack.c.b16 %v2048, %v2047
    %v2087 = vpack.c.b16 %v2050, %v2049
    %v2088 = vpack.c.b16 %v2052, %v2051
    %v2089 = vpack.c.b16 %v2054, %v2053
    %v2090 = vpack.c.b16 %v2056, %v2055
    %v2091 = vpack.c.b16 %v2058, %v2057
    %v2092 = vpack.c.b16 %v2060, %v2059
    %v2093 = vpack.c.b16 %v2062, %v2061
    %v2094 = vpack.c.b16 %v2064, %v2063
    %v2095 = vpack.c.b16 %v2066, %v2065
    %v2096 = vpack.c.b16 %v2068, %v2067
    %v2097 = vpack.c.b16 %v2070, %v2069
    %v2098 = vpack.c.b16 %v2072, %v2071
    %v2099 = vpack.c.b16 %v2074, %v2073
    %v2100 = vpack.c.b16 %v2076, %v2075
    %2125 = vmatpush.bf16.msra.mxu0 %v2084
    %2126 = vmatpush.bf16.msra.mxu0 %v2083
    %2127 = vmatpush.bf16.msra.mxu0 %v2082
    %2128 = vmatpush.bf16.msra.mxu0 %v2081
    %2129 = vmatpush.bf16.msra.mxu0 %v2080
    %2130 = vmatpush.bf16.msra.mxu0 %v2079
    %2131 = vmatpush.bf16.msra.mxu0 %v2078
    %2132 = vmatpush.bf16.msra.mxu0 %v2077
    %2133 = vmatmul.bf16.gmra.mxu0 %v1908
    %v2134 = vpop.f32.mrf.mxu0
    %v2135 = vadd.f32 0.0, %v2134
    %v2136 = vpop.f32.mrf.mxu0
    %v2137 = vadd.f32 0.0, %v2136
    %2138 = vmatmul.bf16.gmra.mxu0 %v1911
    %v2139 = vpop.f32.mrf.mxu0
    %v2140 = vadd.f32 0.0, %v2139
    %v2141 = vpop.f32.mrf.mxu0
    %v2142 = vadd.f32 0.0, %v2141
    %2143 = vmatmul.bf16.gmra.mxu0 %v1914
    %v2144 = vpop.f32.mrf.mxu0
    %v2145 = vadd.f32 0.0, %v2144
    %v2146 = vpop.f32.mrf.mxu0
    %v2147 = vadd.f32 0.0, %v2146
    %2148 = vmatmul.bf16.gmra.mxu0 %v1917
    %v2149 = vpop.f32.mrf.mxu0
    %v2150 = vadd.f32 0.0, %v2149
    %v2151 = vpop.f32.mrf.mxu0
    %v2152 = vadd.f32 0.0, %v2151
    %2153 = vmatmul.bf16.gmra.mxu0 %v1920
    %v2154 = vpop.f32.mrf.mxu0
    %v2155 = vadd.f32 0.0, %v2154
    %v2156 = vpop.f32.mrf.mxu0
    %v2157 = vadd.f32 0.0, %v2156
    %2158 = vmatmul.bf16.gmra.mxu0 %v1923
    %v2159 = vpop.f32.mrf.mxu0
    %v2160 = vadd.f32 0.0, %v2159
    %v2161 = vpop.f32.mrf.mxu0
    %v2162 = vadd.f32 0.0, %v2161
    %2163 = vmatmul.bf16.gmra.mxu0 %v1926
    %v2164 = vpop.f32.mrf.mxu0
    %v2165 = vadd.f32 0.0, %v2164
    %v2166 = vpop.f32.mrf.mxu0
    %v2167 = vadd.f32 0.0, %v2166
    %2168 = vmatmul.bf16.gmra.mxu0 %v1929
    %v2169 = vpop.f32.mrf.mxu0
    %v2170 = vadd.f32 0.0, %v2169
    %v2171 = vpop.f32.mrf.mxu0
    %v2172 = vadd.f32 0.0, %v2171
    %2173 = vdwg.mxu0
    %2174 = vmatpush.bf16.msra.mxu0 %v2092
    %2175 = vmatpush.bf16.msra.mxu0 %v2091
    %2176 = vmatpush.bf16.msra.mxu0 %v2090
    %2177 = vmatpush.bf16.msra.mxu0 %v2089
    %2178 = vmatpush.bf16.msra.mxu0 %v2088
    %2179 = vmatpush.bf16.msra.mxu0 %v2087
    %2180 = vmatpush.bf16.msra.mxu0 %v2086
    %2181 = vmatpush.bf16.msra.mxu0 %v2085
    %2182 = vmatmul.bf16.gmra.mxu0 %v1909
    %v2183 = vpop.f32.mrf.mxu0
    %v2184 = vadd.f32 %v2135, %v2183
    %v2185 = vpop.f32.mrf.mxu0
    %v2186 = vadd.f32 %v2137, %v2185
    %2187 = vmatmul.bf16.gmra.mxu0 %v1912
    %v2188 = vpop.f32.mrf.mxu0
    %v2189 = vadd.f32 %v2140, %v2188
    %v2190 = vpop.f32.mrf.mxu0
    %v2191 = vadd.f32 %v2142, %v2190
    %2192 = vmatmul.bf16.gmra.mxu0 %v1915
    %v2193 = vpop.f32.mrf.mxu0
    %v2194 = vadd.f32 %v2145, %v2193
    %v2195 = vpop.f32.mrf.mxu0
    %v2196 = vadd.f32 %v2147, %v2195
    %2197 = vmatmul.bf16.gmra.mxu0 %v1918
    %v2198 = vpop.f32.mrf.mxu0
    %v2199 = vadd.f32 %v2150, %v2198
    %v2200 = vpop.f32.mrf.mxu0
    %v2201 = vadd.f32 %v2152, %v2200
    %2202 = vmatmul.bf16.gmra.mxu0 %v1921
    %v2203 = vpop.f32.mrf.mxu0
    %v2204 = vadd.f32 %v2155, %v2203
    %v2205 = vpop.f32.mrf.mxu0
    %v2206 = vadd.f32 %v2157, %v2205
    %2207 = vmatmul.bf16.gmra.mxu0 %v1924
    %v2208 = vpop.f32.mrf.mxu0
    %v2209 = vadd.f32 %v2160, %v2208
    %v2210 = vpop.f32.mrf.mxu0
    %v2211 = vadd.f32 %v2162, %v2210
    %2212 = vmatmul.bf16.gmra.mxu0 %v1927
    %v2213 = vpop.f32.mrf.mxu0
    %v2214 = vadd.f32 %v2165, %v2213
    %v2215 = vpop.f32.mrf.mxu0
    %v2216 = vadd.f32 %v2167, %v2215
    %2217 = vmatmul.bf16.gmra.mxu0 %v1930
    %v2218 = vpop.f32.mrf.mxu0
    %v2219 = vadd.f32 %v2170, %v2218
    %v2220 = vpop.f32.mrf.mxu0
    %v2221 = vadd.f32 %v2172, %v2220
    %2222 = vdwg.mxu0
    %2223 = vmatpush.bf16.msra.mxu0 %v2100
    %2224 = vmatpush.bf16.msra.mxu0 %v2099
    %2225 = vmatpush.bf16.msra.mxu0 %v2098
    %2226 = vmatpush.bf16.msra.mxu0 %v2097
    %2227 = vmatpush.bf16.msra.mxu0 %v2096
    %2228 = vmatpush.bf16.msra.mxu0 %v2095
    %2229 = vmatpush.bf16.msra.mxu0 %v2094
    %2230 = vmatpush.bf16.msra.mxu0 %v2093
    %2231 = vmatmul.bf16.gmra.mxu0 %v1910
    %v2232 = vpop.f32.mrf.mxu0
    %v2233 = vadd.f32 %v2184, %v2232
    %v2234 = vpop.f32.mrf.mxu0
    %v2235 = vadd.f32 %v2186, %v2234
    %2236 = vmatmul.bf16.gmra.mxu0 %v1913
    %v2237 = vpop.f32.mrf.mxu0
    %v2238 = vadd.f32 %v2189, %v2237
    %v2239 = vpop.f32.mrf.mxu0
    %v2240 = vadd.f32 %v2191, %v2239
    %2241 = vmatmul.bf16.gmra.mxu0 %v1916
    %v2242 = vpop.f32.mrf.mxu0
    %v2243 = vadd.f32 %v2194, %v2242
    %v2244 = vpop.f32.mrf.mxu0
    %v2245 = vadd.f32 %v2196, %v2244
    %2246 = vmatmul.bf16.gmra.mxu0 %v1919
    %v2247 = vpop.f32.mrf.mxu0
    %v2248 = vadd.f32 %v2199, %v2247
    %v2249 = vpop.f32.mrf.mxu0
    %v2250 = vadd.f32 %v2201, %v2249
    %2251 = vmatmul.bf16.gmra.mxu0 %v1922
    %v2252 = vpop.f32.mrf.mxu0
    %v2253 = vadd.f32 %v2204, %v2252
    %v2254 = vpop.f32.mrf.mxu0
    %v2255 = vadd.f32 %v2206, %v2254
    %2256 = vmatmul.bf16.gmra.mxu0 %v1925
    %v2257 = vpop.f32.mrf.mxu0
    %v2258 = vadd.f32 %v2209, %v2257
    %v2259 = vpop.f32.mrf.mxu0
    %v2260 = vadd.f32 %v2211, %v2259
    %2261 = vmatmul.bf16.gmra.mxu0 %v1928
    %v2262 = vpop.f32.mrf.mxu0
    %v2263 = vadd.f32 %v2214, %v2262
    %v2264 = vpop.f32.mrf.mxu0
    %v2265 = vadd.f32 %v2216, %v2264
    %2266 = vmatmul.bf16.gmra.mxu0 %v1931
    %v2267 = vpop.f32.mrf.mxu0
    %v2268 = vadd.f32 %v2219, %v2267
    %v2269 = vpop.f32.mrf.mxu0
    %v2270 = vadd.f32 %v2221, %v2269
    %2271 = vdwg.mxu0
    %v2320 = vunpack.c.l.b16 %v1840
    %v2321 = vunpack.c.l.b16 %v1841
    %v2322 = vunpack.c.l.b16 %v1842
    %v2323 = vunpack.c.l.b16 %v1843
    %v2324 = vunpack.c.l.b16 %v1844
    %v2325 = vunpack.c.l.b16 %v1845
    %v2326 = vunpack.c.l.b16 %v1846
    %v2327 = vunpack.c.l.b16 %v1847
    %v2328 = vunpack.c.l.b16 %v1848
    %v2329 = vunpack.c.l.b16 %v1849
    %v2330 = vunpack.c.l.b16 %v1850
    %v2331 = vunpack.c.l.b16 %v1851
    %v2332 = vunpack.c.l.b16 %v1852
    %v2333 = vunpack.c.l.b16 %v1853
    %v2334 = vunpack.c.l.b16 %v1854
    %v2335 = vunpack.c.l.b16 %v1855
    %v2336 = vunpack.c.l.b16 %v1856
    %v2337 = vunpack.c.l.b16 %v1857
    %v2338 = vunpack.c.l.b16 %v1858
    %v2339 = vunpack.c.l.b16 %v1859
    %v2340 = vunpack.c.l.b16 %v1860
    %v2341 = vunpack.c.l.b16 %v1861
    %v2342 = vunpack.c.l.b16 %v1862
    %v2343 = vunpack.c.l.b16 %v1863
    %v2344 = vunpack.c.l.b16 %v1864
    %v2345 = vunpack.c.l.b16 %v1865
    %v2346 = vunpack.c.l.b16 %v1866
    %v2347 = vunpack.c.l.b16 %v1867
    %v2348 = vunpack.c.l.b16 %v1868
    %v2349 = vunpack.c.l.b16 %v1869
    %v2350 = vunpack.c.l.b16 %v1870
    %v2351 = vunpack.c.l.b16 %v1871
    %v2352 = vunpack.c.l.b16 %v1872
    %v2353 = vunpack.c.l.b16 %v1873
    %v2354 = vunpack.c.l.b16 %v1874
    %v2355 = vunpack.c.l.b16 %v1875
    %v2356 = vunpack.c.l.b16 %v1876
    %v2357 = vunpack.c.l.b16 %v1877
    %v2358 = vunpack.c.l.b16 %v1878
    %v2359 = vunpack.c.l.b16 %v1879
    %v2360 = vunpack.c.l.b16 %v1880
    %v2361 = vunpack.c.l.b16 %v1881
    %v2362 = vunpack.c.l.b16 %v1882
    %v2363 = vunpack.c.l.b16 %v1883
    %v2364 = vunpack.c.l.b16 %v1884
    %v2365 = vunpack.c.l.b16 %v1885
    %v2366 = vunpack.c.l.b16 %v1886
    %v2367 = vunpack.c.l.b16 %v1887
    %v2368 = vpack.c.b16 %v2321, %v2320
    %v2369 = vpack.c.b16 %v2323, %v2322
    %v2370 = vpack.c.b16 %v2325, %v2324
    %v2371 = vpack.c.b16 %v2327, %v2326
    %v2372 = vpack.c.b16 %v2329, %v2328
    %v2373 = vpack.c.b16 %v2331, %v2330
    %v2374 = vpack.c.b16 %v2333, %v2332
    %v2375 = vpack.c.b16 %v2335, %v2334
    %v2376 = vpack.c.b16 %v2337, %v2336
    %v2377 = vpack.c.b16 %v2339, %v2338
    %v2378 = vpack.c.b16 %v2341, %v2340
    %v2379 = vpack.c.b16 %v2343, %v2342
    %v2380 = vpack.c.b16 %v2345, %v2344
    %v2381 = vpack.c.b16 %v2347, %v2346
    %v2382 = vpack.c.b16 %v2349, %v2348
    %v2383 = vpack.c.b16 %v2351, %v2350
    %v2384 = vpack.c.b16 %v2353, %v2352
    %v2385 = vpack.c.b16 %v2355, %v2354
    %v2386 = vpack.c.b16 %v2357, %v2356
    %v2387 = vpack.c.b16 %v2359, %v2358
    %v2388 = vpack.c.b16 %v2361, %v2360
    %v2389 = vpack.c.b16 %v2363, %v2362
    %v2390 = vpack.c.b16 %v2365, %v2364
    %v2391 = vpack.c.b16 %v2367, %v2366
    %2416 = vmatpush.bf16.msra.mxu0 %v2375
    %2417 = vmatpush.bf16.msra.mxu0 %v2374
    %2418 = vmatpush.bf16.msra.mxu0 %v2373
    %2419 = vmatpush.bf16.msra.mxu0 %v2372
    %2420 = vmatpush.bf16.msra.mxu0 %v2371
    %2421 = vmatpush.bf16.msra.mxu0 %v2370
    %2422 = vmatpush.bf16.msra.mxu0 %v2369
    %2423 = vmatpush.bf16.msra.mxu0 %v2368
    %2424 = vmatmul.bf16.gmra.mxu0 %v1816
    %v2425 = vpop.f32.mrf.mxu0
    %v2426 = vadd.f32 %v2233, %v2425
    %v2427 = vpop.f32.mrf.mxu0
    %v2428 = vadd.f32 %v2235, %v2427
    %2429 = vmatmul.bf16.gmra.mxu0 %v1819
    %v2430 = vpop.f32.mrf.mxu0
    %v2431 = vadd.f32 %v2238, %v2430
    %v2432 = vpop.f32.mrf.mxu0
    %v2433 = vadd.f32 %v2240, %v2432
    %2434 = vmatmul.bf16.gmra.mxu0 %v1822
    %v2435 = vpop.f32.mrf.mxu0
    %v2436 = vadd.f32 %v2243, %v2435
    %v2437 = vpop.f32.mrf.mxu0
    %v2438 = vadd.f32 %v2245, %v2437
    %2439 = vmatmul.bf16.gmra.mxu0 %v1825
    %v2440 = vpop.f32.mrf.mxu0
    %v2441 = vadd.f32 %v2248, %v2440
    %v2442 = vpop.f32.mrf.mxu0
    %v2443 = vadd.f32 %v2250, %v2442
    %2444 = vmatmul.bf16.gmra.mxu0 %v1828
    %v2445 = vpop.f32.mrf.mxu0
    %v2446 = vadd.f32 %v2253, %v2445
    %v2447 = vpop.f32.mrf.mxu0
    %v2448 = vadd.f32 %v2255, %v2447
    %2449 = vmatmul.bf16.gmra.mxu0 %v1831
    %v2450 = vpop.f32.mrf.mxu0
    %v2451 = vadd.f32 %v2258, %v2450
    %v2452 = vpop.f32.mrf.mxu0
    %v2453 = vadd.f32 %v2260, %v2452
    %2454 = vmatmul.bf16.gmra.mxu0 %v1834
    %v2455 = vpop.f32.mrf.mxu0
    %v2456 = vadd.f32 %v2263, %v2455
    %v2457 = vpop.f32.mrf.mxu0
    %v2458 = vadd.f32 %v2265, %v2457
    %2459 = vmatmul.bf16.gmra.mxu0 %v1837
    %v2460 = vpop.f32.mrf.mxu0
    %v2461 = vadd.f32 %v2268, %v2460
    %v2462 = vpop.f32.mrf.mxu0
    %v2463 = vadd.f32 %v2270, %v2462
    %2464 = vdwg.mxu0
    %2465 = vmatpush.bf16.msra.mxu0 %v2383
    %2466 = vmatpush.bf16.msra.mxu0 %v2382
    %2467 = vmatpush.bf16.msra.mxu0 %v2381
    %2468 = vmatpush.bf16.msra.mxu0 %v2380
    %2469 = vmatpush.bf16.msra.mxu0 %v2379
    %2470 = vmatpush.bf16.msra.mxu0 %v2378
    %2471 = vmatpush.bf16.msra.mxu0 %v2377
    %2472 = vmatpush.bf16.msra.mxu0 %v2376
    %2473 = vmatmul.bf16.gmra.mxu0 %v1817
    %v2474 = vpop.f32.mrf.mxu0
    %v2475 = vadd.f32 %v2426, %v2474
    %v2476 = vpop.f32.mrf.mxu0
    %v2477 = vadd.f32 %v2428, %v2476
    %2478 = vmatmul.bf16.gmra.mxu0 %v1820
    %v2479 = vpop.f32.mrf.mxu0
    %v2480 = vadd.f32 %v2431, %v2479
    %v2481 = vpop.f32.mrf.mxu0
    %v2482 = vadd.f32 %v2433, %v2481
    %2483 = vmatmul.bf16.gmra.mxu0 %v1823
    %v2484 = vpop.f32.mrf.mxu0
    %v2485 = vadd.f32 %v2436, %v2484
    %v2486 = vpop.f32.mrf.mxu0
    %v2487 = vadd.f32 %v2438, %v2486
    %2488 = vmatmul.bf16.gmra.mxu0 %v1826
    %v2489 = vpop.f32.mrf.mxu0
    %v2490 = vadd.f32 %v2441, %v2489
    %v2491 = vpop.f32.mrf.mxu0
    %v2492 = vadd.f32 %v2443, %v2491
    %2493 = vmatmul.bf16.gmra.mxu0 %v1829
    %v2494 = vpop.f32.mrf.mxu0
    %v2495 = vadd.f32 %v2446, %v2494
    %v2496 = vpop.f32.mrf.mxu0
    %v2497 = vadd.f32 %v2448, %v2496
    %2498 = vmatmul.bf16.gmra.mxu0 %v1832
    %v2499 = vpop.f32.mrf.mxu0
    %v2500 = vadd.f32 %v2451, %v2499
    %v2501 = vpop.f32.mrf.mxu0
    %v2502 = vadd.f32 %v2453, %v2501
    %2503 = vmatmul.bf16.gmra.mxu0 %v1835
    %v2504 = vpop.f32.mrf.mxu0
    %v2505 = vadd.f32 %v2456, %v2504
    %v2506 = vpop.f32.mrf.mxu0
    %v2507 = vadd.f32 %v2458, %v2506
    %2508 = vmatmul.bf16.gmra.mxu0 %v1838
    %v2509 = vpop.f32.mrf.mxu0
    %v2510 = vadd.f32 %v2461, %v2509
    %v2511 = vpop.f32.mrf.mxu0
    %v2512 = vadd.f32 %v2463, %v2511
    %2513 = vdwg.mxu0
    %2514 = vmatpush.bf16.msra.mxu0 %v2391
    %2515 = vmatpush.bf16.msra.mxu0 %v2390
    %2516 = vmatpush.bf16.msra.mxu0 %v2389
    %2517 = vmatpush.bf16.msra.mxu0 %v2388
    %2518 = vmatpush.bf16.msra.mxu0 %v2387
    %2519 = vmatpush.bf16.msra.mxu0 %v2386
    %2520 = vmatpush.bf16.msra.mxu0 %v2385
    %2521 = vmatpush.bf16.msra.mxu0 %v2384
    %2522 = vmatmul.bf16.gmra.mxu0 %v1818
    %v2523 = vpop.f32.mrf.mxu0
    %v2524 = vadd.f32 %v2475, %v2523
    %v2525 = vpop.f32.mrf.mxu0
    %v2526 = vadd.f32 %v2477, %v2525
    %2527 = vmatmul.bf16.gmra.mxu0 %v1821
    %v2528 = vpop.f32.mrf.mxu0
    %v2529 = vadd.f32 %v2480, %v2528
    %v2530 = vpop.f32.mrf.mxu0
    %v2531 = vadd.f32 %v2482, %v2530
    %2532 = vmatmul.bf16.gmra.mxu0 %v1824
    %v2533 = vpop.f32.mrf.mxu0
    %v2534 = vadd.f32 %v2485, %v2533
    %v2535 = vpop.f32.mrf.mxu0
    %v2536 = vadd.f32 %v2487, %v2535
    %2537 = vmatmul.bf16.gmra.mxu0 %v1827
    %v2538 = vpop.f32.mrf.mxu0
    %v2539 = vadd.f32 %v2490, %v2538
    %v2540 = vpop.f32.mrf.mxu0
    %v2541 = vadd.f32 %v2492, %v2540
    %2542 = vmatmul.bf16.gmra.mxu0 %v1830
    %v2543 = vpop.f32.mrf.mxu0
    %v2544 = vadd.f32 %v2495, %v2543
    %v2545 = vpop.f32.mrf.mxu0
    %v2546 = vadd.f32 %v2497, %v2545
    %2547 = vmatmul.bf16.gmra.mxu0 %v1833
    %v2548 = vpop.f32.mrf.mxu0
    %v2549 = vadd.f32 %v2500, %v2548
    %v2550 = vpop.f32.mrf.mxu0
    %v2551 = vadd.f32 %v2502, %v2550
    %2552 = vmatmul.bf16.gmra.mxu0 %v1836
    %v2553 = vpop.f32.mrf.mxu0
    %v2554 = vadd.f32 %v2505, %v2553
    %v2555 = vpop.f32.mrf.mxu0
    %v2556 = vadd.f32 %v2507, %v2555
    %2557 = vmatmul.bf16.gmra.mxu0 %v1839
    %v2558 = vpop.f32.mrf.mxu0
    %v2559 = vadd.f32 %v2510, %v2558
    %v2560 = vpop.f32.mrf.mxu0
    %v2561 = vadd.f32 %v2512, %v2560
    %2562 = vdwg.mxu0
    %v2563 = vpack.c.bf16 %v265, %v1651
    %v2564 = vpack.c.bf16 %v332, %v1894
    %v2565 = vpack.c.bf16 %v393, %v1902
    %v2566 = vpack.c.bf16 %v265, %v1659
    %v2567 = vpack.c.bf16 %v332, %v1897
    %v2568 = vpack.c.bf16 %v393, %v1905
    %s2569 = scalar_lea.vmem [#allocation7], 384
    %v2570 = vld [vmem:[%s2569] sm:$0xf]
    %v2571 = vld [vmem:[%s2569 + $0x4] sm:$0xf]
    %v2572 = vld [vmem:[%s2569 + $0x8] sm:$0xf]
    %v2573 = vld [vmem:[%s2569 + $0xc] sm:$0xf]
    %v2574 = vld [vmem:[%s2569 + $0x10] sm:$0xf]
    %v2575 = vld [vmem:[%s2569 + $0x14] sm:$0xf]
    %v2576 = vld [vmem:[%s2569 + $0x18] sm:$0xf]
    %v2577 = vld [vmem:[%s2569 + $0x1c] sm:$0xf]
    %v2578 = vld [vmem:[%s2569 + $0x20] sm:$0xf]
    %v2579 = vld [vmem:[%s2569 + $0x24] sm:$0xf]
    %v2580 = vld [vmem:[%s2569 + $0x28] sm:$0xf]
    %v2581 = vld [vmem:[%s2569 + $0x2c] sm:$0xf]
    %v2582 = vld [vmem:[%s2569 + $0x30] sm:$0xf]
    %v2583 = vld [vmem:[%s2569 + $0x34] sm:$0xf]
    %v2584 = vld [vmem:[%s2569 + $0x38] sm:$0xf]
    %v2585 = vld [vmem:[%s2569 + $0x3c] sm:$0xf]
    %v2586 = vld [vmem:[%s2569 + $0x40] sm:$0xf]
    %v2587 = vld [vmem:[%s2569 + $0x44] sm:$0xf]
    %v2588 = vld [vmem:[%s2569 + $0x48] sm:$0xf]
    %v2589 = vld [vmem:[%s2569 + $0x4c] sm:$0xf]
    %v2590 = vld [vmem:[%s2569 + $0x50] sm:$0xf]
    %v2591 = vld [vmem:[%s2569 + $0x54] sm:$0xf]
    %v2592 = vld [vmem:[%s2569 + $0x58] sm:$0xf]
    %v2593 = vld [vmem:[%s2569 + $0x5c] sm:$0xf]
    %v2594 = vld [vmem:[%s2569 + $0x60] sm:$0xf]
    %v2595 = vld [vmem:[%s2569 + $0x64] sm:$0xf]
    %v2596 = vld [vmem:[%s2569 + $0x68] sm:$0xf]
    %v2597 = vld [vmem:[%s2569 + $0x6c] sm:$0xf]
    %v2598 = vld [vmem:[%s2569 + $0x70] sm:$0xf]
    %v2599 = vld [vmem:[%s2569 + $0x74] sm:$0xf]
    %v2600 = vld [vmem:[%s2569 + $0x78] sm:$0xf]
    %v2601 = vld [vmem:[%s2569 + $0x7c] sm:$0xf]
    %v2602 = vld [vmem:[%s2569 + $0x80] sm:$0xf]
    %v2603 = vld [vmem:[%s2569 + $0x84] sm:$0xf]
    %v2604 = vld [vmem:[%s2569 + $0x88] sm:$0xf]
    %v2605 = vld [vmem:[%s2569 + $0x8c] sm:$0xf]
    %v2606 = vld [vmem:[%s2569 + $0x90] sm:$0xf]
    %v2607 = vld [vmem:[%s2569 + $0x94] sm:$0xf]
    %v2608 = vld [vmem:[%s2569 + $0x98] sm:$0xf]
    %v2609 = vld [vmem:[%s2569 + $0x9c] sm:$0xf]
    %v2610 = vld [vmem:[%s2569 + $0xa0] sm:$0xf]
    %v2611 = vld [vmem:[%s2569 + $0xa4] sm:$0xf]
    %v2612 = vld [vmem:[%s2569 + $0xa8] sm:$0xf]
    %v2613 = vld [vmem:[%s2569 + $0xac] sm:$0xf]
    %v2614 = vld [vmem:[%s2569 + $0xb0] sm:$0xf]
    %v2615 = vld [vmem:[%s2569 + $0xb4] sm:$0xf]
    %v2616 = vld [vmem:[%s2569 + $0xb8] sm:$0xf]
    %v2617 = vld [vmem:[%s2569 + $0xbc] sm:$0xf]
    %v2666 = vunpack.c.l.b16 %v2570
    %v2667 = vunpack.c.l.b16 %v2571
    %v2668 = vunpack.c.l.b16 %v2572
    %v2669 = vunpack.c.l.b16 %v2573
    %v2670 = vunpack.c.l.b16 %v2574
    %v2671 = vunpack.c.l.b16 %v2575
    %v2672 = vunpack.c.l.b16 %v2576
    %v2673 = vunpack.c.l.b16 %v2577
    %v2674 = vunpack.c.l.b16 %v2578
    %v2675 = vunpack.c.l.b16 %v2579
    %v2676 = vunpack.c.l.b16 %v2580
    %v2677 = vunpack.c.l.b16 %v2581
    %v2678 = vunpack.c.l.b16 %v2582
    %v2679 = vunpack.c.l.b16 %v2583
    %v2680 = vunpack.c.l.b16 %v2584
    %v2681 = vunpack.c.l.b16 %v2585
    %v2682 = vunpack.c.l.b16 %v2586
    %v2683 = vunpack.c.l.b16 %v2587
    %v2684 = vunpack.c.l.b16 %v2588
    %v2685 = vunpack.c.l.b16 %v2589
    %v2686 = vunpack.c.l.b16 %v2590
    %v2687 = vunpack.c.l.b16 %v2591
    %v2688 = vunpack.c.l.b16 %v2592
    %v2689 = vunpack.c.l.b16 %v2593
    %v2690 = vunpack.c.l.b16 %v2594
    %v2691 = vunpack.c.l.b16 %v2595
    %v2692 = vunpack.c.l.b16 %v2596
    %v2693 = vunpack.c.l.b16 %v2597
    %v2694 = vunpack.c.l.b16 %v2598
    %v2695 = vunpack.c.l.b16 %v2599
    %v2696 = vunpack.c.l.b16 %v2600
    %v2697 = vunpack.c.l.b16 %v2601
    %v2698 = vunpack.c.l.b16 %v2602
    %v2699 = vunpack.c.l.b16 %v2603
    %v2700 = vunpack.c.l.b16 %v2604
    %v2701 = vunpack.c.l.b16 %v2605
    %v2702 = vunpack.c.l.b16 %v2606
    %v2703 = vunpack.c.l.b16 %v2607
    %v2704 = vunpack.c.l.b16 %v2608
    %v2705 = vunpack.c.l.b16 %v2609
    %v2706 = vunpack.c.l.b16 %v2610
    %v2707 = vunpack.c.l.b16 %v2611
    %v2708 = vunpack.c.l.b16 %v2612
    %v2709 = vunpack.c.l.b16 %v2613
    %v2710 = vunpack.c.l.b16 %v2614
    %v2711 = vunpack.c.l.b16 %v2615
    %v2712 = vunpack.c.l.b16 %v2616
    %v2713 = vunpack.c.l.b16 %v2617
    %v2714 = vpack.c.b16 %v2667, %v2666
    %v2715 = vpack.c.b16 %v2669, %v2668
    %v2716 = vpack.c.b16 %v2671, %v2670
    %v2717 = vpack.c.b16 %v2673, %v2672
    %v2718 = vpack.c.b16 %v2675, %v2674
    %v2719 = vpack.c.b16 %v2677, %v2676
    %v2720 = vpack.c.b16 %v2679, %v2678
    %v2721 = vpack.c.b16 %v2681, %v2680
    %v2722 = vpack.c.b16 %v2683, %v2682
    %v2723 = vpack.c.b16 %v2685, %v2684
    %v2724 = vpack.c.b16 %v2687, %v2686
    %v2725 = vpack.c.b16 %v2689, %v2688
    %v2726 = vpack.c.b16 %v2691, %v2690
    %v2727 = vpack.c.b16 %v2693, %v2692
    %v2728 = vpack.c.b16 %v2695, %v2694
    %v2729 = vpack.c.b16 %v2697, %v2696
    %v2730 = vpack.c.b16 %v2699, %v2698
    %v2731 = vpack.c.b16 %v2701, %v2700
    %v2732 = vpack.c.b16 %v2703, %v2702
    %v2733 = vpack.c.b16 %v2705, %v2704
    %v2734 = vpack.c.b16 %v2707, %v2706
    %v2735 = vpack.c.b16 %v2709, %v2708
    %v2736 = vpack.c.b16 %v2711, %v2710
    %v2737 = vpack.c.b16 %v2713, %v2712
    %2762 = vmatpush.bf16.msra.mxu0 %v2721
    %2763 = vmatpush.bf16.msra.mxu0 %v2720
    %2764 = vmatpush.bf16.msra.mxu0 %v2719
    %2765 = vmatpush.bf16.msra.mxu0 %v2718
    %2766 = vmatpush.bf16.msra.mxu0 %v2717
    %2767 = vmatpush.bf16.msra.mxu0 %v2716
    %2768 = vmatpush.bf16.msra.mxu0 %v2715
    %2769 = vmatpush.bf16.msra.mxu0 %v2714
    %2770 = vmatmul.bf16.gmra.mxu0 %v1819
    %v2771 = vpop.f32.mrf.mxu0
    %v2772 = vadd.f32 0.0, %v2771
    %v2773 = vpop.f32.mrf.mxu0
    %v2774 = vadd.f32 0.0, %v2773
    %2775 = vmatmul.bf16.gmra.mxu0 %v1822
    %v2776 = vpop.f32.mrf.mxu0
    %v2777 = vadd.f32 0.0, %v2776
    %v2778 = vpop.f32.mrf.mxu0
    %v2779 = vadd.f32 0.0, %v2778
    %2780 = vmatmul.bf16.gmra.mxu0 %v1825
    %v2781 = vpop.f32.mrf.mxu0
    %v2782 = vadd.f32 0.0, %v2781
    %v2783 = vpop.f32.mrf.mxu0
    %v2784 = vadd.f32 0.0, %v2783
    %2785 = vmatmul.bf16.gmra.mxu0 %v2563
    %v2786 = vpop.f32.mrf.mxu0
    %v2787 = vadd.f32 0.0, %v2786
    %v2788 = vpop.f32.mrf.mxu0
    %v2789 = vadd.f32 0.0, %v2788
    %2790 = vmatmul.bf16.gmra.mxu0 %v1831
    %v2791 = vpop.f32.mrf.mxu0
    %v2792 = vadd.f32 0.0, %v2791
    %v2793 = vpop.f32.mrf.mxu0
    %v2794 = vadd.f32 0.0, %v2793
    %2795 = vmatmul.bf16.gmra.mxu0 %v1834
    %v2796 = vpop.f32.mrf.mxu0
    %v2797 = vadd.f32 0.0, %v2796
    %v2798 = vpop.f32.mrf.mxu0
    %v2799 = vadd.f32 0.0, %v2798
    %2800 = vmatmul.bf16.gmra.mxu0 %v1837
    %v2801 = vpop.f32.mrf.mxu0
    %v2802 = vadd.f32 0.0, %v2801
    %v2803 = vpop.f32.mrf.mxu0
    %v2804 = vadd.f32 0.0, %v2803
    %2805 = vmatmul.bf16.gmra.mxu0 %v2566
    %v2806 = vpop.f32.mrf.mxu0
    %v2807 = vadd.f32 0.0, %v2806
    %v2808 = vpop.f32.mrf.mxu0
    %v2809 = vadd.f32 0.0, %v2808
    %2810 = vdwg.mxu0
    %2811 = vmatpush.bf16.msra.mxu0 %v2729
    %2812 = vmatpush.bf16.msra.mxu0 %v2728
    %2813 = vmatpush.bf16.msra.mxu0 %v2727
    %2814 = vmatpush.bf16.msra.mxu0 %v2726
    %2815 = vmatpush.bf16.msra.mxu0 %v2725
    %2816 = vmatpush.bf16.msra.mxu0 %v2724
    %2817 = vmatpush.bf16.msra.mxu0 %v2723
    %2818 = vmatpush.bf16.msra.mxu0 %v2722
    %2819 = vmatmul.bf16.gmra.mxu0 %v1820
    %v2820 = vpop.f32.mrf.mxu0
    %v2821 = vadd.f32 %v2772, %v2820
    %v2822 = vpop.f32.mrf.mxu0
    %v2823 = vadd.f32 %v2774, %v2822
    %2824 = vmatmul.bf16.gmra.mxu0 %v1823
    %v2825 = vpop.f32.mrf.mxu0
    %v2826 = vadd.f32 %v2777, %v2825
    %v2827 = vpop.f32.mrf.mxu0
    %v2828 = vadd.f32 %v2779, %v2827
    %2829 = vmatmul.bf16.gmra.mxu0 %v1826
    %v2830 = vpop.f32.mrf.mxu0
    %v2831 = vadd.f32 %v2782, %v2830
    %v2832 = vpop.f32.mrf.mxu0
    %v2833 = vadd.f32 %v2784, %v2832
    %2834 = vmatmul.bf16.gmra.mxu0 %v2564
    %v2835 = vpop.f32.mrf.mxu0
    %v2836 = vadd.f32 %v2787, %v2835
    %v2837 = vpop.f32.mrf.mxu0
    %v2838 = vadd.f32 %v2789, %v2837
    %2839 = vmatmul.bf16.gmra.mxu0 %v1832
    %v2840 = vpop.f32.mrf.mxu0
    %v2841 = vadd.f32 %v2792, %v2840
    %v2842 = vpop.f32.mrf.mxu0
    %v2843 = vadd.f32 %v2794, %v2842
    %2844 = vmatmul.bf16.gmra.mxu0 %v1835
    %v2845 = vpop.f32.mrf.mxu0
    %v2846 = vadd.f32 %v2797, %v2845
    %v2847 = vpop.f32.mrf.mxu0
    %v2848 = vadd.f32 %v2799, %v2847
    %2849 = vmatmul.bf16.gmra.mxu0 %v1838
    %v2850 = vpop.f32.mrf.mxu0
    %v2851 = vadd.f32 %v2802, %v2850
    %v2852 = vpop.f32.mrf.mxu0
    %v2853 = vadd.f32 %v2804, %v2852
    %2854 = vmatmul.bf16.gmra.mxu0 %v2567
    %v2855 = vpop.f32.mrf.mxu0
    %v2856 = vadd.f32 %v2807, %v2855
    %v2857 = vpop.f32.mrf.mxu0
    %v2858 = vadd.f32 %v2809, %v2857
    %2859 = vdwg.mxu0
    %2860 = vmatpush.bf16.msra.mxu0 %v2737
    %2861 = vmatpush.bf16.msra.mxu0 %v2736
    %2862 = vmatpush.bf16.msra.mxu0 %v2735
    %2863 = vmatpush.bf16.msra.mxu0 %v2734
    %2864 = vmatpush.bf16.msra.mxu0 %v2733
    %2865 = vmatpush.bf16.msra.mxu0 %v2732
    %2866 = vmatpush.bf16.msra.mxu0 %v2731
    %2867 = vmatpush.bf16.msra.mxu0 %v2730
    %2868 = vmatmul.bf16.gmra.mxu0 %v1821
    %v2869 = vpop.f32.mrf.mxu0
    %v2870 = vadd.f32 %v2821, %v2869
    %v2871 = vpop.f32.mrf.mxu0
    %v2872 = vadd.f32 %v2823, %v2871
    %2873 = vmatmul.bf16.gmra.mxu0 %v1824
    %v2874 = vpop.f32.mrf.mxu0
    %v2875 = vadd.f32 %v2826, %v2874
    %v2876 = vpop.f32.mrf.mxu0
    %v2877 = vadd.f32 %v2828, %v2876
    %2878 = vmatmul.bf16.gmra.mxu0 %v1827
    %v2879 = vpop.f32.mrf.mxu0
    %v2880 = vadd.f32 %v2831, %v2879
    %v2881 = vpop.f32.mrf.mxu0
    %v2882 = vadd.f32 %v2833, %v2881
    %2883 = vmatmul.bf16.gmra.mxu0 %v2565
    %v2884 = vpop.f32.mrf.mxu0
    %v2885 = vadd.f32 %v2836, %v2884
    %v2886 = vpop.f32.mrf.mxu0
    %v2887 = vadd.f32 %v2838, %v2886
    %2888 = vmatmul.bf16.gmra.mxu0 %v1833
    %v2889 = vpop.f32.mrf.mxu0
    %v2890 = vadd.f32 %v2841, %v2889
    %v2891 = vpop.f32.mrf.mxu0
    %v2892 = vadd.f32 %v2843, %v2891
    %2893 = vmatmul.bf16.gmra.mxu0 %v1836
    %v2894 = vpop.f32.mrf.mxu0
    %v2895 = vadd.f32 %v2846, %v2894
    %v2896 = vpop.f32.mrf.mxu0
    %v2897 = vadd.f32 %v2848, %v2896
    %2898 = vmatmul.bf16.gmra.mxu0 %v1839
    %v2899 = vpop.f32.mrf.mxu0
    %v2900 = vadd.f32 %v2851, %v2899
    %v2901 = vpop.f32.mrf.mxu0
    %v2902 = vadd.f32 %v2853, %v2901
    %2903 = vmatmul.bf16.gmra.mxu0 %v2568
    %v2904 = vpop.f32.mrf.mxu0
    %v2905 = vadd.f32 %v2856, %v2904
    %v2906 = vpop.f32.mrf.mxu0
    %v2907 = vadd.f32 %v2858, %v2906
    %2908 = vdwg.mxu0
    %v2909 = vadd.f32 %v2524, %v2870
    %v2910 = vadd.f32 %v2526, %v2872
    %v2911 = vadd.f32 %v2529, %v2875
    %v2912 = vadd.f32 %v2531, %v2877
    %v2913 = vadd.f32 %v2534, %v2880
    %v2914 = vadd.f32 %v2536, %v2882
    %v2915 = vadd.f32 %v2539, %v2885
    %v2916 = vadd.f32 %v2541, %v2887
    %v2917 = vadd.f32 %v2544, %v2890
    %v2918 = vadd.f32 %v2546, %v2892
    %v2919 = vadd.f32 %v2549, %v2895
    %v2920 = vadd.f32 %v2551, %v2897
    %v2921 = vadd.f32 %v2554, %v2900
    %v2922 = vadd.f32 %v2556, %v2902
    %v2923 = vadd.f32 %v2559, %v2905
    %v2924 = vadd.f32 %v2561, %v2907
    %v2926 = vperm.slane %v1595, 0
    %v2928 = vadd.f32 %v2909, %v2926
    %v2929 = vadd.f32 %v2910, %v2926
    %v2930 = vadd.f32 %v2911, %v2926
    %v2931 = vadd.f32 %v2912, %v2926
    %v2932 = vadd.f32 %v2913, %v2926
    %v2933 = vadd.f32 %v2914, %v2926
    %v2934 = vadd.f32 %v2915, %v2926
    %v2935 = vadd.f32 %v2916, %v2926
    %v2936 = vadd.f32 %v2917, %v2926
    %v2937 = vadd.f32 %v2918, %v2926
    %v2938 = vadd.f32 %v2919, %v2926
    %v2939 = vadd.f32 %v2920, %v2926
    %v2940 = vadd.f32 %v2921, %v2926
    %v2941 = vadd.f32 %v2922, %v2926
    %v2942 = vadd.f32 %v2923, %v2926
    %v2943 = vadd.f32 %v2924, %v2926
    %v2944 = vmax.f32 %v2928, 0.0
    %v2945 = vmax.f32 %v2929, 0.0
    %v2946 = vmax.f32 %v2930, 0.0
    %v2947 = vmax.f32 %v2931, 0.0
    %v2948 = vmax.f32 %v2932, 0.0
    %v2949 = vmax.f32 %v2933, 0.0
    %v2950 = vmax.f32 %v2934, 0.0
    %v2951 = vmax.f32 %v2935, 0.0
    %v2952 = vmax.f32 %v2936, 0.0
    %v2953 = vmax.f32 %v2937, 0.0
    %v2954 = vmax.f32 %v2938, 0.0
    %v2955 = vmax.f32 %v2939, 0.0
    %v2956 = vmax.f32 %v2940, 0.0
    %v2957 = vmax.f32 %v2941, 0.0
    %v2958 = vmax.f32 %v2942, 0.0
    %v2959 = vmax.f32 %v2943, 0.0
    %2960 = vst [vmem:[#allocation8] sm:$0xff] %v2944
    %2961 = vst [vmem:[#allocation8 + $0x8] sm:$0xff] %v2945
    %2962 = vst [vmem:[#allocation8 + $0x10] sm:$0xff] %v2946
    %2963 = vst [vmem:[#allocation8 + $0x18] sm:$0xff] %v2947
    %2964 = vst [vmem:[#allocation8 + $0x20] sm:$0xff] %v2948
    %2965 = vst [vmem:[#allocation8 + $0x28] sm:$0xff] %v2949
    %2966 = vst [vmem:[#allocation8 + $0x30] sm:$0xff] %v2950
    %2967 = vst [vmem:[#allocation8 + $0x38] sm:$0xff] %v2951
    %2968 = vst [vmem:[#allocation8 + $0x40] sm:$0xff] %v2952
    %2969 = vst [vmem:[#allocation8 + $0x48] sm:$0xff] %v2953
    %2970 = vst [vmem:[#allocation8 + $0x50] sm:$0xff] %v2954
    %2971 = vst [vmem:[#allocation8 + $0x58] sm:$0xff] %v2955
    %2972 = vst [vmem:[#allocation8 + $0x60] sm:$0xff] %v2956
    %2973 = vst [vmem:[#allocation8 + $0x68] sm:$0xff] %v2957
    %2974 = vst [vmem:[#allocation8 + $0x70] sm:$0xff] %v2958
    %2975 = vst [vmem:[#allocation8 + $0x78] sm:$0xff] %v2959
    // Predicated region
    $region34: #{tpu_custom_call.1} parent=1 // pred_check
      _
    $region35: #{tpu_custom_call.1} parent=1 // pred_check_branch
      %2977 = sbr.rel (0) target = $region37
    $region36: #{tpu_custom_call.1} parent=1 // pred_region
      %2979 = vsyncadd [#allocation4], 0
      %s2980 = sshll.u32 [#allocation8], 4
      %s2981 = int_to_ptr.vmem [resolvable:$true] %s2980
      %s2982 = sshll.u32 %s5, 4
      %s2983 = int_to_ptr.hbm [resolvable:$true] %s2982
      %2988 = dma.vmem_to_hbm [thread:$0]  %s2981, 2048, %s2983, [#allocation4], 128, 128, 8
    $region37: #{tpu_custom_call.1} parent=1 // pred_fallthru
      _
    // Predicated region
    $region38: #{tpu_custom_call.1} parent=1 // pred_check
      _
    $region39: #{tpu_custom_call.1} parent=1 // pred_check_branch
      %2990 = sbr.rel (0) target = $region41
    $region40: #{tpu_custom_call.1} parent=1 // pred_region
      %2992 = dma.done [#allocation4], 2048
    $region41: #{tpu_custom_call.1} parent=1 // pred_fallthru
      _
    %2993 = vsyncpa [#allocation3], 1
    %2994 = vsyncpa [#allocation6], 1
    %2995 = vsyncpa [#allocation4], 1

// kernel: tpu_custom_call.1
$region0: #{tpu_custom_call.1}
  #allocation0 [shape = 'u32[]', space=smem, size = 0x4, offset = 0x4, fixed_abs, tag = 'smem constant byte address 0x4 - core index']
  #allocation1 [shape = 'u32[72,128]{1,0:T(1,128)}', space=vmem, size = 0x9000, scoped, tag = 'internal scratch']
  %s0 = inlined_call_operand.hbm [shape: bf16[2,16,8,256], index: 0, kind: input, shape index: {}]
  %s1 = inlined_call_operand.hbm [shape: bf16[3,384,128], index: 1, kind: input, shape index: {}]
  %s2 = inlined_call_operand.vmem [shape: f32[1,128], index: 2, kind: input, shape index: {}]
  %s3 = inlined_call_operand.hbm [shape: bf16[3,384,128], index: 3, kind: input, shape index: {}]
  %s4 = inlined_call_operand.vmem [shape: f32[1,128], index: 4, kind: input, shape index: {}]
  %s5 = inlined_call_operand.hbm [shape: f32[2,8,8,128], index: 5, kind: output, shape index: {}]
  %s6 = sld [smem:[#allocation0]]
  $region42: #{tpu_custom_call.1} parent=0
    _
  %s8 = ssub.s32 1, %s6
  %s9 = scalar_select 0, %s8, %s6
  $region1: #{tpu_custom_call.1} parent=0
    #allocation2 [shape = 'u8[131072]{0}', space=vmem, size = 0x20000, scoped, tag = 'input window, operand 0, single buffered']
    #allocation3 [shape = 's32[1]{0}', space=sflag, size = 0x4, scoped, tag = 'scoped memory for tpu_custom_call.1']
    #allocation4 [shape = 's32[1]{0}', space=sflag, size = 0x4, scoped, tag = 'scoped memory for tpu_custom_call.1']
    #allocation5 [shape = 'u8[294912]{0}', space=vmem, size = 0x48000, scoped, tag = 'input window, operand 1, single buffered']
    #allocation6 [shape = 's32[1]{0}', space=sflag, size = 0x4, scoped, tag = 'scoped memory for tpu_custom_call.1']
    #allocation7 [shape = 'u8[294912]{0}', space=vmem, size = 0x48000, scoped, tag = 'input window, operand 3, single buffered']
    #allocation8 [shape = 'u8[65536]{0}', space=vmem, size = 0x10000, scoped, tag = 'output window, operand 0, single buffered']
    %10 = vsyncpa [#allocation3], 0
    %11 = vsyncpa [#allocation6], 0
    %12 = vsyncpa [#allocation4], 0
    // Predicated region
    $region2: #{tpu_custom_call.1} parent=1 // pred_check
      _
    $region3: #{tpu_custom_call.1} parent=1 // pred_check_branch
      %14 = sbr.rel (0) target = $region5
    $region4: #{tpu_custom_call.1} parent=1 // pred_region
      %16 = vsyncadd [#allocation3], 0
      %s17 = sshll.u32 %s0, 4
      %s18 = int_to_ptr.hbm [resolvable:$true] %s17
      %s19 = sshll.u32 [#allocation2], 4
      %s20 = int_to_ptr.vmem [resolvable:$true] %s19
      %25 = dma.hbm_to_vmem [thread:$0]  %s18, 4096, %s20, [#allocation3], 128, 128, 8
    $region5: #{tpu_custom_call.1} parent=1 // pred_fallthru
      _
    // Predicated region
    $region6: #{tpu_custom_call.1} parent=1 // pred_check
      _
    $region7: #{tpu_custom_call.1} parent=1 // pred_check_branch
      %27 = sbr.rel (0) target = $region9
    $region8: #{tpu_custom_call.1} parent=1 // pred_region
      %29 = vsyncadd [#allocation6], 0
      %s30 = sshll.u32 %s1, 4
      %s31 = int_to_ptr.hbm [resolvable:$true] %s30
      %s32 = sshll.u32 [#allocation5], 4
      %s33 = int_to_ptr.vmem [resolvable:$true] %s32
      %38 = dma.hbm_to_vmem [thread:$0]  %s31, 9216, %s33, [#allocation6], 64, 64, 4
    $region9: #{tpu_custom_call.1} parent=1 // pred_fallthru
      _
    // Predicated region
    $region10: #{tpu_custom_call.1} parent=1 // pred_check
      _
    $region11: #{tpu_custom_call.1} parent=1 // pred_check_branch
      %40 = sbr.rel (0) target = $region13
    $region12: #{tpu_custom_call.1} parent=1 // pred_region
      _
    $region13: #{tpu_custom_call.1} parent=1 // pred_fallthru
      _
    // Predicated region
    $region14: #{tpu_custom_call.1} parent=1 // pred_check
      _
    $region15: #{tpu_custom_call.1} parent=1 // pred_check_branch
      %42 = sbr.rel (0) target = $region17
    $region16: #{tpu_custom_call.1} parent=1 // pred_region
      %44 = vsyncadd [#allocation6], 0
      %s45 = sshll.u32 %s3, 4
      %s46 = int_to_ptr.hbm [resolvable:$true] %s45
      %s47 = sshll.u32 [#allocation7], 4
      %s48 = int_to_ptr.vmem [resolvable:$true] %s47
      %53 = dma.hbm_to_vmem [thread:$0]  %s46, 9216, %s48, [#allocation6], 64, 64, 4
    $region17: #{tpu_custom_call.1} parent=1 // pred_fallthru
      _
    // Predicated region
    $region18: #{tpu_custom_call.1} parent=1 // pred_check
      _
    $region19: #{tpu_custom_call.1} parent=1 // pred_check_branch
      %55 = sbr.rel (0) target = $region21
    $region20: #{tpu_custom_call.1} parent=1 // pred_region
      _
    $region21: #{tpu_custom_call.1} parent=1 // pred_fallthru
      _
    // Predicated region
    $region22: #{tpu_custom_call.1} parent=1 // pred_check
      _
    $region23: #{tpu_custom_call.1} parent=1 // pred_check_branch
      %57 = sbr.rel (0) target = $region25
    $region24: #{tpu_custom_call.1} parent=1 // pred_region
      %59 = dma.done [#allocation3], 4096
    $region25: #{tpu_custom_call.1} parent=1 // pred_fallthru
      _
    // Predicated region
    $region26: #{tpu_custom_call.1} parent=1 // pred_check
      _
    $region27: #{tpu_custom_call.1} parent=1 // pred_check_branch
      %61 = sbr.rel (0) target = $region29
    $region28: #{tpu_custom_call.1} parent=1 // pred_region
      %63 = dma.done [#allocation6], 9216
    $region29: #{tpu_custom_call.1} parent=1 // pred_fallthru
      _
    // Predicated region
    $region30: #{tpu_custom_call.1} parent=1 // pred_check
      _
    $region31: #{tpu_custom_call.1} parent=1 // pred_check_branch
      %65 = sbr.rel (0) target = $region33
    $region32: #{tpu_custom_call.1} parent=1 // pred_region
      %67 = dma.done [#allocation6], 9216
    $region33: #{tpu_custom_call.1} parent=1 // pred_fallthru
      _
    %v68 = vld [vmem:[#allocation2] sm:$0xff]
    %v69 = vld [vmem:[#allocation2 + $0x8] sm:$0xff]
    %v70 = vld [vmem:[#allocation2 + $0x10] sm:$0xff]
    %v71 = vld [vmem:[#allocation2 + $0x18] sm:$0xff]
    %v72 = vld [vmem:[#allocation2 + $0x20] sm:$0xff]
    %v73 = vld [vmem:[#allocation2 + $0x28] sm:$0xff]
    %v74 = vld [vmem:[#allocation2 + $0x30] sm:$0xff]
    %v75 = vld [vmem:[#allocation2 + $0x38] sm:$0xff]
    %v76 = vld [vmem:[#allocation2 + $0x40] sm:$0xff]
    %v77 = vld [vmem:[#allocation2 + $0x48] sm:$0xff]
    %v78 = vld [vmem:[#allocation2 + $0x50] sm:$0xff]
    %v79 = vld [vmem:[#allocation2 + $0x58] sm:$0xff]
    %v80 = vld [vmem:[#allocation2 + $0x60] sm:$0xff]
    %v81 = vld [vmem:[#allocation2 + $0x68] sm:$0xff]
    %v82 = vld [vmem:[#allocation2 + $0x70] sm:$0xff]
    %v83 = vld [vmem:[#allocation2 + $0x78] sm:$0xff]
    %v84 = vld [vmem:[#allocation2 + $0x80] sm:$0xff]
    %v85 = vld [vmem:[#allocation2 + $0x88] sm:$0xff]
    %v86 = vld [vmem:[#allocation2 + $0x90] sm:$0xff]
    %v87 = vld [vmem:[#allocation2 + $0x98] sm:$0xff]
    %v88 = vld [vmem:[#allocation2 + $0xa0] sm:$0xff]
    %v89 = vld [vmem:[#allocation2 + $0xa8] sm:$0xff]
    %v90 = vld [vmem:[#allocation2 + $0xb0] sm:$0xff]
    %v91 = vld [vmem:[#allocation2 + $0xb8] sm:$0xff]
    %v92 = vld [vmem:[#allocation2 + $0xc0] sm:$0xff]
    %v93 = vld [vmem:[#allocation2 + $0xc8] sm:$0xff]
    %v94 = vld [vmem:[#allocation2 + $0xd0] sm:$0xff]
    %v95 = vld [vmem:[#allocation2 + $0xd8] sm:$0xff]
    %v96 = vld [vmem:[#allocation2 + $0xe0] sm:$0xff]
    %v97 = vld [vmem:[#allocation2 + $0xe8] sm:$0xff]
    %v98 = vld [vmem:[#allocation2 + $0xf0] sm:$0xff]
    %v99 = vld [vmem:[#allocation2 + $0xf8] sm:$0xff]
    %v100 = vunpack.c.l.bf16 %v68
    %v101 = vunpack.c.h.bf16 %v68
    %v102 = vunpack.c.l.bf16 %v69
    %v103 = vunpack.c.h.bf16 %v69
    %v104 = vunpack.c.l.bf16 %v70
    %v105 = vunpack.c.h.bf16 %v70
    %v106 = vunpack.c.l.bf16 %v71
    %v107 = vunpack.c.h.bf16 %v71
    %v108 = vunpack.c.l.bf16 %v72
    %v109 = vunpack.c.h.bf16 %v72
    %v110 = vunpack.c.l.bf16 %v73
    %v111 = vunpack.c.h.bf16 %v73
    %v112 = vunpack.c.l.bf16 %v74
    %v113 = vunpack.c.h.bf16 %v74
    %v114 = vunpack.c.l.bf16 %v75
    %v115 = vunpack.c.h.bf16 %v75
    %v116 = vunpack.c.l.bf16 %v76
    %v117 = vunpack.c.h.bf16 %v76
    %v118 = vunpack.c.l.bf16 %v77
    %v119 = vunpack.c.h.bf16 %v77
    %v120 = vunpack.c.l.bf16 %v78
    %v121 = vunpack.c.h.bf16 %v78
    %v122 = vunpack.c.l.bf16 %v79
    %v123 = vunpack.c.h.bf16 %v79
    %v124 = vunpack.c.l.bf16 %v80
    %v125 = vunpack.c.h.bf16 %v80
    %v126 = vunpack.c.l.bf16 %v81
    %v127 = vunpack.c.h.bf16 %v81
    %v128 = vunpack.c.l.bf16 %v82
    %v129 = vunpack.c.h.bf16 %v82
    %v130 = vunpack.c.l.bf16 %v83
    %v131 = vunpack.c.h.bf16 %v83
    %v132 = vunpack.c.l.bf16 %v84
    %v133 = vunpack.c.h.bf16 %v84
    %v134 = vunpack.c.l.bf16 %v85
    %v135 = vunpack.c.h.bf16 %v85
    %v136 = vunpack.c.l.bf16 %v86
    %v137 = vunpack.c.h.bf16 %v86
    %v138 = vunpack.c.l.bf16 %v87
    %v139 = vunpack.c.h.bf16 %v87
    %v140 = vunpack.c.l.bf16 %v88
    %v141 = vunpack.c.h.bf16 %v88
    %v142 = vunpack.c.l.bf16 %v89
    %v143 = vunpack.c.h.bf16 %v89
    %v144 = vunpack.c.l.bf16 %v90
    %v145 = vunpack.c.h.bf16 %v90
    %v146 = vunpack.c.l.bf16 %v91
    %v147 = vunpack.c.h.bf16 %v91
    %v148 = vunpack.c.l.bf16 %v92
    %v149 = vunpack.c.h.bf16 %v92
    %v150 = vunpack.c.l.bf16 %v93
    %v151 = vunpack.c.h.bf16 %v93
    %v152 = vunpack.c.l.bf16 %v94
    %v153 = vunpack.c.h.bf16 %v94
    %v154 = vunpack.c.l.bf16 %v95
    %v155 = vunpack.c.h.bf16 %v95
    %v156 = vunpack.c.l.bf16 %v96
    %v157 = vunpack.c.h.bf16 %v96
    %v158 = vunpack.c.l.bf16 %v97
    %v159 = vunpack.c.h.bf16 %v97
    %v160 = vunpack.c.l.bf16 %v98
    %v161 = vunpack.c.h.bf16 %v98
    %v162 = vunpack.c.l.bf16 %v99
    %v163 = vunpack.c.h.bf16 %v99
    %v164 = vmax.f32 %v100, %v101
    %v165 = vmax.f32 %v102, %v103
    %v166 = vmax.f32 %v104, %v105
    %v167 = vmax.f32 %v106, %v107
    %v168 = vmax.f32 %v108, %v109
    %v169 = vmax.f32 %v110, %v111
    %v170 = vmax.f32 %v112, %v113
    %v171 = vmax.f32 %v114, %v115
    %v172 = vmax.f32 %v116, %v117
    %v173 = vmax.f32 %v118, %v119
    %v174 = vmax.f32 %v120, %v121
    %v175 = vmax.f32 %v122, %v123
    %v176 = vmax.f32 %v124, %v125
    %v177 = vmax.f32 %v126, %v127
    %v178 = vmax.f32 %v128, %v129
    %v179 = vmax.f32 %v130, %v131
    %v180 = vmax.f32 %v132, %v133
    %v181 = vmax.f32 %v134, %v135
    %v182 = vmax.f32 %v136, %v137
    %v183 = vmax.f32 %v138, %v139
    %v184 = vmax.f32 %v140, %v141
    %v185 = vmax.f32 %v142, %v143
    %v186 = vmax.f32 %v144, %v145
    %v187 = vmax.f32 %v146, %v147
    %v188 = vmax.f32 %v148, %v149
    %v189 = vmax.f32 %v150, %v151
    %v190 = vmax.f32 %v152, %v153
    %v191 = vmax.f32 %v154, %v155
    %v192 = vmax.f32 %v156, %v157
    %v193 = vmax.f32 %v158, %v159
    %v194 = vmax.f32 %v160, %v161
    %v195 = vmax.f32 %v162, %v163
    %v196 = vmax.f32 %v164, %v165
    %v197 = vmax.f32 %v166, %v167
    %v198 = vmax.f32 %v168, %v169
    %v199 = vmax.f32 %v170, %v171
    %v200 = vmax.f32 %v172, %v173
    %v201 = vmax.f32 %v174, %v175
    %v202 = vmax.f32 %v176, %v177
    %v203 = vmax.f32 %v178, %v179
    %v204 = vmax.f32 %v180, %v181
    %v205 = vmax.f32 %v182, %v183
    %v206 = vmax.f32 %v184, %v185
    %v207 = vmax.f32 %v186, %v187
    %v208 = vmax.f32 %v188, %v189
    %v209 = vmax.f32 %v190, %v191
    %v210 = vmax.f32 %v192, %v193
    %v211 = vmax.f32 %v194, %v195
    %v212 = vld [vmem:[%s2] sm:$0x1]
    %v230 = vrot.slane 0.0, 7
    %v231 = vrot.slane %v196, 7
    %v232 = vrot.slane %v197, 7
    %v233 = vrot.slane %v198, 7
    %v234 = vrot.slane %v199, 7
    %v235 = vrot.slane %v200, 7
    %v236 = vrot.slane %v201, 7
    %v237 = vrot.slane %v202, 7
    %v238 = vrot.slane %v203, 7
    %v239 = vrot.slane %v204, 7
    %v240 = vrot.slane %v205, 7
    %v241 = vrot.slane %v206, 7
    %v242 = vrot.slane %v207, 7
    %v243 = vrot.slane %v208, 7
    %v244 = vrot.slane %v209, 7
    %v245 = vrot.slane %v210, 7
    %v246 = vrot.slane %v211, 7
    %vm264 = vcmask 1040384
    %v265 = vsel %vm264, 0.0, %v230
    %v266 = vsel %vm264, 0.0, %v231
    %v267 = vsel %vm264, 0.0, %v232
    %v268 = vsel %vm264, 0.0, %v233
    %v269 = vsel %vm264, 0.0, %v234
    %v270 = vsel %vm264, 0.0, %v235
    %v271 = vsel %vm264, 0.0, %v236
    %v272 = vsel %vm264, 0.0, %v237
    %v273 = vsel %vm264, 0.0, %v238
    %v274 = vsel %vm264, 0.0, %v239
    %v275 = vsel %vm264, 0.0, %v240
    %v276 = vsel %vm264, 0.0, %v241
    %v277 = vsel %vm264, 0.0, %v242
    %v278 = vsel %vm264, 0.0, %v243
    %v279 = vsel %vm264, 0.0, %v244
    %v280 = vsel %vm264, 0.0, %v245
    %v281 = vsel %vm264, 0.0, %v246
    %v282 = vsel %vm264, %v230, 0.0
    %v283 = vsel %vm264, %v231, 0.0
    %v284 = vsel %vm264, %v232, 0.0
    %v285 = vsel %vm264, %v233, 0.0
    %v286 = vsel %vm264, %v234, 0.0
    %v287 = vsel %vm264, %v235, 0.0
    %v288 = vsel %vm264, %v236, 0.0
    %v289 = vsel %vm264, %v237, 0.0
    %v290 = vsel %vm264, %v238, 0.0
    %v291 = vsel %vm264, %v239, 0.0
    %v292 = vsel %vm264, %v240, 0.0
    %v293 = vsel %vm264, %v241, 0.0
    %v294 = vsel %vm264, %v242, 0.0
    %v295 = vsel %vm264, %v243, 0.0
    %v296 = vsel %vm264, %v244, 0.0
    %v297 = vsel %vm264, %v245, 0.0
    %v298 = vsel %vm264, %v246, 0.0
    %vm329 = vcmask 1046528
    %v330 = vrot.slane %v265, 1
    %v331 = vrot.slane %v282, 1
    %v332 = vsel %vm329, %v330, %v331
    %v333 = vrot.slane %v266, 1
    %v334 = vrot.slane %v283, 1
    %v335 = vsel %vm329, %v333, %v334
    %v336 = vrot.slane %v267, 1
    %v337 = vrot.slane %v284, 1
    %v338 = vsel %vm329, %v336, %v337
    %v339 = vrot.slane %v268, 1
    %v340 = vrot.slane %v285, 1
    %v341 = vsel %vm329, %v339, %v340
    %v342 = vrot.slane %v269, 1
    %v343 = vrot.slane %v286, 1
    %v344 = vsel %vm329, %v342, %v343
    %v345 = vrot.slane %v270, 1
    %v346 = vrot.slane %v287, 1
    %v347 = vsel %vm329, %v345, %v346
    %v348 = vrot.slane %v271, 1
    %v349 = vrot.slane %v288, 1
    %v350 = vsel %vm329, %v348, %v349
    %v351 = vrot.slane %v272, 1
    %v352 = vrot.slane %v289, 1
    %v353 = vsel %vm329, %v351, %v352
    %v354 = vrot.slane %v274, 1
    %v355 = vrot.slane %v291, 1
    %v356 = vsel %vm329, %v354, %v355
    %v357 = vrot.slane %v275, 1
    %v358 = vrot.slane %v292, 1
    %v359 = vsel %vm329, %v357, %v358
    %v360 = vrot.slane %v276, 1
    %v361 = vrot.slane %v293, 1
    %v362 = vsel %vm329, %v360, %v361
    %v363 = vrot.slane %v277, 1
    %v364 = vrot.slane %v294, 1
    %v365 = vsel %vm329, %v363, %v364
    %v366 = vrot.slane %v278, 1
    %v367 = vrot.slane %v295, 1
    %v368 = vsel %vm329, %v366, %v367
    %v369 = vrot.slane %v279, 1
    %v370 = vrot.slane %v296, 1
    %v371 = vsel %vm329, %v369, %v370
    %v372 = vrot.slane %v280, 1
    %v373 = vrot.slane %v297, 1
    %v374 = vsel %vm329, %v372, %v373
    %vm390 = vcmask 1045504
    %v391 = vrot.slane %v265, 2
    %v392 = vrot.slane %v282, 2
    %v393 = vsel %vm390, %v391, %v392
    %v394 = vrot.slane %v266, 2
    %v395 = vrot.slane %v283, 2
    %v396 = vsel %vm390, %v394, %v395
    %v397 = vrot.slane %v267, 2
    %v398 = vrot.slane %v284, 2
    %v399 = vsel %vm390, %v397, %v398
    %v400 = vrot.slane %v268, 2
    %v401 = vrot.slane %v285, 2
    %v402 = vsel %vm390, %v400, %v401
    %v403 = vrot.slane %v269, 2
    %v404 = vrot.slane %v286, 2
    %v405 = vsel %vm390, %v403, %v404
    %v406 = vrot.slane %v270, 2
    %v407 = vrot.slane %v287, 2
    %v408 = vsel %vm390, %v406, %v407
    %v409 = vrot.slane %v271, 2
    %v410 = vrot.slane %v288, 2
    %v411 = vsel %vm390, %v409, %v410
    %v412 = vrot.slane %v272, 2
    %v413 = vrot.slane %v289, 2
    %v414 = vsel %vm390, %v412, %v413
    %v415 = vrot.slane %v274, 2
    %v416 = vrot.slane %v291, 2
    %v417 = vsel %vm390, %v415, %v416
    %v418 = vrot.slane %v275, 2
    %v419 = vrot.slane %v292, 2
    %v420 = vsel %vm390, %v418, %v419
    %v421 = vrot.slane %v276, 2
    %v422 = vrot.slane %v293, 2
    %v423 = vsel %vm390, %v421, %v422
    %v424 = vrot.slane %v277, 2
    %v425 = vrot.slane %v294, 2
    %v426 = vsel %vm390, %v424, %v425
    %v427 = vrot.slane %v278, 2
    %v428 = vrot.slane %v295, 2
    %v429 = vsel %vm390, %v427, %v428
    %v430 = vrot.slane %v279, 2
    %v431 = vrot.slane %v296, 2
    %v432 = vsel %vm390, %v430, %v431
    %v433 = vrot.slane %v280, 2
    %v434 = vrot.slane %v297, 2
    %v435 = vsel %vm390, %v433, %v434
    %v451 = vpack.c.bf16 %v266, %v265
    %v452 = vpack.c.bf16 %v335, %v332
    %v453 = vpack.c.bf16 %v396, %v393
    %v454 = vpack.c.bf16 %v268, %v267
    %v455 = vpack.c.bf16 %v341, %v338
    %v456 = vpack.c.bf16 %v402, %v399
    %v457 = vpack.c.bf16 %v270, %v269
    %v458 = vpack.c.bf16 %v347, %v344
    %v459 = vpack.c.bf16 %v408, %v405
    %v460 = vpack.c.bf16 %v272, %v271
    %v461 = vpack.c.bf16 %v353, %v350
    %v462 = vpack.c.bf16 %v414, %v411
    %v463 = vpack.c.bf16 %v274, %v265
    %v464 = vpack.c.bf16 %v356, %v332
    %v465 = vpack.c.bf16 %v417, %v393
    %v466 = vpack.c.bf16 %v276, %v275
    %v467 = vpack.c.bf16 %v362, %v359
    %v468 = vpack.c.bf16 %v423, %v420
    %v469 = vpack.c.bf16 %v278, %v277
    %v470 = vpack.c.bf16 %v368, %v365
    %v471 = vpack.c.bf16 %v429, %v426
    %v472 = vpack.c.bf16 %v280, %v279
    %v473 = vpack.c.bf16 %v374, %v371
    %v474 = vpack.c.bf16 %v435, %v432
    %v475 = vld [vmem:[#allocation5] sm:$0xf]
    %v476 = vld [vmem:[#allocation5 + $0x4] sm:$0xf]
    %v477 = vld [vmem:[#allocation5 + $0x8] sm:$0xf]
    %v478 = vld [vmem:[#allocation5 + $0xc] sm:$0xf]
    %v479 = vld [vmem:[#allocation5 + $0x10] sm:$0xf]
    %v480 = vld [vmem:[#allocation5 + $0x14] sm:$0xf]
    %v481 = vld [vmem:[#allocation5 + $0x18] sm:$0xf]
    %v482 = vld [vmem:[#allocation5 + $0x1c] sm:$0xf]
    %v483 = vld [vmem:[#allocation5 + $0x20] sm:$0xf]
    %v484 = vld [vmem:[#allocation5 + $0x24] sm:$0xf]
    %v485 = vld [vmem:[#allocation5 + $0x28] sm:$0xf]
    %v486 = vld [vmem:[#allocation5 + $0x2c] sm:$0xf]
    %v487 = vld [vmem:[#allocation5 + $0x30] sm:$0xf]
    %v488 = vld [vmem:[#allocation5 + $0x34] sm:$0xf]
    %v489 = vld [vmem:[#allocation5 + $0x38] sm:$0xf]
    %v490 = vld [vmem:[#allocation5 + $0x3c] sm:$0xf]
    %v491 = vld [vmem:[#allocation5 + $0x40] sm:$0xf]
    %v492 = vld [vmem:[#allocation5 + $0x44] sm:$0xf]
    %v493 = vld [vmem:[#allocation5 + $0x48] sm:$0xf]
    %v494 = vld [vmem:[#allocation5 + $0x4c] sm:$0xf]
    %v495 = vld [vmem:[#allocation5 + $0x50] sm:$0xf]
    %v496 = vld [vmem:[#allocation5 + $0x54] sm:$0xf]
    %v497 = vld [vmem:[#allocation5 + $0x58] sm:$0xf]
    %v498 = vld [vmem:[#allocation5 + $0x5c] sm:$0xf]
    %v499 = vld [vmem:[#allocation5 + $0x60] sm:$0xf]
    %v500 = vld [vmem:[#allocation5 + $0x64] sm:$0xf]
    %v501 = vld [vmem:[#allocation5 + $0x68] sm:$0xf]
    %v502 = vld [vmem:[#allocation5 + $0x6c] sm:$0xf]
    %v503 = vld [vmem:[#allocation5 + $0x70] sm:$0xf]
    %v504 = vld [vmem:[#allocation5 + $0x74] sm:$0xf]
    %v505 = vld [vmem:[#allocation5 + $0x78] sm:$0xf]
    %v506 = vld [vmem:[#allocation5 + $0x7c] sm:$0xf]
    %v507 = vld [vmem:[#allocation5 + $0x80] sm:$0xf]
    %v508 = vld [vmem:[#allocation5 + $0x84] sm:$0xf]
    %v509 = vld [vmem:[#allocation5 + $0x88] sm:$0xf]
    %v510 = vld [vmem:[#allocation5 + $0x8c] sm:$0xf]
    %v511 = vld [vmem:[#allocation5 + $0x90] sm:$0xf]
    %v512 = vld [vmem:[#allocation5 + $0x94] sm:$0xf]
    %v513 = vld [vmem:[#allocation5 + $0x98] sm:$0xf]
    %v514 = vld [vmem:[#allocation5 + $0x9c] sm:$0xf]
    %v515 = vld [vmem:[#allocation5 + $0xa0] sm:$0xf]
    %v516 = vld [vmem:[#allocation5 + $0xa4] sm:$0xf]
    %v517 = vld [vmem:[#allocation5 + $0xa8] sm:$0xf]
    %v518 = vld [vmem:[#allocation5 + $0xac] sm:$0xf]
    %v519 = vld [vmem:[#allocation5 + $0xb0] sm:$0xf]
    %v520 = vld [vmem:[#allocation5 + $0xb4] sm:$0xf]
    %v521 = vld [vmem:[#allocation5 + $0xb8] sm:$0xf]
    %v522 = vld [vmem:[#allocation5 + $0xbc] sm:$0xf]
    %v527 = vrot.slane %v273, 1
    %v528 = vrot.slane %v290, 1
    %v529 = vsel %vm329, %v527, %v528
    %v530 = vrot.slane %v281, 1
    %v531 = vrot.slane %v298, 1
    %v532 = vsel %vm329, %v530, %v531
    %v535 = vrot.slane %v273, 2
    %v536 = vrot.slane %v290, 2
    %v537 = vsel %vm390, %v535, %v536
    %v538 = vrot.slane %v281, 2
    %v539 = vrot.slane %v298, 2
    %v540 = vsel %vm390, %v538, %v539
    %v543 = vpack.c.bf16 %v267, %v266
    %v544 = vpack.c.bf16 %v338, %v335
    %v545 = vpack.c.bf16 %v399, %v396
    %v546 = vpack.c.bf16 %v269, %v268
    %v547 = vpack.c.bf16 %v344, %v341
    %v548 = vpack.c.bf16 %v405, %v402
    %v549 = vpack.c.bf16 %v271, %v270
    %v550 = vpack.c.bf16 %v350, %v347
    %v551 = vpack.c.bf16 %v411, %v408
    %v552 = vpack.c.bf16 %v273, %v272
    %v553 = vpack.c.bf16 %v529, %v353
    %v554 = vpack.c.bf16 %v537, %v414
    %v555 = vpack.c.bf16 %v275, %v274
    %v556 = vpack.c.bf16 %v359, %v356
    %v557 = vpack.c.bf16 %v420, %v417
    %v558 = vpack.c.bf16 %v277, %v276
    %v559 = vpack.c.bf16 %v365, %v362
    %v560 = vpack.c.bf16 %v426, %v423
    %v561 = vpack.c.bf16 %v279, %v278
    %v562 = vpack.c.bf16 %v371, %v368
    %v563 = vpack.c.bf16 %v432, %v429
    %v564 = vpack.c.bf16 %v281, %v280
    %v565 = vpack.c.bf16 %v532, %v374
    %v566 = vpack.c.bf16 %v540, %v435
    %s567 = scalar_lea.vmem [#allocation5], 192
    %v568 = vld [vmem:[%s567] sm:$0xf]
    %v569 = vld [vmem:[%s567 + $0x4] sm:$0xf]
    %v570 = vld [vmem:[%s567 + $0x8] sm:$0xf]
    %v571 = vld [vmem:[%s567 + $0xc] sm:$0xf]
    %v572 = vld [vmem:[%s567 + $0x10] sm:$0xf]
    %v573 = vld [vmem:[%s567 + $0x14] sm:$0xf]
    %v574 = vld [vmem:[%s567 + $0x18] sm:$0xf]
    %v575 = vld [vmem:[%s567 + $0x1c] sm:$0xf]
    %v576 = vld [vmem:[%s567 + $0x20] sm:$0xf]
    %v577 = vld [vmem:[%s567 + $0x24] sm:$0xf]
    %v578 = vld [vmem:[%s567 + $0x28] sm:$0xf]
    %v579 = vld [vmem:[%s567 + $0x2c] sm:$0xf]
    %v580 = vld [vmem:[%s567 + $0x30] sm:$0xf]
    %v581 = vld [vmem:[%s567 + $0x34] sm:$0xf]
    %v582 = vld [vmem:[%s567 + $0x38] sm:$0xf]
    %v583 = vld [vmem:[%s567 + $0x3c] sm:$0xf]
    %v584 = vld [vmem:[%s567 + $0x40] sm:$0xf]
    %v585 = vld [vmem:[%s567 + $0x44] sm:$0xf]
    %v586 = vld [vmem:[%s567 + $0x48] sm:$0xf]
    %v587 = vld [vmem:[%s567 + $0x4c] sm:$0xf]
    %v588 = vld [vmem:[%s567 + $0x50] sm:$0xf]
    %v589 = vld [vmem:[%s567 + $0x54] sm:$0xf]
    %v590 = vld [vmem:[%s567 + $0x58] sm:$0xf]
    %v591 = vld [vmem:[%s567 + $0x5c] sm:$0xf]
    %v592 = vld [vmem:[%s567 + $0x60] sm:$0xf]
    %v593 = vld [vmem:[%s567 + $0x64] sm:$0xf]
    %v594 = vld [vmem:[%s567 + $0x68] sm:$0xf]
    %v595 = vld [vmem:[%s567 + $0x6c] sm:$0xf]
    %v596 = vld [vmem:[%s567 + $0x70] sm:$0xf]
    %v597 = vld [vmem:[%s567 + $0x74] sm:$0xf]
    %v598 = vld [vmem:[%s567 + $0x78] sm:$0xf]
    %v599 = vld [vmem:[%s567 + $0x7c] sm:$0xf]
    %v600 = vld [vmem:[%s567 + $0x80] sm:$0xf]
    %v601 = vld [vmem:[%s567 + $0x84] sm:$0xf]
    %v602 = vld [vmem:[%s567 + $0x88] sm:$0xf]
    %v603 = vld [vmem:[%s567 + $0x8c] sm:$0xf]
    %v604 = vld [vmem:[%s567 + $0x90] sm:$0xf]
    %v605 = vld [vmem:[%s567 + $0x94] sm:$0xf]
    %v606 = vld [vmem:[%s567 + $0x98] sm:$0xf]
    %v607 = vld [vmem:[%s567 + $0x9c] sm:$0xf]
    %v608 = vld [vmem:[%s567 + $0xa0] sm:$0xf]
    %v609 = vld [vmem:[%s567 + $0xa4] sm:$0xf]
    %v610 = vld [vmem:[%s567 + $0xa8] sm:$0xf]
    %v611 = vld [vmem:[%s567 + $0xac] sm:$0xf]
    %v612 = vld [vmem:[%s567 + $0xb0] sm:$0xf]
    %v613 = vld [vmem:[%s567 + $0xb4] sm:$0xf]
    %v614 = vld [vmem:[%s567 + $0xb8] sm:$0xf]
    %v615 = vld [vmem:[%s567 + $0xbc] sm:$0xf]
    %v664 = vunpack.c.l.b16 %v568
    %v665 = vunpack.c.l.b16 %v569
    %v666 = vunpack.c.l.b16 %v570
    %v667 = vunpack.c.l.b16 %v571
    %v668 = vunpack.c.l.b16 %v572
    %v669 = vunpack.c.l.b16 %v573
    %v670 = vunpack.c.l.b16 %v574
    %v671 = vunpack.c.l.b16 %v575
    %v672 = vunpack.c.l.b16 %v576
    %v673 = vunpack.c.l.b16 %v577
    %v674 = vunpack.c.l.b16 %v578
    %v675 = vunpack.c.l.b16 %v579
    %v676 = vunpack.c.l.b16 %v580
    %v677 = vunpack.c.l.b16 %v581
    %v678 = vunpack.c.l.b16 %v582
    %v679 = vunpack.c.l.b16 %v583
    %v680 = vunpack.c.l.b16 %v584
    %v681 = vunpack.c.l.b16 %v585
    %v682 = vunpack.c.l.b16 %v586
    %v683 = vunpack.c.l.b16 %v587
    %v684 = vunpack.c.l.b16 %v588
    %v685 = vunpack.c.l.b16 %v589
    %v686 = vunpack.c.l.b16 %v590
    %v687 = vunpack.c.l.b16 %v591
    %v688 = vunpack.c.l.b16 %v592
    %v689 = vunpack.c.l.b16 %v593
    %v690 = vunpack.c.l.b16 %v594
    %v691 = vunpack.c.l.b16 %v595
    %v692 = vunpack.c.l.b16 %v596
    %v693 = vunpack.c.l.b16 %v597
    %v694 = vunpack.c.l.b16 %v598
    %v695 = vunpack.c.l.b16 %v599
    %v696 = vunpack.c.l.b16 %v600
    %v697 = vunpack.c.l.b16 %v601
    %v698 = vunpack.c.l.b16 %v602
    %v699 = vunpack.c.l.b16 %v603
    %v700 = vunpack.c.l.b16 %v604
    %v701 = vunpack.c.l.b16 %v605
    %v702 = vunpack.c.l.b16 %v606
    %v703 = vunpack.c.l.b16 %v607
    %v704 = vunpack.c.l.b16 %v608
    %v705 = vunpack.c.l.b16 %v609
    %v706 = vunpack.c.l.b16 %v610
    %v707 = vunpack.c.l.b16 %v611
    %v708 = vunpack.c.l.b16 %v612
    %v709 = vunpack.c.l.b16 %v613
    %v710 = vunpack.c.l.b16 %v614
    %v711 = vunpack.c.l.b16 %v615
    %v712 = vpack.c.b16 %v665, %v664
    %v713 = vpack.c.b16 %v667, %v666
    %v714 = vpack.c.b16 %v669, %v668
    %v715 = vpack.c.b16 %v671, %v670
    %v716 = vpack.c.b16 %v673, %v672
    %v717 = vpack.c.b16 %v675, %v674
    %v718 = vpack.c.b16 %v677, %v676
    %v719 = vpack.c.b16 %v679, %v678
    %v720 = vpack.c.b16 %v681, %v680
    %v721 = vpack.c.b16 %v683, %v682
    %v722 = vpack.c.b16 %v685, %v684
    %v723 = vpack.c.b16 %v687, %v686
    %v724 = vpack.c.b16 %v689, %v688
    %v725 = vpack.c.b16 %v691, %v690
    %v726 = vpack.c.b16 %v693, %v692
    %v727 = vpack.c.b16 %v695, %v694
    %v728 = vpack.c.b16 %v697, %v696
    %v729 = vpack.c.b16 %v699, %v698
    %v730 = vpack.c.b16 %v701, %v700
    %v731 = vpack.c.b16 %v703, %v702
    %v732 = vpack.c.b16 %v705, %v704
    %v733 = vpack.c.b16 %v707, %v706
    %v734 = vpack.c.b16 %v709, %v708
    %v735 = vpack.c.b16 %v711, %v710
    %760 = vmatpush.bf16.msra.mxu0 %v719
    %761 = vmatpush.bf16.msra.mxu0 %v718
    %762 = vmatpush.bf16.msra.mxu0 %v717
    %763 = vmatpush.bf16.msra.mxu0 %v716
    %764 = vmatpush.bf16.msra.mxu0 %v715
    %765 = vmatpush.bf16.msra.mxu0 %v714
    %766 = vmatpush.bf16.msra.mxu0 %v713
    %767 = vmatpush.bf16.msra.mxu0 %v712
    %768 = vmatmul.bf16.gmra.mxu0 %v543
    %v769 = vpop.f32.mrf.mxu0
    %v770 = vadd.f32 0.0, %v769
    %v771 = vpop.f32.mrf.mxu0
    %v772 = vadd.f32 0.0, %v771
    %773 = vmatmul.bf16.gmra.mxu0 %v546
    %v774 = vpop.f32.mrf.mxu0
    %v775 = vadd.f32 0.0, %v774
    %v776 = vpop.f32.mrf.mxu0
    %v777 = vadd.f32 0.0, %v776
    %778 = vmatmul.bf16.gmra.mxu0 %v549
    %v779 = vpop.f32.mrf.mxu0
    %v780 = vadd.f32 0.0, %v779
    %v781 = vpop.f32.mrf.mxu0
    %v782 = vadd.f32 0.0, %v781
    %783 = vmatmul.bf16.gmra.mxu0 %v552
    %v784 = vpop.f32.mrf.mxu0
    %v785 = vadd.f32 0.0, %v784
    %v786 = vpop.f32.mrf.mxu0
    %v787 = vadd.f32 0.0, %v786
    %788 = vmatmul.bf16.gmra.mxu0 %v555
    %v789 = vpop.f32.mrf.mxu0
    %v790 = vadd.f32 0.0, %v789
    %v791 = vpop.f32.mrf.mxu0
    %v792 = vadd.f32 0.0, %v791
    %793 = vmatmul.bf16.gmra.mxu0 %v558
    %v794 = vpop.f32.mrf.mxu0
    %v795 = vadd.f32 0.0, %v794
    %v796 = vpop.f32.mrf.mxu0
    %v797 = vadd.f32 0.0, %v796
    %798 = vmatmul.bf16.gmra.mxu0 %v561
    %v799 = vpop.f32.mrf.mxu0
    %v800 = vadd.f32 0.0, %v799
    %v801 = vpop.f32.mrf.mxu0
    %v802 = vadd.f32 0.0, %v801
    %803 = vmatmul.bf16.gmra.mxu0 %v564
    %v804 = vpop.f32.mrf.mxu0
    %v805 = vadd.f32 0.0, %v804
    %v806 = vpop.f32.mrf.mxu0
    %v807 = vadd.f32 0.0, %v806
    %808 = vdwg.mxu0
    %809 = vmatpush.bf16.msra.mxu0 %v727
    %810 = vmatpush.bf16.msra.mxu0 %v726
    %811 = vmatpush.bf16.msra.mxu0 %v725
    %812 = vmatpush.bf16.msra.mxu0 %v724
    %813 = vmatpush.bf16.msra.mxu0 %v723
    %814 = vmatpush.bf16.msra.mxu0 %v722
    %815 = vmatpush.bf16.msra.mxu0 %v721
    %816 = vmatpush.bf16.msra.mxu0 %v720
    %817 = vmatmul.bf16.gmra.mxu0 %v544
    %v818 = vpop.f32.mrf.mxu0
    %v819 = vadd.f32 %v770, %v818
    %v820 = vpop.f32.mrf.mxu0
    %v821 = vadd.f32 %v772, %v820
    %822 = vmatmul.bf16.gmra.mxu0 %v547
    %v823 = vpop.f32.mrf.mxu0
    %v824 = vadd.f32 %v775, %v823
    %v825 = vpop.f32.mrf.mxu0
    %v826 = vadd.f32 %v777, %v825
    %827 = vmatmul.bf16.gmra.mxu0 %v550
    %v828 = vpop.f32.mrf.mxu0
    %v829 = vadd.f32 %v780, %v828
    %v830 = vpop.f32.mrf.mxu0
    %v831 = vadd.f32 %v782, %v830
    %832 = vmatmul.bf16.gmra.mxu0 %v553
    %v833 = vpop.f32.mrf.mxu0
    %v834 = vadd.f32 %v785, %v833
    %v835 = vpop.f32.mrf.mxu0
    %v836 = vadd.f32 %v787, %v835
    %837 = vmatmul.bf16.gmra.mxu0 %v556
    %v838 = vpop.f32.mrf.mxu0
    %v839 = vadd.f32 %v790, %v838
    %v840 = vpop.f32.mrf.mxu0
    %v841 = vadd.f32 %v792, %v840
    %842 = vmatmul.bf16.gmra.mxu0 %v559
    %v843 = vpop.f32.mrf.mxu0
    %v844 = vadd.f32 %v795, %v843
    %v845 = vpop.f32.mrf.mxu0
    %v846 = vadd.f32 %v797, %v845
    %847 = vmatmul.bf16.gmra.mxu0 %v562
    %v848 = vpop.f32.mrf.mxu0
    %v849 = vadd.f32 %v800, %v848
    %v850 = vpop.f32.mrf.mxu0
    %v851 = vadd.f32 %v802, %v850
    %852 = vmatmul.bf16.gmra.mxu0 %v565
    %v853 = vpop.f32.mrf.mxu0
    %v854 = vadd.f32 %v805, %v853
    %v855 = vpop.f32.mrf.mxu0
    %v856 = vadd.f32 %v807, %v855
    %857 = vdwg.mxu0
    %858 = vmatpush.bf16.msra.mxu0 %v735
    %859 = vmatpush.bf16.msra.mxu0 %v734
    %860 = vmatpush.bf16.msra.mxu0 %v733
    %861 = vmatpush.bf16.msra.mxu0 %v732
    %862 = vmatpush.bf16.msra.mxu0 %v731
    %863 = vmatpush.bf16.msra.mxu0 %v730
    %864 = vmatpush.bf16.msra.mxu0 %v729
    %865 = vmatpush.bf16.msra.mxu0 %v728
    %866 = vmatmul.bf16.gmra.mxu0 %v545
    %v867 = vpop.f32.mrf.mxu0
    %v868 = vadd.f32 %v819, %v867
    %v869 = vpop.f32.mrf.mxu0
    %v870 = vadd.f32 %v821, %v869
    %871 = vmatmul.bf16.gmra.mxu0 %v548
    %v872 = vpop.f32.mrf.mxu0
    %v873 = vadd.f32 %v824, %v872
    %v874 = vpop.f32.mrf.mxu0
    %v875 = vadd.f32 %v826, %v874
    %876 = vmatmul.bf16.gmra.mxu0 %v551
    %v877 = vpop.f32.mrf.mxu0
    %v878 = vadd.f32 %v829, %v877
    %v879 = vpop.f32.mrf.mxu0
    %v880 = vadd.f32 %v831, %v879
    %881 = vmatmul.bf16.gmra.mxu0 %v554
    %v882 = vpop.f32.mrf.mxu0
    %v883 = vadd.f32 %v834, %v882
    %v884 = vpop.f32.mrf.mxu0
    %v885 = vadd.f32 %v836, %v884
    %886 = vmatmul.bf16.gmra.mxu0 %v557
    %v887 = vpop.f32.mrf.mxu0
    %v888 = vadd.f32 %v839, %v887
    %v889 = vpop.f32.mrf.mxu0
    %v890 = vadd.f32 %v841, %v889
    %891 = vmatmul.bf16.gmra.mxu0 %v560
    %v892 = vpop.f32.mrf.mxu0
    %v893 = vadd.f32 %v844, %v892
    %v894 = vpop.f32.mrf.mxu0
    %v895 = vadd.f32 %v846, %v894
    %896 = vmatmul.bf16.gmra.mxu0 %v563
    %v897 = vpop.f32.mrf.mxu0
    %v898 = vadd.f32 %v849, %v897
    %v899 = vpop.f32.mrf.mxu0
    %v900 = vadd.f32 %v851, %v899
    %901 = vmatmul.bf16.gmra.mxu0 %v566
    %v902 = vpop.f32.mrf.mxu0
    %v903 = vadd.f32 %v854, %v902
    %v904 = vpop.f32.mrf.mxu0
    %v905 = vadd.f32 %v856, %v904
    %906 = vdwg.mxu0
    %v955 = vunpack.c.l.b16 %v475
    %v956 = vunpack.c.l.b16 %v476
    %v957 = vunpack.c.l.b16 %v477
    %v958 = vunpack.c.l.b16 %v478
    %v959 = vunpack.c.l.b16 %v479
    %v960 = vunpack.c.l.b16 %v480
    %v961 = vunpack.c.l.b16 %v481
    %v962 = vunpack.c.l.b16 %v482
    %v963 = vunpack.c.l.b16 %v483
    %v964 = vunpack.c.l.b16 %v484
    %v965 = vunpack.c.l.b16 %v485
    %v966 = vunpack.c.l.b16 %v486
    %v967 = vunpack.c.l.b16 %v487
    %v968 = vunpack.c.l.b16 %v488
    %v969 = vunpack.c.l.b16 %v489
    %v970 = vunpack.c.l.b16 %v490
    %v971 = vunpack.c.l.b16 %v491
    %v972 = vunpack.c.l.b16 %v492
    %v973 = vunpack.c.l.b16 %v493
    %v974 = vunpack.c.l.b16 %v494
    %v975 = vunpack.c.l.b16 %v495
    %v976 = vunpack.c.l.b16 %v496
    %v977 = vunpack.c.l.b16 %v497
    %v978 = vunpack.c.l.b16 %v498
    %v979 = vunpack.c.l.b16 %v499
    %v980 = vunpack.c.l.b16 %v500
    %v981 = vunpack.c.l.b16 %v501
    %v982 = vunpack.c.l.b16 %v502
    %v983 = vunpack.c.l.b16 %v503
    %v984 = vunpack.c.l.b16 %v504
    %v985 = vunpack.c.l.b16 %v505
    %v986 = vunpack.c.l.b16 %v506
    %v987 = vunpack.c.l.b16 %v507
    %v988 = vunpack.c.l.b16 %v508
    %v989 = vunpack.c.l.b16 %v509
    %v990 = vunpack.c.l.b16 %v510
    %v991 = vunpack.c.l.b16 %v511
    %v992 = vunpack.c.l.b16 %v512
    %v993 = vunpack.c.l.b16 %v513
    %v994 = vunpack.c.l.b16 %v514
    %v995 = vunpack.c.l.b16 %v515
    %v996 = vunpack.c.l.b16 %v516
    %v997 = vunpack.c.l.b16 %v517
    %v998 = vunpack.c.l.b16 %v518
    %v999 = vunpack.c.l.b16 %v519
    %v1000 = vunpack.c.l.b16 %v520
    %v1001 = vunpack.c.l.b16 %v521
    %v1002 = vunpack.c.l.b16 %v522
    %v1003 = vpack.c.b16 %v956, %v955
    %v1004 = vpack.c.b16 %v958, %v957
    %v1005 = vpack.c.b16 %v960, %v959
    %v1006 = vpack.c.b16 %v962, %v961
    %v1007 = vpack.c.b16 %v964, %v963
    %v1008 = vpack.c.b16 %v966, %v965
    %v1009 = vpack.c.b16 %v968, %v967
    %v1010 = vpack.c.b16 %v970, %v969
    %v1011 = vpack.c.b16 %v972, %v971
    %v1012 = vpack.c.b16 %v974, %v973
    %v1013 = vpack.c.b16 %v976, %v975
    %v1014 = vpack.c.b16 %v978, %v977
    %v1015 = vpack.c.b16 %v980, %v979
    %v1016 = vpack.c.b16 %v982, %v981
    %v1017 = vpack.c.b16 %v984, %v983
    %v1018 = vpack.c.b16 %v986, %v985
    %v1019 = vpack.c.b16 %v988, %v987
    %v1020 = vpack.c.b16 %v990, %v989
    %v1021 = vpack.c.b16 %v992, %v991
    %v1022 = vpack.c.b16 %v994, %v993
    %v1023 = vpack.c.b16 %v996, %v995
    %v1024 = vpack.c.b16 %v998, %v997
    %v1025 = vpack.c.b16 %v1000, %v999
    %v1026 = vpack.c.b16 %v1002, %v1001
    %1051 = vmatpush.bf16.msra.mxu0 %v1010
    %1052 = vmatpush.bf16.msra.mxu0 %v1009
    %1053 = vmatpush.bf16.msra.mxu0 %v1008
    %1054 = vmatpush.bf16.msra.mxu0 %v1007
    %1055 = vmatpush.bf16.msra.mxu0 %v1006
    %1056 = vmatpush.bf16.msra.mxu0 %v1005
    %1057 = vmatpush.bf16.msra.mxu0 %v1004
    %1058 = vmatpush.bf16.msra.mxu0 %v1003
    %1059 = vmatmul.bf16.gmra.mxu0 %v451
    %v1060 = vpop.f32.mrf.mxu0
    %v1061 = vadd.f32 %v868, %v1060
    %v1062 = vpop.f32.mrf.mxu0
    %v1063 = vadd.f32 %v870, %v1062
    %1064 = vmatmul.bf16.gmra.mxu0 %v454
    %v1065 = vpop.f32.mrf.mxu0
    %v1066 = vadd.f32 %v873, %v1065
    %v1067 = vpop.f32.mrf.mxu0
    %v1068 = vadd.f32 %v875, %v1067
    %1069 = vmatmul.bf16.gmra.mxu0 %v457
    %v1070 = vpop.f32.mrf.mxu0
    %v1071 = vadd.f32 %v878, %v1070
    %v1072 = vpop.f32.mrf.mxu0
    %v1073 = vadd.f32 %v880, %v1072
    %1074 = vmatmul.bf16.gmra.mxu0 %v460
    %v1075 = vpop.f32.mrf.mxu0
    %v1076 = vadd.f32 %v883, %v1075
    %v1077 = vpop.f32.mrf.mxu0
    %v1078 = vadd.f32 %v885, %v1077
    %1079 = vmatmul.bf16.gmra.mxu0 %v463
    %v1080 = vpop.f32.mrf.mxu0
    %v1081 = vadd.f32 %v888, %v1080
    %v1082 = vpop.f32.mrf.mxu0
    %v1083 = vadd.f32 %v890, %v1082
    %1084 = vmatmul.bf16.gmra.mxu0 %v466
    %v1085 = vpop.f32.mrf.mxu0
    %v1086 = vadd.f32 %v893, %v1085
    %v1087 = vpop.f32.mrf.mxu0
    %v1088 = vadd.f32 %v895, %v1087
    %1089 = vmatmul.bf16.gmra.mxu0 %v469
    %v1090 = vpop.f32.mrf.mxu0
    %v1091 = vadd.f32 %v898, %v1090
    %v1092 = vpop.f32.mrf.mxu0
    %v1093 = vadd.f32 %v900, %v1092
    %1094 = vmatmul.bf16.gmra.mxu0 %v472
    %v1095 = vpop.f32.mrf.mxu0
    %v1096 = vadd.f32 %v903, %v1095
    %v1097 = vpop.f32.mrf.mxu0
    %v1098 = vadd.f32 %v905, %v1097
    %1099 = vdwg.mxu0
    %1100 = vmatpush.bf16.msra.mxu0 %v1018
    %1101 = vmatpush.bf16.msra.mxu0 %v1017
    %1102 = vmatpush.bf16.msra.mxu0 %v1016
    %1103 = vmatpush.bf16.msra.mxu0 %v1015
    %1104 = vmatpush.bf16.msra.mxu0 %v1014
    %1105 = vmatpush.bf16.msra.mxu0 %v1013
    %1106 = vmatpush.bf16.msra.mxu0 %v1012
    %1107 = vmatpush.bf16.msra.mxu0 %v1011
    %1108 = vmatmul.bf16.gmra.mxu0 %v452
    %v1109 = vpop.f32.mrf.mxu0
    %v1110 = vadd.f32 %v1061, %v1109
    %v1111 = vpop.f32.mrf.mxu0
    %v1112 = vadd.f32 %v1063, %v1111
    %1113 = vmatmul.bf16.gmra.mxu0 %v455
    %v1114 = vpop.f32.mrf.mxu0
    %v1115 = vadd.f32 %v1066, %v1114
    %v1116 = vpop.f32.mrf.mxu0
    %v1117 = vadd.f32 %v1068, %v1116
    %1118 = vmatmul.bf16.gmra.mxu0 %v458
    %v1119 = vpop.f32.mrf.mxu0
    %v1120 = vadd.f32 %v1071, %v1119
    %v1121 = vpop.f32.mrf.mxu0
    %v1122 = vadd.f32 %v1073, %v1121
    %1123 = vmatmul.bf16.gmra.mxu0 %v461
    %v1124 = vpop.f32.mrf.mxu0
    %v1125 = vadd.f32 %v1076, %v1124
    %v1126 = vpop.f32.mrf.mxu0
    %v1127 = vadd.f32 %v1078, %v1126
    %1128 = vmatmul.bf16.gmra.mxu0 %v464
    %v1129 = vpop.f32.mrf.mxu0
    %v1130 = vadd.f32 %v1081, %v1129
    %v1131 = vpop.f32.mrf.mxu0
    %v1132 = vadd.f32 %v1083, %v1131
    %1133 = vmatmul.bf16.gmra.mxu0 %v467
    %v1134 = vpop.f32.mrf.mxu0
    %v1135 = vadd.f32 %v1086, %v1134
    %v1136 = vpop.f32.mrf.mxu0
    %v1137 = vadd.f32 %v1088, %v1136
    %1138 = vmatmul.bf16.gmra.mxu0 %v470
    %v1139 = vpop.f32.mrf.mxu0
    %v1140 = vadd.f32 %v1091, %v1139
    %v1141 = vpop.f32.mrf.mxu0
    %v1142 = vadd.f32 %v1093, %v1141
    %1143 = vmatmul.bf16.gmra.mxu0 %v473
    %v1144 = vpop.f32.mrf.mxu0
    %v1145 = vadd.f32 %v1096, %v1144
    %v1146 = vpop.f32.mrf.mxu0
    %v1147 = vadd.f32 %v1098, %v1146
    %1148 = vdwg.mxu0
    %1149 = vmatpush.bf16.msra.mxu0 %v1026
    %1150 = vmatpush.bf16.msra.mxu0 %v1025
    %1151 = vmatpush.bf16.msra.mxu0 %v1024
    %1152 = vmatpush.bf16.msra.mxu0 %v1023
    %1153 = vmatpush.bf16.msra.mxu0 %v1022
    %1154 = vmatpush.bf16.msra.mxu0 %v1021
    %1155 = vmatpush.bf16.msra.mxu0 %v1020
    %1156 = vmatpush.bf16.msra.mxu0 %v1019
    %1157 = vmatmul.bf16.gmra.mxu0 %v453
    %v1158 = vpop.f32.mrf.mxu0
    %v1159 = vadd.f32 %v1110, %v1158
    %v1160 = vpop.f32.mrf.mxu0
    %v1161 = vadd.f32 %v1112, %v1160
    %1162 = vmatmul.bf16.gmra.mxu0 %v456
    %v1163 = vpop.f32.mrf.mxu0
    %v1164 = vadd.f32 %v1115, %v1163
    %v1165 = vpop.f32.mrf.mxu0
    %v1166 = vadd.f32 %v1117, %v1165
    %1167 = vmatmul.bf16.gmra.mxu0 %v459
    %v1168 = vpop.f32.mrf.mxu0
    %v1169 = vadd.f32 %v1120, %v1168
    %v1170 = vpop.f32.mrf.mxu0
    %v1171 = vadd.f32 %v1122, %v1170
    %1172 = vmatmul.bf16.gmra.mxu0 %v462
    %v1173 = vpop.f32.mrf.mxu0
    %v1174 = vadd.f32 %v1125, %v1173
    %v1175 = vpop.f32.mrf.mxu0
    %v1176 = vadd.f32 %v1127, %v1175
    %1177 = vmatmul.bf16.gmra.mxu0 %v465
    %v1178 = vpop.f32.mrf.mxu0
    %v1179 = vadd.f32 %v1130, %v1178
    %v1180 = vpop.f32.mrf.mxu0
    %v1181 = vadd.f32 %v1132, %v1180
    %1182 = vmatmul.bf16.gmra.mxu0 %v468
    %v1183 = vpop.f32.mrf.mxu0
    %v1184 = vadd.f32 %v1135, %v1183
    %v1185 = vpop.f32.mrf.mxu0
    %v1186 = vadd.f32 %v1137, %v1185
    %1187 = vmatmul.bf16.gmra.mxu0 %v471
    %v1188 = vpop.f32.mrf.mxu0
    %v1189 = vadd.f32 %v1140, %v1188
    %v1190 = vpop.f32.mrf.mxu0
    %v1191 = vadd.f32 %v1142, %v1190
    %1192 = vmatmul.bf16.gmra.mxu0 %v474
    %v1193 = vpop.f32.mrf.mxu0
    %v1194 = vadd.f32 %v1145, %v1193
    %v1195 = vpop.f32.mrf.mxu0
    %v1196 = vadd.f32 %v1147, %v1195
    %1197 = vdwg.mxu0
    %v1198 = vpack.c.bf16 %v265, %v273
    %v1199 = vpack.c.bf16 %v332, %v529
    %v1200 = vpack.c.bf16 %v393, %v537
    %v1201 = vpack.c.bf16 %v265, %v281
    %v1202 = vpack.c.bf16 %v332, %v532
    %v1203 = vpack.c.bf16 %v393, %v540
    %s1204 = scalar_lea.vmem [#allocation5], 384
    %v1205 = vld [vmem:[%s1204] sm:$0xf]
    %v1206 = vld [vmem:[%s1204 + $0x4] sm:$0xf]
    %v1207 = vld [vmem:[%s1204 + $0x8] sm:$0xf]
    %v1208 = vld [vmem:[%s1204 + $0xc] sm:$0xf]
    %v1209 = vld [vmem:[%s1204 + $0x10] sm:$0xf]
    %v1210 = vld [vmem:[%s1204 + $0x14] sm:$0xf]
    %v1211 = vld [vmem:[%s1204 + $0x18] sm:$0xf]
    %v1212 = vld [vmem:[%s1204 + $0x1c] sm:$0xf]
    %v1213 = vld [vmem:[%s1204 + $0x20] sm:$0xf]
    %v1214 = vld [vmem:[%s1204 + $0x24] sm:$0xf]
    %v1215 = vld [vmem:[%s1204 + $0x28] sm:$0xf]
    %v1216 = vld [vmem:[%s1204 + $0x2c] sm:$0xf]
    %v1217 = vld [vmem:[%s1204 + $0x30] sm:$0xf]
    %v1218 = vld [vmem:[%s1204 + $0x34] sm:$0xf]
    %v1219 = vld [vmem:[%s1204 + $0x38] sm:$0xf]
    %v1220 = vld [vmem:[%s1204 + $0x3c] sm:$0xf]
    %v1221 = vld [vmem:[%s1204 + $0x40] sm:$0xf]
    %v1222 = vld [vmem:[%s1204 + $0x44] sm:$0xf]
    %v1223 = vld [vmem:[%s1204 + $0x48] sm:$0xf]
    %v1224 = vld [vmem:[%s1204 + $0x4c] sm:$0xf]
    %v1225 = vld [vmem:[%s1204 + $0x50] sm:$0xf]
    %v1226 = vld [vmem:[%s1204 + $0x54] sm:$0xf]
    %v1227 = vld [vmem:[%s1204 + $0x58] sm:$0xf]
    %v1228 = vld [vmem:[%s1204 + $0x5c] sm:$0xf]
    %v1229 = vld [vmem:[%s1204 + $0x60] sm:$0xf]
    %v1230 = vld [vmem:[%s1204 + $0x64] sm:$0xf]
    %v1231 = vld [vmem:[%s1204 + $0x68] sm:$0xf]
    %v1232 = vld [vmem:[%s1204 + $0x6c] sm:$0xf]
    %v1233 = vld [vmem:[%s1204 + $0x70] sm:$0xf]
    %v1234 = vld [vmem:[%s1204 + $0x74] sm:$0xf]
    %v1235 = vld [vmem:[%s1204 + $0x78] sm:$0xf]
    %v1236 = vld [vmem:[%s1204 + $0x7c] sm:$0xf]
    %v1237 = vld [vmem:[%s1204 + $0x80] sm:$0xf]
    %v1238 = vld [vmem:[%s1204 + $0x84] sm:$0xf]
    %v1239 = vld [vmem:[%s1204 + $0x88] sm:$0xf]
    %v1240 = vld [vmem:[%s1204 + $0x8c] sm:$0xf]
    %v1241 = vld [vmem:[%s1204 + $0x90] sm:$0xf]
    %v1242 = vld [vmem:[%s1204 + $0x94] sm:$0xf]
    %v1243 = vld [vmem:[%s1204 + $0x98] sm:$0xf]
    %v1244 = vld [vmem:[%s1204 + $0x9c] sm:$0xf]
    %v1245 = vld [vmem:[%s1204 + $0xa0] sm:$0xf]
    %v1246 = vld [vmem:[%s1204 + $0xa4] sm:$0xf]
    %v1247 = vld [vmem:[%s1204 + $0xa8] sm:$0xf]
    %v1248 = vld [vmem:[%s1204 + $0xac] sm:$0xf]
    %v1249 = vld [vmem:[%s1204 + $0xb0] sm:$0xf]
    %v1250 = vld [vmem:[%s1204 + $0xb4] sm:$0xf]
    %v1251 = vld [vmem:[%s1204 + $0xb8] sm:$0xf]
    %v1252 = vld [vmem:[%s1204 + $0xbc] sm:$0xf]
    %v1301 = vunpack.c.l.b16 %v1205
    %v1302 = vunpack.c.l.b16 %v1206
    %v1303 = vunpack.c.l.b16 %v1207
    %v1304 = vunpack.c.l.b16 %v1208
    %v1305 = vunpack.c.l.b16 %v1209
    %v1306 = vunpack.c.l.b16 %v1210
    %v1307 = vunpack.c.l.b16 %v1211
    %v1308 = vunpack.c.l.b16 %v1212
    %v1309 = vunpack.c.l.b16 %v1213
    %v1310 = vunpack.c.l.b16 %v1214
    %v1311 = vunpack.c.l.b16 %v1215
    %v1312 = vunpack.c.l.b16 %v1216
    %v1313 = vunpack.c.l.b16 %v1217
    %v1314 = vunpack.c.l.b16 %v1218
    %v1315 = vunpack.c.l.b16 %v1219
    %v1316 = vunpack.c.l.b16 %v1220
    %v1317 = vunpack.c.l.b16 %v1221
    %v1318 = vunpack.c.l.b16 %v1222
    %v1319 = vunpack.c.l.b16 %v1223
    %v1320 = vunpack.c.l.b16 %v1224
    %v1321 = vunpack.c.l.b16 %v1225
    %v1322 = vunpack.c.l.b16 %v1226
    %v1323 = vunpack.c.l.b16 %v1227
    %v1324 = vunpack.c.l.b16 %v1228
    %v1325 = vunpack.c.l.b16 %v1229
    %v1326 = vunpack.c.l.b16 %v1230
    %v1327 = vunpack.c.l.b16 %v1231
    %v1328 = vunpack.c.l.b16 %v1232
    %v1329 = vunpack.c.l.b16 %v1233
    %v1330 = vunpack.c.l.b16 %v1234
    %v1331 = vunpack.c.l.b16 %v1235
    %v1332 = vunpack.c.l.b16 %v1236
    %v1333 = vunpack.c.l.b16 %v1237
    %v1334 = vunpack.c.l.b16 %v1238
    %v1335 = vunpack.c.l.b16 %v1239
    %v1336 = vunpack.c.l.b16 %v1240
    %v1337 = vunpack.c.l.b16 %v1241
    %v1338 = vunpack.c.l.b16 %v1242
    %v1339 = vunpack.c.l.b16 %v1243
    %v1340 = vunpack.c.l.b16 %v1244
    %v1341 = vunpack.c.l.b16 %v1245
    %v1342 = vunpack.c.l.b16 %v1246
    %v1343 = vunpack.c.l.b16 %v1247
    %v1344 = vunpack.c.l.b16 %v1248
    %v1345 = vunpack.c.l.b16 %v1249
    %v1346 = vunpack.c.l.b16 %v1250
    %v1347 = vunpack.c.l.b16 %v1251
    %v1348 = vunpack.c.l.b16 %v1252
    %v1349 = vpack.c.b16 %v1302, %v1301
    %v1350 = vpack.c.b16 %v1304, %v1303
    %v1351 = vpack.c.b16 %v1306, %v1305
    %v1352 = vpack.c.b16 %v1308, %v1307
    %v1353 = vpack.c.b16 %v1310, %v1309
    %v1354 = vpack.c.b16 %v1312, %v1311
    %v1355 = vpack.c.b16 %v1314, %v1313
    %v1356 = vpack.c.b16 %v1316, %v1315
    %v1357 = vpack.c.b16 %v1318, %v1317
    %v1358 = vpack.c.b16 %v1320, %v1319
    %v1359 = vpack.c.b16 %v1322, %v1321
    %v1360 = vpack.c.b16 %v1324, %v1323
    %v1361 = vpack.c.b16 %v1326, %v1325
    %v1362 = vpack.c.b16 %v1328, %v1327
    %v1363 = vpack.c.b16 %v1330, %v1329
    %v1364 = vpack.c.b16 %v1332, %v1331
    %v1365 = vpack.c.b16 %v1334, %v1333
    %v1366 = vpack.c.b16 %v1336, %v1335
    %v1367 = vpack.c.b16 %v1338, %v1337
    %v1368 = vpack.c.b16 %v1340, %v1339
    %v1369 = vpack.c.b16 %v1342, %v1341
    %v1370 = vpack.c.b16 %v1344, %v1343
    %v1371 = vpack.c.b16 %v1346, %v1345
    %v1372 = vpack.c.b16 %v1348, %v1347
    %1397 = vmatpush.bf16.msra.mxu0 %v1356
    %1398 = vmatpush.bf16.msra.mxu0 %v1355
    %1399 = vmatpush.bf16.msra.mxu0 %v1354
    %1400 = vmatpush.bf16.msra.mxu0 %v1353
    %1401 = vmatpush.bf16.msra.mxu0 %v1352
    %1402 = vmatpush.bf16.msra.mxu0 %v1351
    %1403 = vmatpush.bf16.msra.mxu0 %v1350
    %1404 = vmatpush.bf16.msra.mxu0 %v1349
    %1405 = vmatmul.bf16.gmra.mxu0 %v454
    %v1406 = vpop.f32.mrf.mxu0
    %v1407 = vadd.f32 0.0, %v1406
    %v1408 = vpop.f32.mrf.mxu0
    %v1409 = vadd.f32 0.0, %v1408
    %1410 = vmatmul.bf16.gmra.mxu0 %v457
    %v1411 = vpop.f32.mrf.mxu0
    %v1412 = vadd.f32 0.0, %v1411
    %v1413 = vpop.f32.mrf.mxu0
    %v1414 = vadd.f32 0.0, %v1413
    %1415 = vmatmul.bf16.gmra.mxu0 %v460
    %v1416 = vpop.f32.mrf.mxu0
    %v1417 = vadd.f32 0.0, %v1416
    %v1418 = vpop.f32.mrf.mxu0
    %v1419 = vadd.f32 0.0, %v1418
    %1420 = vmatmul.bf16.gmra.mxu0 %v1198
    %v1421 = vpop.f32.mrf.mxu0
    %v1422 = vadd.f32 0.0, %v1421
    %v1423 = vpop.f32.mrf.mxu0
    %v1424 = vadd.f32 0.0, %v1423
    %1425 = vmatmul.bf16.gmra.mxu0 %v466
    %v1426 = vpop.f32.mrf.mxu0
    %v1427 = vadd.f32 0.0, %v1426
    %v1428 = vpop.f32.mrf.mxu0
    %v1429 = vadd.f32 0.0, %v1428
    %1430 = vmatmul.bf16.gmra.mxu0 %v469
    %v1431 = vpop.f32.mrf.mxu0
    %v1432 = vadd.f32 0.0, %v1431
    %v1433 = vpop.f32.mrf.mxu0
    %v1434 = vadd.f32 0.0, %v1433
    %1435 = vmatmul.bf16.gmra.mxu0 %v472
    %v1436 = vpop.f32.mrf.mxu0
    %v1437 = vadd.f32 0.0, %v1436
    %v1438 = vpop.f32.mrf.mxu0
    %v1439 = vadd.f32 0.0, %v1438
    %1440 = vmatmul.bf16.gmra.mxu0 %v1201
    %v1441 = vpop.f32.mrf.mxu0
    %v1442 = vadd.f32 0.0, %v1441
    %v1443 = vpop.f32.mrf.mxu0
    %v1444 = vadd.f32 0.0, %v1443
    %1445 = vdwg.mxu0
    %1446 = vmatpush.bf16.msra.mxu0 %v1364
    %1447 = vmatpush.bf16.msra.mxu0 %v1363
    %1448 = vmatpush.bf16.msra.mxu0 %v1362
    %1449 = vmatpush.bf16.msra.mxu0 %v1361
    %1450 = vmatpush.bf16.msra.mxu0 %v1360
    %1451 = vmatpush.bf16.msra.mxu0 %v1359
    %1452 = vmatpush.bf16.msra.mxu0 %v1358
    %1453 = vmatpush.bf16.msra.mxu0 %v1357
    %1454 = vmatmul.bf16.gmra.mxu0 %v455
    %v1455 = vpop.f32.mrf.mxu0
    %v1456 = vadd.f32 %v1407, %v1455
    %v1457 = vpop.f32.mrf.mxu0
    %v1458 = vadd.f32 %v1409, %v1457
    %1459 = vmatmul.bf16.gmra.mxu0 %v458
    %v1460 = vpop.f32.mrf.mxu0
    %v1461 = vadd.f32 %v1412, %v1460
    %v1462 = vpop.f32.mrf.mxu0
    %v1463 = vadd.f32 %v1414, %v1462
    %1464 = vmatmul.bf16.gmra.mxu0 %v461
    %v1465 = vpop.f32.mrf.mxu0
    %v1466 = vadd.f32 %v1417, %v1465
    %v1467 = vpop.f32.mrf.mxu0
    %v1468 = vadd.f32 %v1419, %v1467
    %1469 = vmatmul.bf16.gmra.mxu0 %v1199
    %v1470 = vpop.f32.mrf.mxu0
    %v1471 = vadd.f32 %v1422, %v1470
    %v1472 = vpop.f32.mrf.mxu0
    %v1473 = vadd.f32 %v1424, %v1472
    %1474 = vmatmul.bf16.gmra.mxu0 %v467
    %v1475 = vpop.f32.mrf.mxu0
    %v1476 = vadd.f32 %v1427, %v1475
    %v1477 = vpop.f32.mrf.mxu0
    %v1478 = vadd.f32 %v1429, %v1477
    %1479 = vmatmul.bf16.gmra.mxu0 %v470
    %v1480 = vpop.f32.mrf.mxu0
    %v1481 = vadd.f32 %v1432, %v1480
    %v1482 = vpop.f32.mrf.mxu0
    %v1483 = vadd.f32 %v1434, %v1482
    %1484 = vmatmul.bf16.gmra.mxu0 %v473
    %v1485 = vpop.f32.mrf.mxu0
    %v1486 = vadd.f32 %v1437, %v1485
    %v1487 = vpop.f32.mrf.mxu0
    %v1488 = vadd.f32 %v1439, %v1487
    %1489 = vmatmul.bf16.gmra.mxu0 %v1202
    %v1490 = vpop.f32.mrf.mxu0
    %v1491 = vadd.f32 %v1442, %v1490
    %v1492 = vpop.f32.mrf.mxu0
    %v1493 = vadd.f32 %v1444, %v1492
    %1494 = vdwg.mxu0
    %1495 = vmatpush.bf16.msra.mxu0 %v1372
    %1496 = vmatpush.bf16.msra.mxu0 %v1371
    %1497 = vmatpush.bf16.msra.mxu0 %v1370
    %1498 = vmatpush.bf16.msra.mxu0 %v1369
    %1499 = vmatpush.bf16.msra.mxu0 %v1368
    %1500 = vmatpush.bf16.msra.mxu0 %v1367
    %1501 = vmatpush.bf16.msra.mxu0 %v1366
    %1502 = vmatpush.bf16.msra.mxu0 %v1365
    %1503 = vmatmul.bf16.gmra.mxu0 %v456
    %v1504 = vpop.f32.mrf.mxu0
    %v1505 = vadd.f32 %v1456, %v1504
    %v1506 = vpop.f32.mrf.mxu0
    %v1507 = vadd.f32 %v1458, %v1506
    %1508 = vmatmul.bf16.gmra.mxu0 %v459
    %v1509 = vpop.f32.mrf.mxu0
    %v1510 = vadd.f32 %v1461, %v1509
    %v1511 = vpop.f32.mrf.mxu0
    %v1512 = vadd.f32 %v1463, %v1511
    %1513 = vmatmul.bf16.gmra.mxu0 %v462
    %v1514 = vpop.f32.mrf.mxu0
    %v1515 = vadd.f32 %v1466, %v1514
    %v1516 = vpop.f32.mrf.mxu0
    %v1517 = vadd.f32 %v1468, %v1516
    %1518 = vmatmul.bf16.gmra.mxu0 %v1200
    %v1519 = vpop.f32.mrf.mxu0
    %v1520 = vadd.f32 %v1471, %v1519
    %v1521 = vpop.f32.mrf.mxu0
    %v1522 = vadd.f32 %v1473, %v1521
    %1523 = vmatmul.bf16.gmra.mxu0 %v468
    %v1524 = vpop.f32.mrf.mxu0
    %v1525 = vadd.f32 %v1476, %v1524
    %v1526 = vpop.f32.mrf.mxu0
    %v1527 = vadd.f32 %v1478, %v1526
    %1528 = vmatmul.bf16.gmra.mxu0 %v471
    %v1529 = vpop.f32.mrf.mxu0
    %v1530 = vadd.f32 %v1481, %v1529
    %v1531 = vpop.f32.mrf.mxu0
    %v1532 = vadd.f32 %v1483, %v1531
    %1533 = vmatmul.bf16.gmra.mxu0 %v474
    %v1534 = vpop.f32.mrf.mxu0
    %v1535 = vadd.f32 %v1486, %v1534
    %v1536 = vpop.f32.mrf.mxu0
    %v1537 = vadd.f32 %v1488, %v1536
    %1538 = vmatmul.bf16.gmra.mxu0 %v1203
    %v1539 = vpop.f32.mrf.mxu0
    %v1540 = vadd.f32 %v1491, %v1539
    %v1541 = vpop.f32.mrf.mxu0
    %v1542 = vadd.f32 %v1493, %v1541
    %1543 = vdwg.mxu0
    %v1544 = vadd.f32 %v1159, %v1505
    %v1545 = vadd.f32 %v1161, %v1507
    %v1546 = vadd.f32 %v1164, %v1510
    %v1547 = vadd.f32 %v1166, %v1512
    %v1548 = vadd.f32 %v1169, %v1515
    %v1549 = vadd.f32 %v1171, %v1517
    %v1550 = vadd.f32 %v1174, %v1520
    %v1551 = vadd.f32 %v1176, %v1522
    %v1552 = vadd.f32 %v1179, %v1525
    %v1553 = vadd.f32 %v1181, %v1527
    %v1554 = vadd.f32 %v1184, %v1530
    %v1555 = vadd.f32 %v1186, %v1532
    %v1556 = vadd.f32 %v1189, %v1535
    %v1557 = vadd.f32 %v1191, %v1537
    %v1558 = vadd.f32 %v1194, %v1540
    %v1559 = vadd.f32 %v1196, %v1542
    %v1561 = vperm.slane %v212, 0
    %v1563 = vadd.f32 %v1544, %v1561
    %v1564 = vadd.f32 %v1545, %v1561
    %v1565 = vadd.f32 %v1546, %v1561
    %v1566 = vadd.f32 %v1547, %v1561
    %v1567 = vadd.f32 %v1548, %v1561
    %v1568 = vadd.f32 %v1549, %v1561
    %v1569 = vadd.f32 %v1550, %v1561
    %v1570 = vadd.f32 %v1551, %v1561
    %v1571 = vadd.f32 %v1552, %v1561
    %v1572 = vadd.f32 %v1553, %v1561
    %v1573 = vadd.f32 %v1554, %v1561
    %v1574 = vadd.f32 %v1555, %v1561
    %v1575 = vadd.f32 %v1556, %v1561
    %v1576 = vadd.f32 %v1557, %v1561
    %v1577 = vadd.f32 %v1558, %v1561
    %v1578 = vadd.f32 %v1559, %v1561
    %v1579 = vmax.f32 %v1563, 0.0
    %v1580 = vmax.f32 %v1564, 0.0
    %v1581 = vmax.f32 %v1565, 0.0
    %v1582 = vmax.f32 %v1566, 0.0
    %v1583 = vmax.f32 %v1567, 0.0
    %v1584 = vmax.f32 %v1568, 0.0
    %v1585 = vmax.f32 %v1569, 0.0
    %v1586 = vmax.f32 %v1570, 0.0
    %v1587 = vmax.f32 %v1571, 0.0
    %v1588 = vmax.f32 %v1572, 0.0
    %v1589 = vmax.f32 %v1573, 0.0
    %v1590 = vmax.f32 %v1574, 0.0
    %v1591 = vmax.f32 %v1575, 0.0
    %v1592 = vmax.f32 %v1576, 0.0
    %v1593 = vmax.f32 %v1577, 0.0
    %v1594 = vmax.f32 %v1578, 0.0
    %v1595 = vld [vmem:[%s4] sm:$0x1]
    %v1612 = vrot.slane %v1579, 7
    %v1613 = vrot.slane %v1580, 7
    %v1614 = vrot.slane %v1581, 7
    %v1615 = vrot.slane %v1582, 7
    %v1616 = vrot.slane %v1583, 7
    %v1617 = vrot.slane %v1584, 7
    %v1618 = vrot.slane %v1585, 7
    %v1619 = vrot.slane %v1586, 7
    %v1620 = vrot.slane %v1587, 7
    %v1621 = vrot.slane %v1588, 7
    %v1622 = vrot.slane %v1589, 7
    %v1623 = vrot.slane %v1590, 7
    %v1624 = vrot.slane %v1591, 7
    %v1625 = vrot.slane %v1592, 7
    %v1626 = vrot.slane %v1593, 7
    %v1627 = vrot.slane %v1594, 7
    %v1644 = vsel %vm264, 0.0, %v1612
    %v1645 = vsel %vm264, 0.0, %v1613
    %v1646 = vsel %vm264, 0.0, %v1614
    %v1647 = vsel %vm264, 0.0, %v1615
    %v1648 = vsel %vm264, 0.0, %v1616
    %v1649 = vsel %vm264, 0.0, %v1617
    %v1650 = vsel %vm264, 0.0, %v1618
    %v1651 = vsel %vm264, 0.0, %v1619
    %v1652 = vsel %vm264, 0.0, %v1620
    %v1653 = vsel %vm264, 0.0, %v1621
    %v1654 = vsel %vm264, 0.0, %v1622
    %v1655 = vsel %vm264, 0.0, %v1623
    %v1656 = vsel %vm264, 0.0, %v1624
    %v1657 = vsel %vm264, 0.0, %v1625
    %v1658 = vsel %vm264, 0.0, %v1626
    %v1659 = vsel %vm264, 0.0, %v1627
    %v1660 = vsel %vm264, %v1612, 0.0
    %v1661 = vsel %vm264, %v1613, 0.0
    %v1662 = vsel %vm264, %v1614, 0.0
    %v1663 = vsel %vm264, %v1615, 0.0
    %v1664 = vsel %vm264, %v1616, 0.0
    %v1665 = vsel %vm264, %v1617, 0.0
    %v1666 = vsel %vm264, %v1618, 0.0
    %v1667 = vsel %vm264, %v1619, 0.0
    %v1668 = vsel %vm264, %v1620, 0.0
    %v1669 = vsel %vm264, %v1621, 0.0
    %v1670 = vsel %vm264, %v1622, 0.0
    %v1671 = vsel %vm264, %v1623, 0.0
    %v1672 = vsel %vm264, %v1624, 0.0
    %v1673 = vsel %vm264, %v1625, 0.0
    %v1674 = vsel %vm264, %v1626, 0.0
    %v1675 = vsel %vm264, %v1627, 0.0
    %v1704 = vrot.slane %v1644, 1
    %v1705 = vrot.slane %v1660, 1
    %v1706 = vsel %vm329, %v1704, %v1705
    %v1707 = vrot.slane %v1645, 1
    %v1708 = vrot.slane %v1661, 1
    %v1709 = vsel %vm329, %v1707, %v1708
    %v1710 = vrot.slane %v1646, 1
    %v1711 = vrot.slane %v1662, 1
    %v1712 = vsel %vm329, %v1710, %v1711
    %v1713 = vrot.slane %v1647, 1
    %v1714 = vrot.slane %v1663, 1
    %v1715 = vsel %vm329, %v1713, %v1714
    %v1716 = vrot.slane %v1648, 1
    %v1717 = vrot.slane %v1664, 1
    %v1718 = vsel %vm329, %v1716, %v1717
    %v1719 = vrot.slane %v1649, 1
    %v1720 = vrot.slane %v1665, 1
    %v1721 = vsel %vm329, %v1719, %v1720
    %v1722 = vrot.slane %v1650, 1
    %v1723 = vrot.slane %v1666, 1
    %v1724 = vsel %vm329, %v1722, %v1723
    %v1725 = vrot.slane %v1652, 1
    %v1726 = vrot.slane %v1668, 1
    %v1727 = vsel %vm329, %v1725, %v1726
    %v1728 = vrot.slane %v1653, 1
    %v1729 = vrot.slane %v1669, 1
    %v1730 = vsel %vm329, %v1728, %v1729
    %v1731 = vrot.slane %v1654, 1
    %v1732 = vrot.slane %v1670, 1
    %v1733 = vsel %vm329, %v1731, %v1732
    %v1734 = vrot.slane %v1655, 1
    %v1735 = vrot.slane %v1671, 1
    %v1736 = vsel %vm329, %v1734, %v1735
    %v1737 = vrot.slane %v1656, 1
    %v1738 = vrot.slane %v1672, 1
    %v1739 = vsel %vm329, %v1737, %v1738
    %v1740 = vrot.slane %v1657, 1
    %v1741 = vrot.slane %v1673, 1
    %v1742 = vsel %vm329, %v1740, %v1741
    %v1743 = vrot.slane %v1658, 1
    %v1744 = vrot.slane %v1674, 1
    %v1745 = vsel %vm329, %v1743, %v1744
    %v1760 = vrot.slane %v1644, 2
    %v1761 = vrot.slane %v1660, 2
    %v1762 = vsel %vm390, %v1760, %v1761
    %v1763 = vrot.slane %v1645, 2
    %v1764 = vrot.slane %v1661, 2
    %v1765 = vsel %vm390, %v1763, %v1764
    %v1766 = vrot.slane %v1646, 2
    %v1767 = vrot.slane %v1662, 2
    %v1768 = vsel %vm390, %v1766, %v1767
    %v1769 = vrot.slane %v1647, 2
    %v1770 = vrot.slane %v1663, 2
    %v1771 = vsel %vm390, %v1769, %v1770
    %v1772 = vrot.slane %v1648, 2
    %v1773 = vrot.slane %v1664, 2
    %v1774 = vsel %vm390, %v1772, %v1773
    %v1775 = vrot.slane %v1649, 2
    %v1776 = vrot.slane %v1665, 2
    %v1777 = vsel %vm390, %v1775, %v1776
    %v1778 = vrot.slane %v1650, 2
    %v1779 = vrot.slane %v1666, 2
    %v1780 = vsel %vm390, %v1778, %v1779
    %v1781 = vrot.slane %v1652, 2
    %v1782 = vrot.slane %v1668, 2
    %v1783 = vsel %vm390, %v1781, %v1782
    %v1784 = vrot.slane %v1653, 2
    %v1785 = vrot.slane %v1669, 2
    %v1786 = vsel %vm390, %v1784, %v1785
    %v1787 = vrot.slane %v1654, 2
    %v1788 = vrot.slane %v1670, 2
    %v1789 = vsel %vm390, %v1787, %v1788
    %v1790 = vrot.slane %v1655, 2
    %v1791 = vrot.slane %v1671, 2
    %v1792 = vsel %vm390, %v1790, %v1791
    %v1793 = vrot.slane %v1656, 2
    %v1794 = vrot.slane %v1672, 2
    %v1795 = vsel %vm390, %v1793, %v1794
    %v1796 = vrot.slane %v1657, 2
    %v1797 = vrot.slane %v1673, 2
    %v1798 = vsel %vm390, %v1796, %v1797
    %v1799 = vrot.slane %v1658, 2
    %v1800 = vrot.slane %v1674, 2
    %v1801 = vsel %vm390, %v1799, %v1800
    %v1816 = vpack.c.bf16 %v1644, %v265
    %v1817 = vpack.c.bf16 %v1706, %v332
    %v1818 = vpack.c.bf16 %v1762, %v393
    %v1819 = vpack.c.bf16 %v1646, %v1645
    %v1820 = vpack.c.bf16 %v1712, %v1709
    %v1821 = vpack.c.bf16 %v1768, %v1765
    %v1822 = vpack.c.bf16 %v1648, %v1647
    %v1823 = vpack.c.bf16 %v1718, %v1715
    %v1824 = vpack.c.bf16 %v1774, %v1771
    %v1825 = vpack.c.bf16 %v1650, %v1649
    %v1826 = vpack.c.bf16 %v1724, %v1721
    %v1827 = vpack.c.bf16 %v1780, %v1777
    %v1828 = vpack.c.bf16 %v1652, %v265
    %v1829 = vpack.c.bf16 %v1727, %v332
    %v1830 = vpack.c.bf16 %v1783, %v393
    %v1831 = vpack.c.bf16 %v1654, %v1653
    %v1832 = vpack.c.bf16 %v1733, %v1730
    %v1833 = vpack.c.bf16 %v1789, %v1786
    %v1834 = vpack.c.bf16 %v1656, %v1655
    %v1835 = vpack.c.bf16 %v1739, %v1736
    %v1836 = vpack.c.bf16 %v1795, %v1792
    %v1837 = vpack.c.bf16 %v1658, %v1657
    %v1838 = vpack.c.bf16 %v1745, %v1742
    %v1839 = vpack.c.bf16 %v1801, %v1798
    %v1840 = vld [vmem:[#allocation7] sm:$0xf]
    %v1841 = vld [vmem:[#allocation7 + $0x4] sm:$0xf]
    %v1842 = vld [vmem:[#allocation7 + $0x8] sm:$0xf]
    %v1843 = vld [vmem:[#allocation7 + $0xc] sm:$0xf]
    %v1844 = vld [vmem:[#allocation7 + $0x10] sm:$0xf]
    %v1845 = vld [vmem:[#allocation7 + $0x14] sm:$0xf]
    %v1846 = vld [vmem:[#allocation7 + $0x18] sm:$0xf]
    %v1847 = vld [vmem:[#allocation7 + $0x1c] sm:$0xf]
    %v1848 = vld [vmem:[#allocation7 + $0x20] sm:$0xf]
    %v1849 = vld [vmem:[#allocation7 + $0x24] sm:$0xf]
    %v1850 = vld [vmem:[#allocation7 + $0x28] sm:$0xf]
    %v1851 = vld [vmem:[#allocation7 + $0x2c] sm:$0xf]
    %v1852 = vld [vmem:[#allocation7 + $0x30] sm:$0xf]
    %v1853 = vld [vmem:[#allocation7 + $0x34] sm:$0xf]
    %v1854 = vld [vmem:[#allocation7 + $0x38] sm:$0xf]
    %v1855 = vld [vmem:[#allocation7 + $0x3c] sm:$0xf]
    %v1856 = vld [vmem:[#allocation7 + $0x40] sm:$0xf]
    %v1857 = vld [vmem:[#allocation7 + $0x44] sm:$0xf]
    %v1858 = vld [vmem:[#allocation7 + $0x48] sm:$0xf]
    %v1859 = vld [vmem:[#allocation7 + $0x4c] sm:$0xf]
    %v1860 = vld [vmem:[#allocation7 + $0x50] sm:$0xf]
    %v1861 = vld [vmem:[#allocation7 + $0x54] sm:$0xf]
    %v1862 = vld [vmem:[#allocation7 + $0x58] sm:$0xf]
    %v1863 = vld [vmem:[#allocation7 + $0x5c] sm:$0xf]
    %v1864 = vld [vmem:[#allocation7 + $0x60] sm:$0xf]
    %v1865 = vld [vmem:[#allocation7 + $0x64] sm:$0xf]
    %v1866 = vld [vmem:[#allocation7 + $0x68] sm:$0xf]
    %v1867 = vld [vmem:[#allocation7 + $0x6c] sm:$0xf]
    %v1868 = vld [vmem:[#allocation7 + $0x70] sm:$0xf]
    %v1869 = vld [vmem:[#allocation7 + $0x74] sm:$0xf]
    %v1870 = vld [vmem:[#allocation7 + $0x78] sm:$0xf]
    %v1871 = vld [vmem:[#allocation7 + $0x7c] sm:$0xf]
    %v1872 = vld [vmem:[#allocation7 + $0x80] sm:$0xf]
    %v1873 = vld [vmem:[#allocation7 + $0x84] sm:$0xf]
    %v1874 = vld [vmem:[#allocation7 + $0x88] sm:$0xf]
    %v1875 = vld [vmem:[#allocation7 + $0x8c] sm:$0xf]
    %v1876 = vld [vmem:[#allocation7 + $0x90] sm:$0xf]
    %v1877 = vld [vmem:[#allocation7 + $0x94] sm:$0xf]
    %v1878 = vld [vmem:[#allocation7 + $0x98] sm:$0xf]
    %v1879 = vld [vmem:[#allocation7 + $0x9c] sm:$0xf]
    %v1880 = vld [vmem:[#allocation7 + $0xa0] sm:$0xf]
    %v1881 = vld [vmem:[#allocation7 + $0xa4] sm:$0xf]
    %v1882 = vld [vmem:[#allocation7 + $0xa8] sm:$0xf]
    %v1883 = vld [vmem:[#allocation7 + $0xac] sm:$0xf]
    %v1884 = vld [vmem:[#allocation7 + $0xb0] sm:$0xf]
    %v1885 = vld [vmem:[#allocation7 + $0xb4] sm:$0xf]
    %v1886 = vld [vmem:[#allocation7 + $0xb8] sm:$0xf]
    %v1887 = vld [vmem:[#allocation7 + $0xbc] sm:$0xf]
    %v1892 = vrot.slane %v1651, 1
    %v1893 = vrot.slane %v1667, 1
    %v1894 = vsel %vm329, %v1892, %v1893
    %v1895 = vrot.slane %v1659, 1
    %v1896 = vrot.slane %v1675, 1
    %v1897 = vsel %vm329, %v1895, %v1896
    %v1900 = vrot.slane %v1651, 2
    %v1901 = vrot.slane %v1667, 2
    %v1902 = vsel %vm390, %v1900, %v1901
    %v1903 = vrot.slane %v1659, 2
    %v1904 = vrot.slane %v1675, 2
    %v1905 = vsel %vm390, %v1903, %v1904
    %v1908 = vpack.c.bf16 %v1645, %v1644
    %v1909 = vpack.c.bf16 %v1709, %v1706
    %v1910 = vpack.c.bf16 %v1765, %v1762
    %v1911 = vpack.c.bf16 %v1647, %v1646
    %v1912 = vpack.c.bf16 %v1715, %v1712
    %v1913 = vpack.c.bf16 %v1771, %v1768
    %v1914 = vpack.c.bf16 %v1649, %v1648
    %v1915 = vpack.c.bf16 %v1721, %v1718
    %v1916 = vpack.c.bf16 %v1777, %v1774
    %v1917 = vpack.c.bf16 %v1651, %v1650
    %v1918 = vpack.c.bf16 %v1894, %v1724
    %v1919 = vpack.c.bf16 %v1902, %v1780
    %v1920 = vpack.c.bf16 %v1653, %v1652
    %v1921 = vpack.c.bf16 %v1730, %v1727
    %v1922 = vpack.c.bf16 %v1786, %v1783
    %v1923 = vpack.c.bf16 %v1655, %v1654
    %v1924 = vpack.c.bf16 %v1736, %v1733
    %v1925 = vpack.c.bf16 %v1792, %v1789
    %v1926 = vpack.c.bf16 %v1657, %v1656
    %v1927 = vpack.c.bf16 %v1742, %v1739
    %v1928 = vpack.c.bf16 %v1798, %v1795
    %v1929 = vpack.c.bf16 %v1659, %v1658
    %v1930 = vpack.c.bf16 %v1897, %v1745
    %v1931 = vpack.c.bf16 %v1905, %v1801
    %s1932 = scalar_lea.vmem [#allocation7], 192
    %v1933 = vld [vmem:[%s1932] sm:$0xf]
    %v1934 = vld [vmem:[%s1932 + $0x4] sm:$0xf]
    %v1935 = vld [vmem:[%s1932 + $0x8] sm:$0xf]
    %v1936 = vld [vmem:[%s1932 + $0xc] sm:$0xf]
    %v1937 = vld [vmem:[%s1932 + $0x10] sm:$0xf]
    %v1938 = vld [vmem:[%s1932 + $0x14] sm:$0xf]
    %v1939 = vld [vmem:[%s1932 + $0x18] sm:$0xf]
    %v1940 = vld [vmem:[%s1932 + $0x1c] sm:$0xf]
    %v1941 = vld [vmem:[%s1932 + $0x20] sm:$0xf]
    %v1942 = vld [vmem:[%s1932 + $0x24] sm:$0xf]
    %v1943 = vld [vmem:[%s1932 + $0x28] sm:$0xf]
    %v1944 = vld [vmem:[%s1932 + $0x2c] sm:$0xf]
    %v1945 = vld [vmem:[%s1932 + $0x30] sm:$0xf]
    %v1946 = vld [vmem:[%s1932 + $0x34] sm:$0xf]
    %v1947 = vld [vmem:[%s1932 + $0x38] sm:$0xf]
    %v1948 = vld [vmem:[%s1932 + $0x3c] sm:$0xf]
    %v1949 = vld [vmem:[%s1932 + $0x40] sm:$0xf]
    %v1950 = vld [vmem:[%s1932 + $0x44] sm:$0xf]
    %v1951 = vld [vmem:[%s1932 + $0x48] sm:$0xf]
    %v1952 = vld [vmem:[%s1932 + $0x4c] sm:$0xf]
    %v1953 = vld [vmem:[%s1932 + $0x50] sm:$0xf]
    %v1954 = vld [vmem:[%s1932 + $0x54] sm:$0xf]
    %v1955 = vld [vmem:[%s1932 + $0x58] sm:$0xf]
    %v1956 = vld [vmem:[%s1932 + $0x5c] sm:$0xf]
    %v1957 = vld [vmem:[%s1932 + $0x60] sm:$0xf]
    %v1958 = vld [vmem:[%s1932 + $0x64] sm:$0xf]
    %v1959 = vld [vmem:[%s1932 + $0x68] sm:$0xf]
    %v1960 = vld [vmem:[%s1932 + $0x6c] sm:$0xf]
    %v1961 = vld [vmem:[%s1932 + $0x70] sm:$0xf]
    %v1962 = vld [vmem:[%s1932 + $0x74] sm:$0xf]
    %v1963 = vld [vmem:[%s1932 + $0x78] sm:$0xf]
    %v1964 = vld [vmem:[%s1932 + $0x7c] sm:$0xf]
    %v1965 = vld [vmem:[%s1932 + $0x80] sm:$0xf]
    %v1966 = vld [vmem:[%s1932 + $0x84] sm:$0xf]
    %v1967 = vld [vmem:[%s1932 + $0x88] sm:$0xf]
    %v1968 = vld [vmem:[%s1932 + $0x8c] sm:$0xf]
    %v1969 = vld [vmem:[%s1932 + $0x90] sm:$0xf]
    %v1970 = vld [vmem:[%s1932 + $0x94] sm:$0xf]
    %v1971 = vld [vmem:[%s1932 + $0x98] sm:$0xf]
    %v1972 = vld [vmem:[%s1932 + $0x9c] sm:$0xf]
    %v1973 = vld [vmem:[%s1932 + $0xa0] sm:$0xf]
    %v1974 = vld [vmem:[%s1932 + $0xa4] sm:$0xf]
    %v1975 = vld [vmem:[%s1932 + $0xa8] sm:$0xf]
    %v1976 = vld [vmem:[%s1932 + $0xac] sm:$0xf]
    %v1977 = vld [vmem:[%s1932 + $0xb0] sm:$0xf]
    %v1978 = vld [vmem:[%s1932 + $0xb4] sm:$0xf]
    %v1979 = vld [vmem:[%s1932 + $0xb8] sm:$0xf]
    %v1980 = vld [vmem:[%s1932 + $0xbc] sm:$0xf]
    %v2029 = vunpack.c.l.b16 %v1933
    %v2030 = vunpack.c.l.b16 %v1934
    %v2031 = vunpack.c.l.b16 %v1935
    %v2032 = vunpack.c.l.b16 %v1936
    %v2033 = vunpack.c.l.b16 %v1937
    %v2034 = vunpack.c.l.b16 %v1938
    %v2035 = vunpack.c.l.b16 %v1939
    %v2036 = vunpack.c.l.b16 %v1940
    %v2037 = vunpack.c.l.b16 %v1941
    %v2038 = vunpack.c.l.b16 %v1942
    %v2039 = vunpack.c.l.b16 %v1943
    %v2040 = vunpack.c.l.b16 %v1944
    %v2041 = vunpack.c.l.b16 %v1945
    %v2042 = vunpack.c.l.b16 %v1946
    %v2043 = vunpack.c.l.b16 %v1947
    %v2044 = vunpack.c.l.b16 %v1948
    %v2045 = vunpack.c.l.b16 %v1949
    %v2046 = vunpack.c.l.b16 %v1950
    %v2047 = vunpack.c.l.b16 %v1951
    %v2048 = vunpack.c.l.b16 %v1952
    %v2049 = vunpack.c.l.b16 %v1953
    %v2050 = vunpack.c.l.b16 %v1954
    %v2051 = vunpack.c.l.b16 %v1955
    %v2052 = vunpack.c.l.b16 %v1956
    %v2053 = vunpack.c.l.b16 %v1957
    %v2054 = vunpack.c.l.b16 %v1958
    %v2055 = vunpack.c.l.b16 %v1959
    %v2056 = vunpack.c.l.b16 %v1960
    %v2057 = vunpack.c.l.b16 %v1961
    %v2058 = vunpack.c.l.b16 %v1962
    %v2059 = vunpack.c.l.b16 %v1963
    %v2060 = vunpack.c.l.b16 %v1964
    %v2061 = vunpack.c.l.b16 %v1965
    %v2062 = vunpack.c.l.b16 %v1966
    %v2063 = vunpack.c.l.b16 %v1967
    %v2064 = vunpack.c.l.b16 %v1968
    %v2065 = vunpack.c.l.b16 %v1969
    %v2066 = vunpack.c.l.b16 %v1970
    %v2067 = vunpack.c.l.b16 %v1971
    %v2068 = vunpack.c.l.b16 %v1972
    %v2069 = vunpack.c.l.b16 %v1973
    %v2070 = vunpack.c.l.b16 %v1974
    %v2071 = vunpack.c.l.b16 %v1975
    %v2072 = vunpack.c.l.b16 %v1976
    %v2073 = vunpack.c.l.b16 %v1977
    %v2074 = vunpack.c.l.b16 %v1978
    %v2075 = vunpack.c.l.b16 %v1979
    %v2076 = vunpack.c.l.b16 %v1980
    %v2077 = vpack.c.b16 %v2030, %v2029
    %v2078 = vpack.c.b16 %v2032, %v2031
    %v2079 = vpack.c.b16 %v2034, %v2033
    %v2080 = vpack.c.b16 %v2036, %v2035
    %v2081 = vpack.c.b16 %v2038, %v2037
    %v2082 = vpack.c.b16 %v2040, %v2039
    %v2083 = vpack.c.b16 %v2042, %v2041
    %v2084 = vpack.c.b16 %v2044, %v2043
    %v2085 = vpack.c.b16 %v2046, %v2045
    %v2086 = vpack.c.b16 %v2048, %v2047
    %v2087 = vpack.c.b16 %v2050, %v2049
    %v2088 = vpack.c.b16 %v2052, %v2051
    %v2089 = vpack.c.b16 %v2054, %v2053
    %v2090 = vpack.c.b16 %v2056, %v2055
    %v2091 = vpack.c.b16 %v2058, %v2057
    %v2092 = vpack.c.b16 %v2060, %v2059
    %v2093 = vpack.c.b16 %v2062, %v2061
    %v2094 = vpack.c.b16 %v2064, %v2063
    %v2095 = vpack.c.b16 %v2066, %v2065
    %v2096 = vpack.c.b16 %v2068, %v2067
    %v2097 = vpack.c.b16 %v2070, %v2069
    %v2098 = vpack.c.b16 %v2072, %v2071
    %v2099 = vpack.c.b16 %v2074, %v2073
    %v2100 = vpack.c.b16 %v2076, %v2075
    %2125 = vmatpush.bf16.msra.mxu0 %v2084
    %2126 = vmatpush.bf16.msra.mxu0 %v2083
    %2127 = vmatpush.bf16.msra.mxu0 %v2082
    %2128 = vmatpush.bf16.msra.mxu0 %v2081
    %2129 = vmatpush.bf16.msra.mxu0 %v2080
    %2130 = vmatpush.bf16.msra.mxu0 %v2079
    %2131 = vmatpush.bf16.msra.mxu0 %v2078
    %2132 = vmatpush.bf16.msra.mxu0 %v2077
    %2133 = vmatmul.bf16.gmra.mxu0 %v1908
    %v2134 = vpop.f32.mrf.mxu0
    %v2135 = vadd.f32 0.0, %v2134
    %v2136 = vpop.f32.mrf.mxu0
    %v2137 = vadd.f32 0.0, %v2136
    %2138 = vmatmul.bf16.gmra.mxu0 %v1911
    %v2139 = vpop.f32.mrf.mxu0
    %v2140 = vadd.f32 0.0, %v2139
    %v2141 = vpop.f32.mrf.mxu0
    %v2142 = vadd.f32 0.0, %v2141
    %2143 = vmatmul.bf16.gmra.mxu0 %v1914
    %v2144 = vpop.f32.mrf.mxu0
    %v2145 = vadd.f32 0.0, %v2144
    %v2146 = vpop.f32.mrf.mxu0
    %v2147 = vadd.f32 0.0, %v2146
    %2148 = vmatmul.bf16.gmra.mxu0 %v1917
    %v2149 = vpop.f32.mrf.mxu0
    %v2150 = vadd.f32 0.0, %v2149
    %v2151 = vpop.f32.mrf.mxu0
    %v2152 = vadd.f32 0.0, %v2151
    %2153 = vmatmul.bf16.gmra.mxu0 %v1920
    %v2154 = vpop.f32.mrf.mxu0
    %v2155 = vadd.f32 0.0, %v2154
    %v2156 = vpop.f32.mrf.mxu0
    %v2157 = vadd.f32 0.0, %v2156
    %2158 = vmatmul.bf16.gmra.mxu0 %v1923
    %v2159 = vpop.f32.mrf.mxu0
    %v2160 = vadd.f32 0.0, %v2159
    %v2161 = vpop.f32.mrf.mxu0
    %v2162 = vadd.f32 0.0, %v2161
    %2163 = vmatmul.bf16.gmra.mxu0 %v1926
    %v2164 = vpop.f32.mrf.mxu0
    %v2165 = vadd.f32 0.0, %v2164
    %v2166 = vpop.f32.mrf.mxu0
    %v2167 = vadd.f32 0.0, %v2166
    %2168 = vmatmul.bf16.gmra.mxu0 %v1929
    %v2169 = vpop.f32.mrf.mxu0
    %v2170 = vadd.f32 0.0, %v2169
    %v2171 = vpop.f32.mrf.mxu0
    %v2172 = vadd.f32 0.0, %v2171
    %2173 = vdwg.mxu0
    %2174 = vmatpush.bf16.msra.mxu0 %v2092
    %2175 = vmatpush.bf16.msra.mxu0 %v2091
    %2176 = vmatpush.bf16.msra.mxu0 %v2090
    %2177 = vmatpush.bf16.msra.mxu0 %v2089
    %2178 = vmatpush.bf16.msra.mxu0 %v2088
    %2179 = vmatpush.bf16.msra.mxu0 %v2087
    %2180 = vmatpush.bf16.msra.mxu0 %v2086
    %2181 = vmatpush.bf16.msra.mxu0 %v2085
    %2182 = vmatmul.bf16.gmra.mxu0 %v1909
    %v2183 = vpop.f32.mrf.mxu0
    %v2184 = vadd.f32 %v2135, %v2183
    %v2185 = vpop.f32.mrf.mxu0
    %v2186 = vadd.f32 %v2137, %v2185
    %2187 = vmatmul.bf16.gmra.mxu0 %v1912
    %v2188 = vpop.f32.mrf.mxu0
    %v2189 = vadd.f32 %v2140, %v2188
    %v2190 = vpop.f32.mrf.mxu0
    %v2191 = vadd.f32 %v2142, %v2190
    %2192 = vmatmul.bf16.gmra.mxu0 %v1915
    %v2193 = vpop.f32.mrf.mxu0
    %v2194 = vadd.f32 %v2145, %v2193
    %v2195 = vpop.f32.mrf.mxu0
    %v2196 = vadd.f32 %v2147, %v2195
    %2197 = vmatmul.bf16.gmra.mxu0 %v1918
    %v2198 = vpop.f32.mrf.mxu0
    %v2199 = vadd.f32 %v2150, %v2198
    %v2200 = vpop.f32.mrf.mxu0
    %v2201 = vadd.f32 %v2152, %v2200
    %2202 = vmatmul.bf16.gmra.mxu0 %v1921
    %v2203 = vpop.f32.mrf.mxu0
    %v2204 = vadd.f32 %v2155, %v2203
    %v2205 = vpop.f32.mrf.mxu0
    %v2206 = vadd.f32 %v2157, %v2205
    %2207 = vmatmul.bf16.gmra.mxu0 %v1924
    %v2208 = vpop.f32.mrf.mxu0
    %v2209 = vadd.f32 %v2160, %v2208
    %v2210 = vpop.f32.mrf.mxu0
    %v2211 = vadd.f32 %v2162, %v2210
    %2212 = vmatmul.bf16.gmra.mxu0 %v1927
    %v2213 = vpop.f32.mrf.mxu0
    %v2214 = vadd.f32 %v2165, %v2213
    %v2215 = vpop.f32.mrf.mxu0
    %v2216 = vadd.f32 %v2167, %v2215
    %2217 = vmatmul.bf16.gmra.mxu0 %v1930
    %v2218 = vpop.f32.mrf.mxu0
    %v2219 = vadd.f32 %v2170, %v2218
    %v2220 = vpop.f32.mrf.mxu0
    %v2221 = vadd.f32 %v2172, %v2220
    %2222 = vdwg.mxu0
    %2223 = vmatpush.bf16.msra.mxu0 %v2100
    %2224 = vmatpush.bf16.msra.mxu0 %v2099
    %2225 = vmatpush.bf16.msra.mxu0 %v2098
    %2226 = vmatpush.bf16.msra.mxu0 %v2097
    %2227 = vmatpush.bf16.msra.mxu0 %v2096
    %2228 = vmatpush.bf16.msra.mxu0 %v2095
    %2229 = vmatpush.bf16.msra.mxu0 %v2094
    %2230 = vmatpush.bf16.msra.mxu0 %v2093
    %2231 = vmatmul.bf16.gmra.mxu0 %v1910
    %v2232 = vpop.f32.mrf.mxu0
    %v2233 = vadd.f32 %v2184, %v2232
    %v2234 = vpop.f32.mrf.mxu0
    %v2235 = vadd.f32 %v2186, %v2234
    %2236 = vmatmul.bf16.gmra.mxu0 %v1913
    %v2237 = vpop.f32.mrf.mxu0
    %v2238 = vadd.f32 %v2189, %v2237
    %v2239 = vpop.f32.mrf.mxu0
    %v2240 = vadd.f32 %v2191, %v2239
    %2241 = vmatmul.bf16.gmra.mxu0 %v1916
    %v2242 = vpop.f32.mrf.mxu0
    %v2243 = vadd.f32 %v2194, %v2242
    %v2244 = vpop.f32.mrf.mxu0
    %v2245 = vadd.f32 %v2196, %v2244
    %2246 = vmatmul.bf16.gmra.mxu0 %v1919
    %v2247 = vpop.f32.mrf.mxu0
    %v2248 = vadd.f32 %v2199, %v2247
    %v2249 = vpop.f32.mrf.mxu0
    %v2250 = vadd.f32 %v2201, %v2249
    %2251 = vmatmul.bf16.gmra.mxu0 %v1922
    %v2252 = vpop.f32.mrf.mxu0
    %v2253 = vadd.f32 %v2204, %v2252
    %v2254 = vpop.f32.mrf.mxu0
    %v2255 = vadd.f32 %v2206, %v2254
    %2256 = vmatmul.bf16.gmra.mxu0 %v1925
    %v2257 = vpop.f32.mrf.mxu0
    %v2258 = vadd.f32 %v2209, %v2257
    %v2259 = vpop.f32.mrf.mxu0
    %v2260 = vadd.f32 %v2211, %v2259
    %2261 = vmatmul.bf16.gmra.mxu0 %v1928
    %v2262 = vpop.f32.mrf.mxu0
    %v2263 = vadd.f32 %v2214, %v2262
    %v2264 = vpop.f32.mrf.mxu0
    %v2265 = vadd.f32 %v2216, %v2264
    %2266 = vmatmul.bf16.gmra.mxu0 %v1931
    %v2267 = vpop.f32.mrf.mxu0
    %v2268 = vadd.f32 %v2219, %v2267
    %v2269 = vpop.f32.mrf.mxu0
    %v2270 = vadd.f32 %v2221, %v2269
    %2271 = vdwg.mxu0
    %v2320 = vunpack.c.l.b16 %v1840
    %v2321 = vunpack.c.l.b16 %v1841
    %v2322 = vunpack.c.l.b16 %v1842
    %v2323 = vunpack.c.l.b16 %v1843
    %v2324 = vunpack.c.l.b16 %v1844
    %v2325 = vunpack.c.l.b16 %v1845
    %v2326 = vunpack.c.l.b16 %v1846
    %v2327 = vunpack.c.l.b16 %v1847
    %v2328 = vunpack.c.l.b16 %v1848
    %v2329 = vunpack.c.l.b16 %v1849
    %v2330 = vunpack.c.l.b16 %v1850
    %v2331 = vunpack.c.l.b16 %v1851
    %v2332 = vunpack.c.l.b16 %v1852
    %v2333 = vunpack.c.l.b16 %v1853
    %v2334 = vunpack.c.l.b16 %v1854
    %v2335 = vunpack.c.l.b16 %v1855
    %v2336 = vunpack.c.l.b16 %v1856
    %v2337 = vunpack.c.l.b16 %v1857
    %v2338 = vunpack.c.l.b16 %v1858
    %v2339 = vunpack.c.l.b16 %v1859
    %v2340 = vunpack.c.l.b16 %v1860
    %v2341 = vunpack.c.l.b16 %v1861
    %v2342 = vunpack.c.l.b16 %v1862
    %v2343 = vunpack.c.l.b16 %v1863
    %v2344 = vunpack.c.l.b16 %v1864
    %v2345 = vunpack.c.l.b16 %v1865
    %v2346 = vunpack.c.l.b16 %v1866
    %v2347 = vunpack.c.l.b16 %v1867
    %v2348 = vunpack.c.l.b16 %v1868
    %v2349 = vunpack.c.l.b16 %v1869
    %v2350 = vunpack.c.l.b16 %v1870
    %v2351 = vunpack.c.l.b16 %v1871
    %v2352 = vunpack.c.l.b16 %v1872
    %v2353 = vunpack.c.l.b16 %v1873
    %v2354 = vunpack.c.l.b16 %v1874
    %v2355 = vunpack.c.l.b16 %v1875
    %v2356 = vunpack.c.l.b16 %v1876
    %v2357 = vunpack.c.l.b16 %v1877
    %v2358 = vunpack.c.l.b16 %v1878
    %v2359 = vunpack.c.l.b16 %v1879
    %v2360 = vunpack.c.l.b16 %v1880
    %v2361 = vunpack.c.l.b16 %v1881
    %v2362 = vunpack.c.l.b16 %v1882
    %v2363 = vunpack.c.l.b16 %v1883
    %v2364 = vunpack.c.l.b16 %v1884
    %v2365 = vunpack.c.l.b16 %v1885
    %v2366 = vunpack.c.l.b16 %v1886
    %v2367 = vunpack.c.l.b16 %v1887
    %v2368 = vpack.c.b16 %v2321, %v2320
    %v2369 = vpack.c.b16 %v2323, %v2322
    %v2370 = vpack.c.b16 %v2325, %v2324
    %v2371 = vpack.c.b16 %v2327, %v2326
    %v2372 = vpack.c.b16 %v2329, %v2328
    %v2373 = vpack.c.b16 %v2331, %v2330
    %v2374 = vpack.c.b16 %v2333, %v2332
    %v2375 = vpack.c.b16 %v2335, %v2334
    %v2376 = vpack.c.b16 %v2337, %v2336
    %v2377 = vpack.c.b16 %v2339, %v2338
    %v2378 = vpack.c.b16 %v2341, %v2340
    %v2379 = vpack.c.b16 %v2343, %v2342
    %v2380 = vpack.c.b16 %v2345, %v2344
    %v2381 = vpack.c.b16 %v2347, %v2346
    %v2382 = vpack.c.b16 %v2349, %v2348
    %v2383 = vpack.c.b16 %v2351, %v2350
    %v2384 = vpack.c.b16 %v2353, %v2352
    %v2385 = vpack.c.b16 %v2355, %v2354
    %v2386 = vpack.c.b16 %v2357, %v2356
    %v2387 = vpack.c.b16 %v2359, %v2358
    %v2388 = vpack.c.b16 %v2361, %v2360
    %v2389 = vpack.c.b16 %v2363, %v2362
    %v2390 = vpack.c.b16 %v2365, %v2364
    %v2391 = vpack.c.b16 %v2367, %v2366
    %2416 = vmatpush.bf16.msra.mxu0 %v2375
    %2417 = vmatpush.bf16.msra.mxu0 %v2374
    %2418 = vmatpush.bf16.msra.mxu0 %v2373
    %2419 = vmatpush.bf16.msra.mxu0 %v2372
    %2420 = vmatpush.bf16.msra.mxu0 %v2371
    %2421 = vmatpush.bf16.msra.mxu0 %v2370
    %2422 = vmatpush.bf16.msra.mxu0 %v2369
    %2423 = vmatpush.bf16.msra.mxu0 %v2368
    %2424 = vmatmul.bf16.gmra.mxu0 %v1816
    %v2425 = vpop.f32.mrf.mxu0
    %v2426 = vadd.f32 %v2233, %v2425
    %v2427 = vpop.f32.mrf.mxu0
    %v2428 = vadd.f32 %v2235, %v2427
    %2429 = vmatmul.bf16.gmra.mxu0 %v1819
    %v2430 = vpop.f32.mrf.mxu0
    %v2431 = vadd.f32 %v2238, %v2430
    %v2432 = vpop.f32.mrf.mxu0
    %v2433 = vadd.f32 %v2240, %v2432
    %2434 = vmatmul.bf16.gmra.mxu0 %v1822
    %v2435 = vpop.f32.mrf.mxu0
    %v2436 = vadd.f32 %v2243, %v2435
    %v2437 = vpop.f32.mrf.mxu0
    %v2438 = vadd.f32 %v2245, %v2437
    %2439 = vmatmul.bf16.gmra.mxu0 %v1825
    %v2440 = vpop.f32.mrf.mxu0
    %v2441 = vadd.f32 %v2248, %v2440
    %v2442 = vpop.f32.mrf.mxu0
    %v2443 = vadd.f32 %v2250, %v2442
    %2444 = vmatmul.bf16.gmra.mxu0 %v1828
    %v2445 = vpop.f32.mrf.mxu0
    %v2446 = vadd.f32 %v2253, %v2445
    %v2447 = vpop.f32.mrf.mxu0
    %v2448 = vadd.f32 %v2255, %v2447
    %2449 = vmatmul.bf16.gmra.mxu0 %v1831
    %v2450 = vpop.f32.mrf.mxu0
    %v2451 = vadd.f32 %v2258, %v2450
    %v2452 = vpop.f32.mrf.mxu0
    %v2453 = vadd.f32 %v2260, %v2452
    %2454 = vmatmul.bf16.gmra.mxu0 %v1834
    %v2455 = vpop.f32.mrf.mxu0
    %v2456 = vadd.f32 %v2263, %v2455
    %v2457 = vpop.f32.mrf.mxu0
    %v2458 = vadd.f32 %v2265, %v2457
    %2459 = vmatmul.bf16.gmra.mxu0 %v1837
    %v2460 = vpop.f32.mrf.mxu0
    %v2461 = vadd.f32 %v2268, %v2460
    %v2462 = vpop.f32.mrf.mxu0
    %v2463 = vadd.f32 %v2270, %v2462
    %2464 = vdwg.mxu0
    %2465 = vmatpush.bf16.msra.mxu0 %v2383
    %2466 = vmatpush.bf16.msra.mxu0 %v2382
    %2467 = vmatpush.bf16.msra.mxu0 %v2381
    %2468 = vmatpush.bf16.msra.mxu0 %v2380
    %2469 = vmatpush.bf16.msra.mxu0 %v2379
    %2470 = vmatpush.bf16.msra.mxu0 %v2378
    %2471 = vmatpush.bf16.msra.mxu0 %v2377
    %2472 = vmatpush.bf16.msra.mxu0 %v2376
    %2473 = vmatmul.bf16.gmra.mxu0 %v1817
    %v2474 = vpop.f32.mrf.mxu0
    %v2475 = vadd.f32 %v2426, %v2474
    %v2476 = vpop.f32.mrf.mxu0
    %v2477 = vadd.f32 %v2428, %v2476
    %2478 = vmatmul.bf16.gmra.mxu0 %v1820
    %v2479 = vpop.f32.mrf.mxu0
    %v2480 = vadd.f32 %v2431, %v2479
    %v2481 = vpop.f32.mrf.mxu0
    %v2482 = vadd.f32 %v2433, %v2481
    %2483 = vmatmul.bf16.gmra.mxu0 %v1823
    %v2484 = vpop.f32.mrf.mxu0
    %v2485 = vadd.f32 %v2436, %v2484
    %v2486 = vpop.f32.mrf.mxu0
    %v2487 = vadd.f32 %v2438, %v2486
    %2488 = vmatmul.bf16.gmra.mxu0 %v1826
    %v2489 = vpop.f32.mrf.mxu0
    %v2490 = vadd.f32 %v2441, %v2489
    %v2491 = vpop.f32.mrf.mxu0
    %v2492 = vadd.f32 %v2443, %v2491
    %2493 = vmatmul.bf16.gmra.mxu0 %v1829
    %v2494 = vpop.f32.mrf.mxu0
    %v2495 = vadd.f32 %v2446, %v2494
    %v2496 = vpop.f32.mrf.mxu0
    %v2497 = vadd.f32 %v2448, %v2496
    %2498 = vmatmul.bf16.gmra.mxu0 %v1832
    %v2499 = vpop.f32.mrf.mxu0
    %v2500 = vadd.f32 %v2451, %v2499
    %v2501 = vpop.f32.mrf.mxu0
    %v2502 = vadd.f32 %v2453, %v2501
    %2503 = vmatmul.bf16.gmra.mxu0 %v1835
    %v2504 = vpop.f32.mrf.mxu0
    %v2505 = vadd.f32 %v2456, %v2504
    %v2506 = vpop.f32.mrf.mxu0
    %v2507 = vadd.f32 %v2458, %v2506
    %2508 = vmatmul.bf16.gmra.mxu0 %v1838
    %v2509 = vpop.f32.mrf.mxu0
    %v2510 = vadd.f32 %v2461, %v2509
    %v2511 = vpop.f32.mrf.mxu0
    %v2512 = vadd.f32 %v2463, %v2511
    %2513 = vdwg.mxu0
    %2514 = vmatpush.bf16.msra.mxu0 %v2391
    %2515 = vmatpush.bf16.msra.mxu0 %v2390
    %2516 = vmatpush.bf16.msra.mxu0 %v2389
    %2517 = vmatpush.bf16.msra.mxu0 %v2388
    %2518 = vmatpush.bf16.msra.mxu0 %v2387
    %2519 = vmatpush.bf16.msra.mxu0 %v2386
    %2520 = vmatpush.bf16.msra.mxu0 %v2385
    %2521 = vmatpush.bf16.msra.mxu0 %v2384
    %2522 = vmatmul.bf16.gmra.mxu0 %v1818
    %v2523 = vpop.f32.mrf.mxu0
    %v2524 = vadd.f32 %v2475, %v2523
    %v2525 = vpop.f32.mrf.mxu0
    %v2526 = vadd.f32 %v2477, %v2525
    %2527 = vmatmul.bf16.gmra.mxu0 %v1821
    %v2528 = vpop.f32.mrf.mxu0
    %v2529 = vadd.f32 %v2480, %v2528
    %v2530 = vpop.f32.mrf.mxu0
    %v2531 = vadd.f32 %v2482, %v2530
    %2532 = vmatmul.bf16.gmra.mxu0 %v1824
    %v2533 = vpop.f32.mrf.mxu0
    %v2534 = vadd.f32 %v2485, %v2533
    %v2535 = vpop.f32.mrf.mxu0
    %v2536 = vadd.f32 %v2487, %v2535
    %2537 = vmatmul.bf16.gmra.mxu0 %v1827
    %v2538 = vpop.f32.mrf.mxu0
    %v2539 = vadd.f32 %v2490, %v2538
    %v2540 = vpop.f32.mrf.mxu0
    %v2541 = vadd.f32 %v2492, %v2540
    %2542 = vmatmul.bf16.gmra.mxu0 %v1830
    %v2543 = vpop.f32.mrf.mxu0
    %v2544 = vadd.f32 %v2495, %v2543
    %v2545 = vpop.f32.mrf.mxu0
    %v2546 = vadd.f32 %v2497, %v2545
    %2547 = vmatmul.bf16.gmra.mxu0 %v1833
    %v2548 = vpop.f32.mrf.mxu0
    %v2549 = vadd.f32 %v2500, %v2548
    %v2550 = vpop.f32.mrf.mxu0
    %v2551 = vadd.f32 %v2502, %v2550
    %2552 = vmatmul.bf16.gmra.mxu0 %v1836
    %v2553 = vpop.f32.mrf.mxu0
    %v2554 = vadd.f32 %v2505, %v2553
    %v2555 = vpop.f32.mrf.mxu0
    %v2556 = vadd.f32 %v2507, %v2555
    %2557 = vmatmul.bf16.gmra.mxu0 %v1839
    %v2558 = vpop.f32.mrf.mxu0
    %v2559 = vadd.f32 %v2510, %v2558
    %v2560 = vpop.f32.mrf.mxu0
    %v2561 = vadd.f32 %v2512, %v2560
    %2562 = vdwg.mxu0
    %v2563 = vpack.c.bf16 %v265, %v1651
    %v2564 = vpack.c.bf16 %v332, %v1894
    %v2565 = vpack.c.bf16 %v393, %v1902
    %v2566 = vpack.c.bf16 %v265, %v1659
    %v2567 = vpack.c.bf16 %v332, %v1897
    %v2568 = vpack.c.bf16 %v393, %v1905
    %s2569 = scalar_lea.vmem [#allocation7], 384
    %v2570 = vld [vmem:[%s2569] sm:$0xf]
    %v2571 = vld [vmem:[%s2569 + $0x4] sm:$0xf]
    %v2572 = vld [vmem:[%s2569 + $0x8] sm:$0xf]
    %v2573 = vld [vmem:[%s2569 + $0xc] sm:$0xf]
    %v2574 = vld [vmem:[%s2569 + $0x10] sm:$0xf]
    %v2575 = vld [vmem:[%s2569 + $0x14] sm:$0xf]
    %v2576 = vld [vmem:[%s2569 + $0x18] sm:$0xf]
    %v2577 = vld [vmem:[%s2569 + $0x1c] sm:$0xf]
    %v2578 = vld [vmem:[%s2569 + $0x20] sm:$0xf]
    %v2579 = vld [vmem:[%s2569 + $0x24] sm:$0xf]
    %v2580 = vld [vmem:[%s2569 + $0x28] sm:$0xf]
    %v2581 = vld [vmem:[%s2569 + $0x2c] sm:$0xf]
    %v2582 = vld [vmem:[%s2569 + $0x30] sm:$0xf]
    %v2583 = vld [vmem:[%s2569 + $0x34] sm:$0xf]
    %v2584 = vld [vmem:[%s2569 + $0x38] sm:$0xf]
    %v2585 = vld [vmem:[%s2569 + $0x3c] sm:$0xf]
    %v2586 = vld [vmem:[%s2569 + $0x40] sm:$0xf]
    %v2587 = vld [vmem:[%s2569 + $0x44] sm:$0xf]
    %v2588 = vld [vmem:[%s2569 + $0x48] sm:$0xf]
    %v2589 = vld [vmem:[%s2569 + $0x4c] sm:$0xf]
    %v2590 = vld [vmem:[%s2569 + $0x50] sm:$0xf]
    %v2591 = vld [vmem:[%s2569 + $0x54] sm:$0xf]
    %v2592 = vld [vmem:[%s2569 + $0x58] sm:$0xf]
    %v2593 = vld [vmem:[%s2569 + $0x5c] sm:$0xf]
    %v2594 = vld [vmem:[%s2569 + $0x60] sm:$0xf]
    %v2595 = vld [vmem:[%s2569 + $0x64] sm:$0xf]
    %v2596 = vld [vmem:[%s2569 + $0x68] sm:$0xf]
    %v2597 = vld [vmem:[%s2569 + $0x6c] sm:$0xf]
    %v2598 = vld [vmem:[%s2569 + $0x70] sm:$0xf]
    %v2599 = vld [vmem:[%s2569 + $0x74] sm:$0xf]
    %v2600 = vld [vmem:[%s2569 + $0x78] sm:$0xf]
    %v2601 = vld [vmem:[%s2569 + $0x7c] sm:$0xf]
    %v2602 = vld [vmem:[%s2569 + $0x80] sm:$0xf]
    %v2603 = vld [vmem:[%s2569 + $0x84] sm:$0xf]
    %v2604 = vld [vmem:[%s2569 + $0x88] sm:$0xf]
    %v2605 = vld [vmem:[%s2569 + $0x8c] sm:$0xf]
    %v2606 = vld [vmem:[%s2569 + $0x90] sm:$0xf]
    %v2607 = vld [vmem:[%s2569 + $0x94] sm:$0xf]
    %v2608 = vld [vmem:[%s2569 + $0x98] sm:$0xf]
    %v2609 = vld [vmem:[%s2569 + $0x9c] sm:$0xf]
    %v2610 = vld [vmem:[%s2569 + $0xa0] sm:$0xf]
    %v2611 = vld [vmem:[%s2569 + $0xa4] sm:$0xf]
    %v2612 = vld [vmem:[%s2569 + $0xa8] sm:$0xf]
    %v2613 = vld [vmem:[%s2569 + $0xac] sm:$0xf]
    %v2614 = vld [vmem:[%s2569 + $0xb0] sm:$0xf]
    %v2615 = vld [vmem:[%s2569 + $0xb4] sm:$0xf]
    %v2616 = vld [vmem:[%s2569 + $0xb8] sm:$0xf]
    %v2617 = vld [vmem:[%s2569 + $0xbc] sm:$0xf]
    %v2666 = vunpack.c.l.b16 %v2570
    %v2667 = vunpack.c.l.b16 %v2571
    %v2668 = vunpack.c.l.b16 %v2572
    %v2669 = vunpack.c.l.b16 %v2573
    %v2670 = vunpack.c.l.b16 %v2574
    %v2671 = vunpack.c.l.b16 %v2575
    %v2672 = vunpack.c.l.b16 %v2576
    %v2673 = vunpack.c.l.b16 %v2577
    %v2674 = vunpack.c.l.b16 %v2578
    %v2675 = vunpack.c.l.b16 %v2579
    %v2676 = vunpack.c.l.b16 %v2580
    %v2677 = vunpack.c.l.b16 %v2581
    %v2678 = vunpack.c.l.b16 %v2582
    %v2679 = vunpack.c.l.b16 %v2583
    %v2680 = vunpack.c.l.b16 %v2584
    %v2681 = vunpack.c.l.b16 %v2585
    %v2682 = vunpack.c.l.b16 %v2586
    %v2683 = vunpack.c.l.b16 %v2587
    %v2684 = vunpack.c.l.b16 %v2588
    %v2685 = vunpack.c.l.b16 %v2589
    %v2686 = vunpack.c.l.b16 %v2590
    %v2687 = vunpack.c.l.b16 %v2591
    %v2688 = vunpack.c.l.b16 %v2592
    %v2689 = vunpack.c.l.b16 %v2593
    %v2690 = vunpack.c.l.b16 %v2594
    %v2691 = vunpack.c.l.b16 %v2595
    %v2692 = vunpack.c.l.b16 %v2596
    %v2693 = vunpack.c.l.b16 %v2597
    %v2694 = vunpack.c.l.b16 %v2598
    %v2695 = vunpack.c.l.b16 %v2599
    %v2696 = vunpack.c.l.b16 %v2600
    %v2697 = vunpack.c.l.b16 %v2601
    %v2698 = vunpack.c.l.b16 %v2602
    %v2699 = vunpack.c.l.b16 %v2603
    %v2700 = vunpack.c.l.b16 %v2604
    %v2701 = vunpack.c.l.b16 %v2605
    %v2702 = vunpack.c.l.b16 %v2606
    %v2703 = vunpack.c.l.b16 %v2607
    %v2704 = vunpack.c.l.b16 %v2608
    %v2705 = vunpack.c.l.b16 %v2609
    %v2706 = vunpack.c.l.b16 %v2610
    %v2707 = vunpack.c.l.b16 %v2611
    %v2708 = vunpack.c.l.b16 %v2612
    %v2709 = vunpack.c.l.b16 %v2613
    %v2710 = vunpack.c.l.b16 %v2614
    %v2711 = vunpack.c.l.b16 %v2615
    %v2712 = vunpack.c.l.b16 %v2616
    %v2713 = vunpack.c.l.b16 %v2617
    %v2714 = vpack.c.b16 %v2667, %v2666
    %v2715 = vpack.c.b16 %v2669, %v2668
    %v2716 = vpack.c.b16 %v2671, %v2670
    %v2717 = vpack.c.b16 %v2673, %v2672
    %v2718 = vpack.c.b16 %v2675, %v2674
    %v2719 = vpack.c.b16 %v2677, %v2676
    %v2720 = vpack.c.b16 %v2679, %v2678
    %v2721 = vpack.c.b16 %v2681, %v2680
    %v2722 = vpack.c.b16 %v2683, %v2682
    %v2723 = vpack.c.b16 %v2685, %v2684
    %v2724 = vpack.c.b16 %v2687, %v2686
    %v2725 = vpack.c.b16 %v2689, %v2688
    %v2726 = vpack.c.b16 %v2691, %v2690
    %v2727 = vpack.c.b16 %v2693, %v2692
    %v2728 = vpack.c.b16 %v2695, %v2694
    %v2729 = vpack.c.b16 %v2697, %v2696
    %v2730 = vpack.c.b16 %v2699, %v2698
    %v2731 = vpack.c.b16 %v2701, %v2700
    %v2732 = vpack.c.b16 %v2703, %v2702
    %v2733 = vpack.c.b16 %v2705, %v2704
    %v2734 = vpack.c.b16 %v2707, %v2706
    %v2735 = vpack.c.b16 %v2709, %v2708
    %v2736 = vpack.c.b16 %v2711, %v2710
    %v2737 = vpack.c.b16 %v2713, %v2712
    %2762 = vmatpush.bf16.msra.mxu0 %v2721
    %2763 = vmatpush.bf16.msra.mxu0 %v2720
    %2764 = vmatpush.bf16.msra.mxu0 %v2719
    %2765 = vmatpush.bf16.msra.mxu0 %v2718
    %2766 = vmatpush.bf16.msra.mxu0 %v2717
    %2767 = vmatpush.bf16.msra.mxu0 %v2716
    %2768 = vmatpush.bf16.msra.mxu0 %v2715
    %2769 = vmatpush.bf16.msra.mxu0 %v2714
    %2770 = vmatmul.bf16.gmra.mxu0 %v1819
    %v2771 = vpop.f32.mrf.mxu0
    %v2772 = vadd.f32 0.0, %v2771
    %v2773 = vpop.f32.mrf.mxu0
    %v2774 = vadd.f32 0.0, %v2773
    %2775 = vmatmul.bf16.gmra.mxu0 %v1822
    %v2776 = vpop.f32.mrf.mxu0
    %v2777 = vadd.f32 0.0, %v2776
    %v2778 = vpop.f32.mrf.mxu0
    %v2779 = vadd.f32 0.0, %v2778
    %2780 = vmatmul.bf16.gmra.mxu0 %v1825
    %v2781 = vpop.f32.mrf.mxu0
    %v2782 = vadd.f32 0.0, %v2781
    %v2783 = vpop.f32.mrf.mxu0
    %v2784 = vadd.f32 0.0, %v2783
    %2785 = vmatmul.bf16.gmra.mxu0 %v2563
    %v2786 = vpop.f32.mrf.mxu0
    %v2787 = vadd.f32 0.0, %v2786
    %v2788 = vpop.f32.mrf.mxu0
    %v2789 = vadd.f32 0.0, %v2788
    %2790 = vmatmul.bf16.gmra.mxu0 %v1831
    %v2791 = vpop.f32.mrf.mxu0
    %v2792 = vadd.f32 0.0, %v2791
    %v2793 = vpop.f32.mrf.mxu0
    %v2794 = vadd.f32 0.0, %v2793
    %2795 = vmatmul.bf16.gmra.mxu0 %v1834
    %v2796 = vpop.f32.mrf.mxu0
    %v2797 = vadd.f32 0.0, %v2796
    %v2798 = vpop.f32.mrf.mxu0
    %v2799 = vadd.f32 0.0, %v2798
    %2800 = vmatmul.bf16.gmra.mxu0 %v1837
    %v2801 = vpop.f32.mrf.mxu0
    %v2802 = vadd.f32 0.0, %v2801
    %v2803 = vpop.f32.mrf.mxu0
    %v2804 = vadd.f32 0.0, %v2803
    %2805 = vmatmul.bf16.gmra.mxu0 %v2566
    %v2806 = vpop.f32.mrf.mxu0
    %v2807 = vadd.f32 0.0, %v2806
    %v2808 = vpop.f32.mrf.mxu0
    %v2809 = vadd.f32 0.0, %v2808
    %2810 = vdwg.mxu0
    %2811 = vmatpush.bf16.msra.mxu0 %v2729
    %2812 = vmatpush.bf16.msra.mxu0 %v2728
    %2813 = vmatpush.bf16.msra.mxu0 %v2727
    %2814 = vmatpush.bf16.msra.mxu0 %v2726
    %2815 = vmatpush.bf16.msra.mxu0 %v2725
    %2816 = vmatpush.bf16.msra.mxu0 %v2724
    %2817 = vmatpush.bf16.msra.mxu0 %v2723
    %2818 = vmatpush.bf16.msra.mxu0 %v2722
    %2819 = vmatmul.bf16.gmra.mxu0 %v1820
    %v2820 = vpop.f32.mrf.mxu0
    %v2821 = vadd.f32 %v2772, %v2820
    %v2822 = vpop.f32.mrf.mxu0
    %v2823 = vadd.f32 %v2774, %v2822
    %2824 = vmatmul.bf16.gmra.mxu0 %v1823
    %v2825 = vpop.f32.mrf.mxu0
    %v2826 = vadd.f32 %v2777, %v2825
    %v2827 = vpop.f32.mrf.mxu0
    %v2828 = vadd.f32 %v2779, %v2827
    %2829 = vmatmul.bf16.gmra.mxu0 %v1826
    %v2830 = vpop.f32.mrf.mxu0
    %v2831 = vadd.f32 %v2782, %v2830
    %v2832 = vpop.f32.mrf.mxu0
    %v2833 = vadd.f32 %v2784, %v2832
    %2834 = vmatmul.bf16.gmra.mxu0 %v2564
    %v2835 = vpop.f32.mrf.mxu0
    %v2836 = vadd.f32 %v2787, %v2835
    %v2837 = vpop.f32.mrf.mxu0
    %v2838 = vadd.f32 %v2789, %v2837
    %2839 = vmatmul.bf16.gmra.mxu0 %v1832
    %v2840 = vpop.f32.mrf.mxu0
    %v2841 = vadd.f32 %v2792, %v2840
    %v2842 = vpop.f32.mrf.mxu0
    %v2843 = vadd.f32 %v2794, %v2842
    %2844 = vmatmul.bf16.gmra.mxu0 %v1835
    %v2845 = vpop.f32.mrf.mxu0
    %v2846 = vadd.f32 %v2797, %v2845
    %v2847 = vpop.f32.mrf.mxu0
    %v2848 = vadd.f32 %v2799, %v2847
    %2849 = vmatmul.bf16.gmra.mxu0 %v1838
    %v2850 = vpop.f32.mrf.mxu0
    %v2851 = vadd.f32 %v2802, %v2850
    %v2852 = vpop.f32.mrf.mxu0
    %v2853 = vadd.f32 %v2804, %v2852
    %2854 = vmatmul.bf16.gmra.mxu0 %v2567
    %v2855 = vpop.f32.mrf.mxu0
    %v2856 = vadd.f32 %v2807, %v2855
    %v2857 = vpop.f32.mrf.mxu0
    %v2858 = vadd.f32 %v2809, %v2857
    %2859 = vdwg.mxu0
    %2860 = vmatpush.bf16.msra.mxu0 %v2737
    %2861 = vmatpush.bf16.msra.mxu0 %v2736
    %2862 = vmatpush.bf16.msra.mxu0 %v2735
    %2863 = vmatpush.bf16.msra.mxu0 %v2734
    %2864 = vmatpush.bf16.msra.mxu0 %v2733
    %2865 = vmatpush.bf16.msra.mxu0 %v2732
    %2866 = vmatpush.bf16.msra.mxu0 %v2731
    %2867 = vmatpush.bf16.msra.mxu0 %v2730
    %2868 = vmatmul.bf16.gmra.mxu0 %v1821
    %v2869 = vpop.f32.mrf.mxu0
    %v2870 = vadd.f32 %v2821, %v2869
    %v2871 = vpop.f32.mrf.mxu0
    %v2872 = vadd.f32 %v2823, %v2871
    %2873 = vmatmul.bf16.gmra.mxu0 %v1824
    %v2874 = vpop.f32.mrf.mxu0
    %v2875 = vadd.f32 %v2826, %v2874
    %v2876 = vpop.f32.mrf.mxu0
    %v2877 = vadd.f32 %v2828, %v2876
    %2878 = vmatmul.bf16.gmra.mxu0 %v1827
    %v2879 = vpop.f32.mrf.mxu0
    %v2880 = vadd.f32 %v2831, %v2879
    %v2881 = vpop.f32.mrf.mxu0
    %v2882 = vadd.f32 %v2833, %v2881
    %2883 = vmatmul.bf16.gmra.mxu0 %v2565
    %v2884 = vpop.f32.mrf.mxu0
    %v2885 = vadd.f32 %v2836, %v2884
    %v2886 = vpop.f32.mrf.mxu0
    %v2887 = vadd.f32 %v2838, %v2886
    %2888 = vmatmul.bf16.gmra.mxu0 %v1833
    %v2889 = vpop.f32.mrf.mxu0
    %v2890 = vadd.f32 %v2841, %v2889
    %v2891 = vpop.f32.mrf.mxu0
    %v2892 = vadd.f32 %v2843, %v2891
    %2893 = vmatmul.bf16.gmra.mxu0 %v1836
    %v2894 = vpop.f32.mrf.mxu0
    %v2895 = vadd.f32 %v2846, %v2894
    %v2896 = vpop.f32.mrf.mxu0
    %v2897 = vadd.f32 %v2848, %v2896
    %2898 = vmatmul.bf16.gmra.mxu0 %v1839
    %v2899 = vpop.f32.mrf.mxu0
    %v2900 = vadd.f32 %v2851, %v2899
    %v2901 = vpop.f32.mrf.mxu0
    %v2902 = vadd.f32 %v2853, %v2901
    %2903 = vmatmul.bf16.gmra.mxu0 %v2568
    %v2904 = vpop.f32.mrf.mxu0
    %v2905 = vadd.f32 %v2856, %v2904
    %v2906 = vpop.f32.mrf.mxu0
    %v2907 = vadd.f32 %v2858, %v2906
    %2908 = vdwg.mxu0
    %v2909 = vadd.f32 %v2524, %v2870
    %v2910 = vadd.f32 %v2526, %v2872
    %v2911 = vadd.f32 %v2529, %v2875
    %v2912 = vadd.f32 %v2531, %v2877
    %v2913 = vadd.f32 %v2534, %v2880
    %v2914 = vadd.f32 %v2536, %v2882
    %v2915 = vadd.f32 %v2539, %v2885
    %v2916 = vadd.f32 %v2541, %v2887
    %v2917 = vadd.f32 %v2544, %v2890
    %v2918 = vadd.f32 %v2546, %v2892
    %v2919 = vadd.f32 %v2549, %v2895
    %v2920 = vadd.f32 %v2551, %v2897
    %v2921 = vadd.f32 %v2554, %v2900
    %v2922 = vadd.f32 %v2556, %v2902
    %v2923 = vadd.f32 %v2559, %v2905
    %v2924 = vadd.f32 %v2561, %v2907
    %v2926 = vperm.slane %v1595, 0
    %v2928 = vadd.f32 %v2909, %v2926
    %v2929 = vadd.f32 %v2910, %v2926
    %v2930 = vadd.f32 %v2911, %v2926
    %v2931 = vadd.f32 %v2912, %v2926
    %v2932 = vadd.f32 %v2913, %v2926
    %v2933 = vadd.f32 %v2914, %v2926
    %v2934 = vadd.f32 %v2915, %v2926
    %v2935 = vadd.f32 %v2916, %v2926
    %v2936 = vadd.f32 %v2917, %v2926
    %v2937 = vadd.f32 %v2918, %v2926
    %v2938 = vadd.f32 %v2919, %v2926
    %v2939 = vadd.f32 %v2920, %v2926
    %v2940 = vadd.f32 %v2921, %v2926
    %v2941 = vadd.f32 %v2922, %v2926
    %v2942 = vadd.f32 %v2923, %v2926
    %v2943 = vadd.f32 %v2924, %v2926
    %v2944 = vmax.f32 %v2928, 0.0
    %v2945 = vmax.f32 %v2929, 0.0
    %v2946 = vmax.f32 %v2930, 0.0
    %v2947 = vmax.f32 %v2931, 0.0
    %v2948 = vmax.f32 %v2932, 0.0
    %v2949 = vmax.f32 %v2933, 0.0
    %v2950 = vmax.f32 %v2934, 0.0
    %v2951 = vmax.f32 %v2935, 0.0
    %v2952 = vmax.f32 %v2936, 0.0
    %v2953 = vmax.f32 %v2937, 0.0
    %v2954 = vmax.f32 %v2938, 0.0
    %v2955 = vmax.f32 %v2939, 0.0
    %v2956 = vmax.f32 %v2940, 0.0
    %v2957 = vmax.f32 %v2941, 0.0
    %v2958 = vmax.f32 %v2942, 0.0
    %v2959 = vmax.f32 %v2943, 0.0
    %2960 = vst [vmem:[#allocation8] sm:$0xff] %v2944
    %2961 = vst [vmem:[#allocation8 + $0x8] sm:$0xff] %v2945
    %2962 = vst [vmem:[#allocation8 + $0x10] sm:$0xff] %v2946
    %2963 = vst [vmem:[#allocation8 + $0x18] sm:$0xff] %v2947
    %2964 = vst [vmem:[#allocation8 + $0x20] sm:$0xff] %v2948
    %2965 = vst [vmem:[#allocation8 + $0x28] sm:$0xff] %v2949
    %2966 = vst [vmem:[#allocation8 + $0x30] sm:$0xff] %v2950
    %2967 = vst [vmem:[#allocation8 + $0x38] sm:$0xff] %v2951
    %2968 = vst [vmem:[#allocation8 + $0x40] sm:$0xff] %v2952
    %2969 = vst [vmem:[#allocation8 + $0x48] sm:$0xff] %v2953
    %2970 = vst [vmem:[#allocation8 + $0x50] sm:$0xff] %v2954
    %2971 = vst [vmem:[#allocation8 + $0x58] sm:$0xff] %v2955
    %2972 = vst [vmem:[#allocation8 + $0x60] sm:$0xff] %v2956
    %2973 = vst [vmem:[#allocation8 + $0x68] sm:$0xff] %v2957
    %2974 = vst [vmem:[#allocation8 + $0x70] sm:$0xff] %v2958
    %2975 = vst [vmem:[#allocation8 + $0x78] sm:$0xff] %v2959
    // Predicated region
    $region34: #{tpu_custom_call.1} parent=1 // pred_check
      _
    $region35: #{tpu_custom_call.1} parent=1 // pred_check_branch
      %2977 = sbr.rel (0) target = $region37
    $region36: #{tpu_custom_call.1} parent=1 // pred_region
      %2979 = vsyncadd [#allocation4], 0
      %s2980 = sshll.u32 [#allocation8], 4
      %s2981 = int_to_ptr.vmem [resolvable:$true] %s2980
      %s2982 = sshll.u32 %s5, 4
      %s2983 = int_to_ptr.hbm [resolvable:$true] %s2982
      %2988 = dma.vmem_to_hbm [thread:$0]  %s2981, 2048, %s2983, [#allocation4], 128, 128, 8
    $region37: #{tpu_custom_call.1} parent=1 // pred_fallthru
      _
    // Predicated region
    $region38: #{tpu_custom_call.1} parent=1 // pred_check
      _
    $region39: #{tpu_custom_call.1} parent=1 // pred_check_branch
      %2990 = sbr.rel (0) target = $region41
    $region40: #{tpu_custom_call.1} parent=1 // pred_region
      %2992 = dma.done [#allocation4], 2048
    $region41: #{tpu_custom_call.1} parent=1 // pred_fallthru
      _
    %2993 = vsyncpa [#allocation3], 1
    %2994 = vsyncpa [#allocation6], 1
    %2995 = vsyncpa [#allocation4], 1

</llo_original>
